<compile_context>
chip_gen: v7x
topology: tpu7x:2x2x1
jax: 0.10.0
libtpu: 0.0.40
codegen_flags: <defaults>
</compile_context>

<pallas_src>
import jax
import jax.numpy as jnp
from jax.experimental import pallas as pl
from jax.experimental.pallas import tpu as pltpu

# ---- model hyper-parameters (small, lane-friendly) --------------------------
VOCAB_SIZE = 128                       # vocabulary size (== HIDDEN -> biases pack to (2,128))
EMBED_DIM = 32                         # embedding dimension
CONTEXT_SIZE = 2                       # n-gram context -> context_size * 2 tokens
N_TOKENS = CONTEXT_SIZE * 2            # 4
IN_FEATURES = N_TOKENS * EMBED_DIM     # 128
HIDDEN = 128                           # fixed by the module definition
FOLDED_ROWS = N_TOKENS * VOCAB_SIZE    # 512 rows of the folded emb@W1 table
TILE_B = 512                           # batch rows per grid step (amortizes step overhead)


def ngram_kernel(ids_ref,      # VMEM (TILE_B, N_TOKENS) int32   token ids
                 folded_ref,   # VMEM (N_TOKENS*VOCAB, HIDDEN)   f32  folded emb@W1
                 w2_ref,       # VMEM (HIDDEN, VOCAB)            f32
                 b_ref,        # VMEM (2, 128) f32: row 0 = b1, row 1 = b2
                 out_ref):     # VMEM (TILE_B, VOCAB) f32 log-probs
    tile_b = ids_ref.shape[0]
    ids = ids_ref[...]                                           # (TILE_B, N_TOKENS)

    # --- combined one-hot over all tokens: column = i*VOCAB + ids[:, i] ------
    # Built as N_TOKENS lane-aligned (TILE_B, VOCAB) pieces concatenated along
    # the lane axis (each piece is exactly one 128-lane group -> cheap concat).
    vocab_iota = jax.lax.broadcasted_iota(jnp.int32, (tile_b, VOCAB_SIZE), 1)
    onehot = jnp.concatenate(
        [(vocab_iota == ids[:, i:i + 1]).astype(jnp.float32)
         for i in range(N_TOKENS)],
        axis=1)                                                  # (TILE_B, 512) f32

    # --- linear1 (embedding gather + matmul fused into ONE MXU op) -----------
    h = jnp.dot(onehot, folded_ref[...],
                preferred_element_type=jnp.float32)              # (TILE_B, 128)
    h = jnp.maximum(h + b_ref[0:1, :], 0.0)                      # bias + ReLU (f32)

    # --- linear2 --------------------------------------------------------------
    logits = jnp.dot(h, w2_ref[...],
                     preferred_element_type=jnp.float32) + b_ref[1:2, :]

    # --- log_softmax over the vocab axis (numerically stable, f32) ------------
    m = jnp.max(logits, axis=-1, keepdims=True)
    z = logits - m
    lse = jnp.log(jnp.sum(jnp.exp(z), axis=-1, keepdims=True))
    out_ref[...] = z - lse


def fold_embedding_into_w1(emb_table, w1_full):
    """Offline fold (f32): folded[i*V + v, :] = emb_table[v] @ W1_token[i].

    w1_full is (IN_FEATURES, HIDDEN) in x@W convention, with IN_FEATURES laid
    out token-major (matches the .view(1, -1) flatten order of the module).
    """
    w1_tok = w1_full.astype(jnp.float32).reshape(N_TOKENS, EMBED_DIM, HIDDEN)
    folded = jnp.einsum("ve,teh->tvh", emb_table.astype(jnp.float32), w1_tok)
    return folded.reshape(FOLDED_ROWS, HIDDEN)


def ngram_forward(token_ids, folded, w2, biases, *, tile_b=TILE_B):
    """token_ids: int32 (B, N_TOKENS). Returns (B, VOCAB_SIZE) f32 log-probs."""
    assert HIDDEN == VOCAB_SIZE == 128, (
        "bias packing (2,128) and lane-dense output assume HIDDEN == VOCAB == 128")
    batch = token_ids.shape[0]

    # Pad to a multiple of the batch tile (padding rows use token id 0, valid).
    padded = pl.cdiv(batch, tile_b) * tile_b
    if padded != batch:
        token_ids = jnp.pad(token_ids, ((0, padded - batch), (0, 0)))

    # Constant index_map => block stays VMEM-resident (DMA'd once); only the
    # ids / output blocks stream per grid step.  (Weights are so small that the
    # redundant second pipeline buffer is negligible, so no Buffered(1) needed.)
    resident = lambda shape: pl.BlockSpec(shape, lambda b: tuple(0 for _ in shape))

    grid_spec = pltpu.PrefetchScalarGridSpec(
        num_scalar_prefetch=0,
        grid=(padded // tile_b,),
        in_specs=[
            pl.BlockSpec((tile_b, N_TOKENS), lambda b: (b, 0)),   # token ids
            resident((FOLDED_ROWS, HIDDEN)),                      # folded emb@W1
            resident((HIDDEN, VOCAB_SIZE)),                       # W2
            resident((2, HIDDEN)),                                # packed biases
        ],
        out_specs=pl.BlockSpec((tile_b, VOCAB_SIZE), lambda b: (b, 0)),
    )
    out = pl.pallas_call(
        ngram_kernel,
        out_shape=jax.ShapeDtypeStruct((padded, VOCAB_SIZE), jnp.float32),
        grid_spec=grid_spec,
        compiler_params=pltpu.CompilerParams(
            dimension_semantics=("parallel",)),   # both TensorCores on v7x
    )(token_ids, folded, w2, biases)
    return out[:batch]


def _reference(token_ids, emb_table, w1_full, b1, w2_full, b2):
    """Pure-JAX f32 reference matching the PyTorch module forward."""
    x = emb_table[token_ids].reshape(token_ids.shape[0], -1)     # (B, 128)
    h = jnp.maximum(x @ w1_full + b1, 0.0)                       # (B, 128)
    logits = h @ w2_full + b2                                    # (B, vocab)
    return jax.nn.log_softmax(logits, axis=-1)


if __name__ == "__main__":
    key = jax.random.PRNGKey(0)
    k_emb, k_w1, k_b1, k_w2, k_b2, k_ids = jax.random.split(key, 6)

    # Deterministic parameter init (shapes as implied by the module __init__),
    # with Linear weights stored transposed: (in_features, out_features).
    emb_table = jax.random.normal(k_emb, (VOCAB_SIZE, EMBED_DIM), jnp.float32)
    w1_full = jax.random.normal(k_w1, (IN_FEATURES, HIDDEN), jnp.float32) * 0.05
    b1 = jax.random.normal(k_b1, (HIDDEN,), jnp.float32) * 0.05
    w2_full = jax.random.normal(k_w2, (HIDDEN, VOCAB_SIZE), jnp.float32) * 0.05
    b2 = jax.random.normal(k_b2, (VOCAB_SIZE,), jnp.float32) * 0.05

    folded = fold_embedding_into_w1(emb_table, w1_full)          # (512, 128) f32
    biases = jnp.stack([b1, b2], axis=0)                         # (2, 128) f32

    # Batch of n-gram examples: not a multiple of TILE_B (exercises padding);
    # pads to 1024 -> 2 grid steps, one per TensorCore on v7x.
    B = 1000
    token_ids = jax.random.randint(k_ids, (B, N_TOKENS), 0, VOCAB_SIZE, jnp.int32)

    log_probs = jax.block_until_ready(
        ngram_forward(token_ids, folded, w2_full, biases))

    ref = _reference(token_ids, emb_table, w1_full, b1, w2_full, b2)
    assert log_probs.shape == (B, VOCAB_SIZE)
    assert jnp.allclose(log_probs, ref, atol=1e-3, rtol=1e-3), (
        float(jnp.max(jnp.abs(log_probs - ref))))

    print("KERNEL_OK")
</pallas_src>

<mosaic_0001>
module attributes {stable_mosaic.version = 11 : i64} {
  func.func @ngram_kernel(%arg0: i32, %arg1: memref<512x4xi32, #tpu.memory_space<vmem>>, %arg2: memref<512x128xf32, #tpu.memory_space<vmem>>, %arg3: memref<128x128xf32, #tpu.memory_space<vmem>>, %arg4: memref<2x128xf32, #tpu.memory_space<vmem>>, %arg5: memref<512x128xf32, #tpu.memory_space<vmem>>) attributes {dimension_semantics = [#tpu.dimension_semantics<parallel>], iteration_bounds = array<i64: 2>, scalar_prefetch = 0 : i64, scratch_operands = 0 : i64, tpu.core_type = #tpu.core_type<tc>, window_params = [{transform_indices = @transform_0, window_bounds = array<i64: 512, 4>}, {pipeline_mode = #tpu.pipeline_mode<synchronous>, transform_indices = @transform_1, window_bounds = array<i64: 512, 128>}, {pipeline_mode = #tpu.pipeline_mode<synchronous>, transform_indices = @transform_2, window_bounds = array<i64: 128, 128>}, {pipeline_mode = #tpu.pipeline_mode<synchronous>, transform_indices = @transform_3, window_bounds = array<i64: 2, 128>}, {transform_indices = @transform_4, window_bounds = array<i64: 512, 128>}]} {
    %c0 = arith.constant 0 : index
    %c0_0 = arith.constant 0 : index
    %0 = vector.load %arg1[%c0, %c0_0] : memref<512x4xi32, #tpu.memory_space<vmem>>, vector<512x4xi32>
    %1 = tpu.iota {dimensions = array<i32: 1>} : vector<512x128xi32>
    %2 = vector.extract_strided_slice %0 {offsets = [0, 0], sizes = [512, 1], strides = [1, 1]} : vector<512x4xi32> to vector<512x1xi32>
    %3 = vector.broadcast %2 : vector<512x1xi32> to vector<512x128xi32>
    %4 = arith.cmpi eq, %1, %3 : vector<512x128xi32>
    %5 = arith.extui %4 : vector<512x128xi1> to vector<512x128xi32>
    %6 = arith.sitofp %5 : vector<512x128xi32> to vector<512x128xf32>
    %7 = vector.extract_strided_slice %0 {offsets = [0, 1], sizes = [512, 1], strides = [1, 1]} : vector<512x4xi32> to vector<512x1xi32>
    %8 = vector.broadcast %7 : vector<512x1xi32> to vector<512x128xi32>
    %9 = arith.cmpi eq, %1, %8 : vector<512x128xi32>
    %10 = arith.extui %9 : vector<512x128xi1> to vector<512x128xi32>
    %11 = arith.sitofp %10 : vector<512x128xi32> to vector<512x128xf32>
    %12 = vector.extract_strided_slice %0 {offsets = [0, 2], sizes = [512, 1], strides = [1, 1]} : vector<512x4xi32> to vector<512x1xi32>
    %13 = vector.broadcast %12 : vector<512x1xi32> to vector<512x128xi32>
    %14 = arith.cmpi eq, %1, %13 : vector<512x128xi32>
    %15 = arith.extui %14 : vector<512x128xi1> to vector<512x128xi32>
    %16 = arith.sitofp %15 : vector<512x128xi32> to vector<512x128xf32>
    %17 = vector.extract_strided_slice %0 {offsets = [0, 3], sizes = [512, 1], strides = [1, 1]} : vector<512x4xi32> to vector<512x1xi32>
    %18 = vector.broadcast %17 : vector<512x1xi32> to vector<512x128xi32>
    %19 = arith.cmpi eq, %1, %18 : vector<512x128xi32>
    %20 = arith.extui %19 : vector<512x128xi1> to vector<512x128xi32>
    %21 = arith.sitofp %20 : vector<512x128xi32> to vector<512x128xf32>
    %22 = tpu.concatenate %6, %11, %16, %21 in 1 : vector<512x128xf32>, vector<512x128xf32>, vector<512x128xf32>, vector<512x128xf32> -> vector<512x512xf32>
    %c0_1 = arith.constant 0 : index
    %c0_2 = arith.constant 0 : index
    %23 = vector.load %arg2[%c0_1, %c0_2] : memref<512x128xf32, #tpu.memory_space<vmem>>, vector<512x128xf32>
    %cst = arith.constant dense<0.000000e+00> : vector<512x128xf32>
    %24 = tpu.matmul %22, %23, %cst {dimension_numbers = #tpu.dot_dimension_numbers<[1], [0], [0], [1], [0, 0, 1, 1], [], []>} : vector<512x512xf32>, vector<512x128xf32>, vector<512x128xf32> -> vector<512x128xf32>
    %c0_3 = arith.constant 0 : index
    %c0_4 = arith.constant 0 : index
    %25 = vector.load %arg4[%c0_3, %c0_4] : memref<2x128xf32, #tpu.memory_space<vmem>>, vector<1x128xf32>
    %26 = vector.broadcast %25 : vector<1x128xf32> to vector<512x128xf32>
    %27 = arith.addf %24, %26 : vector<512x128xf32>
    %cst_5 = arith.constant 0.000000e+00 : f32
    %28 = vector.broadcast %cst_5 : f32 to vector<512x128xf32>
    %29 = arith.maximumf %27, %28 : vector<512x128xf32>
    %c0_6 = arith.constant 0 : index
    %c0_7 = arith.constant 0 : index
    %30 = vector.load %arg3[%c0_6, %c0_7] : memref<128x128xf32, #tpu.memory_space<vmem>>, vector<128x128xf32>
    %cst_8 = arith.constant dense<0.000000e+00> : vector<512x128xf32>
    %31 = tpu.matmul %29, %30, %cst_8 {dimension_numbers = #tpu.dot_dimension_numbers<[1], [0], [0], [1], [0, 0, 1, 1], [], []>} : vector<512x128xf32>, vector<128x128xf32>, vector<512x128xf32> -> vector<512x128xf32>
    %c1 = arith.constant 1 : index
    %c0_9 = arith.constant 0 : index
    %32 = vector.load %arg4[%c1, %c0_9] : memref<2x128xf32, #tpu.memory_space<vmem>>, vector<1x128xf32>
    %33 = vector.broadcast %32 : vector<1x128xf32> to vector<512x128xf32>
    %34 = arith.addf %31, %33 : vector<512x128xf32>
    %cst_10 = arith.constant dense<0xFF800000> : vector<512xf32>
    %35 = vector.multi_reduction <maximumf>, %34, %cst_10 [1] : vector<512x128xf32> to vector<512xf32>
    %36 = vector.shape_cast %35 : vector<512xf32> to vector<512x1xf32>
    %37 = vector.broadcast %36 : vector<512x1xf32> to vector<512x128xf32>
    %38 = arith.subf %34, %37 : vector<512x128xf32>
    %39 = math.exp %38 : vector<512x128xf32>
    %cst_11 = arith.constant dense<0.000000e+00> : vector<512xf32>
    %40 = vector.multi_reduction <add>, %39, %cst_11 [1] : vector<512x128xf32> to vector<512xf32>
    %41 = vector.shape_cast %40 : vector<512xf32> to vector<512x1xf32>
    %42 = math.log %41 : vector<512x1xf32>
    %43 = vector.broadcast %42 : vector<512x1xf32> to vector<512x128xf32>
    %44 = arith.subf %38, %43 : vector<512x128xf32>
    %c0_12 = arith.constant 0 : index
    %c0_13 = arith.constant 0 : index
    %45 = vector.load %arg5[%c0_12, %c0_13] : memref<512x128xf32, #tpu.memory_space<vmem>>, vector<512x128xf32>
    tpu.vector_store %arg5[%c0_12, %c0_13], %44 {strides = array<i32>} : memref<512x128xf32, #tpu.memory_space<vmem>>, vector<512x128xf32>,
    return
  }
  func.func @transform_0(%arg0: i32) -> (i32, i32) {
    %c0_i32 = arith.constant 0 : i32
    %c0_i32_0 = arith.constant 0 : i32
    return %arg0, %c0_i32 : i32, i32
  }
  func.func @transform_1(%arg0: i32) -> (i32, i32) {
    %c0_i32 = arith.constant 0 : i32
    %c0_i32_0 = arith.constant 0 : i32
    %c0_i32_1 = arith.constant 0 : i32
    return %c0_i32, %c0_i32_0 : i32, i32
  }
  func.func @transform_2(%arg0: i32) -> (i32, i32) {
    %c0_i32 = arith.constant 0 : i32
    %c0_i32_0 = arith.constant 0 : i32
    %c0_i32_1 = arith.constant 0 : i32
    return %c0_i32, %c0_i32_0 : i32, i32
  }
  func.func @transform_3(%arg0: i32) -> (i32, i32) {
    %c0_i32 = arith.constant 0 : i32
    %c0_i32_0 = arith.constant 0 : i32
    %c0_i32_1 = arith.constant 0 : i32
    return %c0_i32, %c0_i32_0 : i32, i32
  }
  func.func @transform_4(%arg0: i32) -> (i32, i32) {
    %c0_i32 = arith.constant 0 : i32
    %c0_i32_0 = arith.constant 0 : i32
    return %arg0, %c0_i32 : i32, i32
  }
}

</mosaic_0001>

<llo_original>
// kernel: tpu_custom_call.1
$region0: #{tpu_custom_call.1}
  #allocation0 [shape = 'u32[]', space=smem, size = 0x4, offset = 0x4, fixed_abs, tag = 'smem constant byte address 0x4 - core index']
  #allocation1 [shape = 'u32[144,128]{1,0:T(1,128)}', space=vmem, size = 0x12000, scoped, tag = 'internal scratch']
  %s0 = inlined_call_operand.vmem [shape: s32[1024,4], index: 0, kind: input, shape index: {}]
  %s1 = inlined_call_operand.vmem [shape: f32[512,128], index: 1, kind: input, shape index: {}]
  %s2 = inlined_call_operand.vmem [shape: f32[128,128], index: 2, kind: input, shape index: {}]
  %s3 = inlined_call_operand.vmem [shape: f32[2,128], index: 3, kind: input, shape index: {}]
  %s4 = inlined_call_operand.hbm [shape: f32[1024,128], index: 4, kind: output, shape index: {}]
  %s5 = sld [smem:[#allocation0]]
  $region49: #{tpu_custom_call.1} parent=0
    _
  %s7 = ssub.s32 1, %s5
  %s8 = scalar_select 0, %s7, %s5
  $region1: #{tpu_custom_call.1} parent=0
    #allocation2 [shape = 'u8[524288]{0}', space=vmem, size = 0x80000, scoped, tag = 'output window, operand 0']
    #allocation3 [shape = 's32[2]{0}', space=sflag, size = 0x8, scoped, tag = 'scoped memory for tpu_custom_call.1']
    %9 = vsyncpa [#allocation3], 0
    %s10 = scalar_lea.sflag [#allocation3], 1
    %11 = vsyncpa %s10, 0
    loop: start=0, step=1, limit=4
    $region2: #{tpu_custom_call.1} parent=1 // loop_pre_header
      _
    $region3: #{tpu_custom_call.1} parent=1 // loop_header
      %s13 = sphi 0, %s17
      %p14 = scmp.ge.s32.totalorder %s13, 4
      %s23 = sphi 0, %s25
      %s26 = sphi 0, %s23
      %s27 = sphi 0, %s26
      %s43 = sphi 0, %s27
      %s47 = sphi 0, %s47
      %s49 = sphi 0, %s47
      %s50 = sphi 0, %s49
      %s64 = sphi 0, %s50
      %s68 = sphi 0, %s68
      %s70 = sphi 0, %s68
      %s71 = sphi 0, %s70
      %s85 = sphi 0, %s71
      %s89 = sphi 0, %s89
      %s91 = sphi 0, %s89
      %s92 = sphi 0, %s91
      %s106 = sphi 0, %s92
      %s112 = sphi 0, %s114
      %s115 = sphi 0, %s112
      %s116 = sphi 0, %s115
      %s132 = sphi 0, %s116
    $region4: #{tpu_custom_call.1} parent=1 // loop_header_branch
      %16 = sbr.rel (%p14) target = $region8
    $region5: #{tpu_custom_call.1} parent=1 // loop_body
      %s18 = ssub.s32 %s13, 1
      %s19 = ssub.s32 %s13, 2
      %s20 = sadd.s32 %s13, 1
      %s21 = ssub.s32 %s13, %s20
      %p22 = scmp.eq.s32.totalorder %s21, 0
      %s24 = sadd.s32 %s23, 1
      %s25 = scalar_select %p22, %s23, %s24
      %p28 = pneg %p22
      %p29 = scmp.eq.s32.totalorder %s13, 1
      %p30 = por %p28, %p29
      %p31 = scmp.ne.s32.totalorder %s23, %s26
      %p32 = scmp.eq.s32.totalorder %s13, 0
      %p33 = por %p31, %p32
      %p34 = scmp.ne.s32.totalorder %s23, %s26
      %p35 = scmp.eq.s32.totalorder %s18, 1
      %p36 = por %p34, %p35
      %p37 = scmp.ne.s32.totalorder %s26, %s27
      %p38 = scmp.eq.s32.totalorder %s18, 0
      %p39 = por %p37, %p38
      %p40 = scmp.ne.s32.totalorder %s26, %s27
      %p41 = scmp.eq.s32.totalorder %s19, 1
      %p42 = por %p40, %p41
      %p44 = scmp.ne.s32.totalorder %s27, %s43
      %p45 = scmp.eq.s32.totalorder %s19, 0
      %p46 = por %p44, %p45
      %s48 = sadd.s32 %s47, 1
      %p51 = scmp.eq.s32.totalorder %s13, 1
      %p52 = scmp.ne.s32.totalorder %s47, %s49
      %p53 = scmp.eq.s32.totalorder %s13, 0
      %p54 = por %p52, %p53
      %p55 = scmp.ne.s32.totalorder %s47, %s49
      %p56 = scmp.eq.s32.totalorder %s18, 1
      %p57 = por %p55, %p56
      %p58 = scmp.ne.s32.totalorder %s49, %s50
      %p59 = scmp.eq.s32.totalorder %s18, 0
      %p60 = por %p58, %p59
      %p61 = scmp.ne.s32.totalorder %s49, %s50
      %p62 = scmp.eq.s32.totalorder %s19, 1
      %p63 = por %p61, %p62
      %p65 = scmp.ne.s32.totalorder %s50, %s64
      %p66 = scmp.eq.s32.totalorder %s19, 0
      %p67 = por %p65, %p66
      %s69 = sadd.s32 %s68, 1
      %p72 = scmp.eq.s32.totalorder %s13, 1
      %p73 = scmp.ne.s32.totalorder %s68, %s70
      %p74 = scmp.eq.s32.totalorder %s13, 0
      %p75 = por %p73, %p74
      %p76 = scmp.ne.s32.totalorder %s68, %s70
      %p77 = scmp.eq.s32.totalorder %s18, 1
      %p78 = por %p76, %p77
      %p79 = scmp.ne.s32.totalorder %s70, %s71
      %p80 = scmp.eq.s32.totalorder %s18, 0
      %p81 = por %p79, %p80
      %p82 = scmp.ne.s32.totalorder %s70, %s71
      %p83 = scmp.eq.s32.totalorder %s19, 1
      %p84 = por %p82, %p83
      %p86 = scmp.ne.s32.totalorder %s71, %s85
      %p87 = scmp.eq.s32.totalorder %s19, 0
      %p88 = por %p86, %p87
      %s90 = sadd.s32 %s89, 1
      %p93 = scmp.eq.s32.totalorder %s13, 1
      %p94 = scmp.ne.s32.totalorder %s89, %s91
      %p95 = scmp.eq.s32.totalorder %s13, 0
      %p96 = por %p94, %p95
      %p97 = scmp.ne.s32.totalorder %s89, %s91
      %p98 = scmp.eq.s32.totalorder %s18, 1
      %p99 = por %p97, %p98
      %p100 = scmp.ne.s32.totalorder %s91, %s92
      %p101 = scmp.eq.s32.totalorder %s18, 0
      %p102 = por %p100, %p101
      %p103 = scmp.ne.s32.totalorder %s91, %s92
      %p104 = scmp.eq.s32.totalorder %s19, 1
      %p105 = por %p103, %p104
      %p107 = scmp.ne.s32.totalorder %s92, %s106
      %p108 = scmp.eq.s32.totalorder %s19, 0
      %p109 = por %p107, %p108
      %s110 = ssub.s32 %s13, %s20
      %p111 = scmp.eq.s32.totalorder %s110, 0
      %s113 = sadd.s32 %s112, 1
      %s114 = scalar_select %p111, %s112, %s113
      %p117 = pneg %p111
      %p118 = scmp.eq.s32.totalorder %s13, 1
      %p119 = por %p117, %p118
      %p120 = scmp.ne.s32.totalorder %s112, %s115
      %p121 = scmp.eq.s32.totalorder %s13, 0
      %p122 = por %p120, %p121
      %p123 = scmp.ne.s32.totalorder %s112, %s115
      %p124 = scmp.eq.s32.totalorder %s18, 1
      %p125 = por %p123, %p124
      %p126 = scmp.ne.s32.totalorder %s115, %s116
      %p127 = scmp.eq.s32.totalorder %s18, 0
      %p128 = por %p126, %p127
      %p129 = scmp.ne.s32.totalorder %s115, %s116
      %p130 = scmp.eq.s32.totalorder %s19, 1
      %p131 = por %p129, %p130
      %p133 = scmp.ne.s32.totalorder %s116, %s132
      %p134 = scmp.eq.s32.totalorder %s19, 0
      %p135 = por %p133, %p134
      %p136 = scmp.le.s32.totalorder 1, %s13
      %p137 = scmp.lt.s32.totalorder %s13, 3
      %p138 = pnand %p136, %p137
      %p139 = pneg %p138
      // Predicated region
      $region9: #{tpu_custom_call.1} parent=5 // pred_check
        _
      $region10: #{tpu_custom_call.1} parent=5 // pred_check_branch
        %141 = sbr.rel (%p138) target = $region12
      $region11: #{tpu_custom_call.1} parent=5 // pred_region
        %s142 = ssub.s32 %s13, 1
        // Predicated region
        $region13: #{tpu_custom_call.1} parent=11 // pred_check
          %p143 = pneg %p60
        $region14: #{tpu_custom_call.1} parent=11 // pred_check_branch
          %145 = sbr.rel (%p143) target = $region16
        $region15: #{tpu_custom_call.1} parent=11 // pred_region
          _
        $region16: #{tpu_custom_call.1} parent=11 // pred_fallthru
          _
        // Predicated region
        $region17: #{tpu_custom_call.1} parent=11 // pred_check
          %p146 = pneg %p81
        $region18: #{tpu_custom_call.1} parent=11 // pred_check_branch
          %148 = sbr.rel (%p146) target = $region20
        $region19: #{tpu_custom_call.1} parent=11 // pred_region
          _
        $region20: #{tpu_custom_call.1} parent=11 // pred_fallthru
          _
        // Predicated region
        $region21: #{tpu_custom_call.1} parent=11 // pred_check
          %p149 = pneg %p102
        $region22: #{tpu_custom_call.1} parent=11 // pred_check_branch
          %151 = sbr.rel (%p149) target = $region24
        $region23: #{tpu_custom_call.1} parent=11 // pred_region
          _
        $region24: #{tpu_custom_call.1} parent=11 // pred_fallthru
          _
      $region12: #{tpu_custom_call.1} parent=5 // pred_fallthru
        _
      %p152 = scmp.lt.s32.totalorder %s13, 2
      // Predicated region
      $region25: #{tpu_custom_call.1} parent=5 // pred_check
        %p153 = pneg %p152
      $region26: #{tpu_custom_call.1} parent=5 // pred_check_branch
        %155 = sbr.rel (%p153) target = $region28
      $region27: #{tpu_custom_call.1} parent=5 // pred_region
        // Predicated region
        $region29: #{tpu_custom_call.1} parent=27 // pred_check
          %p156 = pneg %p33
        $region30: #{tpu_custom_call.1} parent=27 // pred_check_branch
          %158 = sbr.rel (%p156) target = $region32
        $region31: #{tpu_custom_call.1} parent=27 // pred_region
          %s159 = smul.u32 64, %s13
          %p160 = scmp.lt.s32.totalorder %s159, 127
          %s161 = scalar_select %p160, %s159, 127
          %s162 = smul.addr %s161, 8
          %s163 = scalar_lea.vmem %s0, %s162
          %s164 = smul.u32 64, %s13
        $region32: #{tpu_custom_call.1} parent=27 // pred_fallthru
          _
      $region28: #{tpu_custom_call.1} parent=5 // pred_fallthru
        _
      %p165 = scmp.le.s32.totalorder 1, %s13
      %p166 = scmp.lt.s32.totalorder %s13, 3
      %p167 = pnand %p165, %p166
      %p168 = pneg %p167
      // Predicated region
      $region33: #{tpu_custom_call.1} parent=5 // pred_check
        _
      $region34: #{tpu_custom_call.1} parent=5 // pred_check_branch
        %170 = sbr.rel (%p167) target = $region36
      $region35: #{tpu_custom_call.1} parent=5 // pred_region
        %s171 = ssub.s32 %s13, 1
        %s172 = smul.u32 64, %s18
        %p173 = scmp.lt.s32.totalorder %s172, 127
        %s174 = scalar_select %p173, %s172, 127
        %s175 = smul.addr %s174, 8
        %s176 = scalar_lea.vmem %s0, %s175
        %p177 = pneg %p39
        %p178 = pneg %p36
        %p179 = pneg %p60
        %p180 = pneg %p57
        %p181 = pneg %p81
        %p182 = pneg %p78
        %p183 = pneg %p102
        %p184 = pneg %p99
        %p185 = pneg %p128
        %p186 = pneg %p125
        %s187 = sand.u32 %s115, 1
        %s188 = scalar_lea.sflag [#allocation3], %s187
        %s189 = sand.u32 %s115, 1
        %s190 = smul.addr %s189, 512
        %s191 = scalar_lea.vmem [#allocation2], %s190
        %s192 = smul.u32 64, %s18
        %p193 = scmp.lt.s32.totalorder %s192, 127
        %s194 = scalar_select %p193, %s192, 127
        %s195 = smul.addr %s194, 8
        %s196 = scalar_lea.vmem %s0, %s195
        %s197 = smul.u32 64, %s18
        %s198 = smul.u32 64, %s18
        %v199 = vld [vmem:[%s196] sm:$0xff]
        %v200 = vld [vmem:[%s196 + $0x8] sm:$0xff]
        %v201 = vld [vmem:[%s196 + $0x10] sm:$0xff]
        %v202 = vld [vmem:[%s196 + $0x18] sm:$0xff]
        %v203 = vld [vmem:[%s196 + $0x20] sm:$0xff]
        %v204 = vld [vmem:[%s196 + $0x28] sm:$0xff]
        %v205 = vld [vmem:[%s196 + $0x30] sm:$0xff]
        %v206 = vld [vmem:[%s196 + $0x38] sm:$0xff]
        %v207 = vld [vmem:[%s196 + $0x40] sm:$0xff]
        %v208 = vld [vmem:[%s196 + $0x48] sm:$0xff]
        %v209 = vld [vmem:[%s196 + $0x50] sm:$0xff]
        %v210 = vld [vmem:[%s196 + $0x58] sm:$0xff]
        %v211 = vld [vmem:[%s196 + $0x60] sm:$0xff]
        %v212 = vld [vmem:[%s196 + $0x68] sm:$0xff]
        %v213 = vld [vmem:[%s196 + $0x70] sm:$0xff]
        %v214 = vld [vmem:[%s196 + $0x78] sm:$0xff]
        %v215 = vld [vmem:[%s196 + $0x80] sm:$0xff]
        %v216 = vld [vmem:[%s196 + $0x88] sm:$0xff]
        %v217 = vld [vmem:[%s196 + $0x90] sm:$0xff]
        %v218 = vld [vmem:[%s196 + $0x98] sm:$0xff]
        %v219 = vld [vmem:[%s196 + $0xa0] sm:$0xff]
        %v220 = vld [vmem:[%s196 + $0xa8] sm:$0xff]
        %v221 = vld [vmem:[%s196 + $0xb0] sm:$0xff]
        %v222 = vld [vmem:[%s196 + $0xb8] sm:$0xff]
        %v223 = vld [vmem:[%s196 + $0xc0] sm:$0xff]
        %v224 = vld [vmem:[%s196 + $0xc8] sm:$0xff]
        %v225 = vld [vmem:[%s196 + $0xd0] sm:$0xff]
        %v226 = vld [vmem:[%s196 + $0xd8] sm:$0xff]
        %v227 = vld [vmem:[%s196 + $0xe0] sm:$0xff]
        %v228 = vld [vmem:[%s196 + $0xe8] sm:$0xff]
        %v229 = vld [vmem:[%s196 + $0xf0] sm:$0xff]
        %v230 = vld [vmem:[%s196 + $0xf8] sm:$0xff]
        %v231 = vld [vmem:[%s196 + $0x100] sm:$0xff]
        %v232 = vld [vmem:[%s196 + $0x108] sm:$0xff]
        %v233 = vld [vmem:[%s196 + $0x110] sm:$0xff]
        %v234 = vld [vmem:[%s196 + $0x118] sm:$0xff]
        %v235 = vld [vmem:[%s196 + $0x120] sm:$0xff]
        %v236 = vld [vmem:[%s196 + $0x128] sm:$0xff]
        %v237 = vld [vmem:[%s196 + $0x130] sm:$0xff]
        %v238 = vld [vmem:[%s196 + $0x138] sm:$0xff]
        %v239 = vld [vmem:[%s196 + $0x140] sm:$0xff]
        %v240 = vld [vmem:[%s196 + $0x148] sm:$0xff]
        %v241 = vld [vmem:[%s196 + $0x150] sm:$0xff]
        %v242 = vld [vmem:[%s196 + $0x158] sm:$0xff]
        %v243 = vld [vmem:[%s196 + $0x160] sm:$0xff]
        %v244 = vld [vmem:[%s196 + $0x168] sm:$0xff]
        %v245 = vld [vmem:[%s196 + $0x170] sm:$0xff]
        %v246 = vld [vmem:[%s196 + $0x178] sm:$0xff]
        %v247 = vld [vmem:[%s196 + $0x180] sm:$0xff]
        %v248 = vld [vmem:[%s196 + $0x188] sm:$0xff]
        %v249 = vld [vmem:[%s196 + $0x190] sm:$0xff]
        %v250 = vld [vmem:[%s196 + $0x198] sm:$0xff]
        %v251 = vld [vmem:[%s196 + $0x1a0] sm:$0xff]
        %v252 = vld [vmem:[%s196 + $0x1a8] sm:$0xff]
        %v253 = vld [vmem:[%s196 + $0x1b0] sm:$0xff]
        %v254 = vld [vmem:[%s196 + $0x1b8] sm:$0xff]
        %v255 = vld [vmem:[%s196 + $0x1c0] sm:$0xff]
        %v256 = vld [vmem:[%s196 + $0x1c8] sm:$0xff]
        %v257 = vld [vmem:[%s196 + $0x1d0] sm:$0xff]
        %v258 = vld [vmem:[%s196 + $0x1d8] sm:$0xff]
        %v259 = vld [vmem:[%s196 + $0x1e0] sm:$0xff]
        %v260 = vld [vmem:[%s196 + $0x1e8] sm:$0xff]
        %v261 = vld [vmem:[%s196 + $0x1f0] sm:$0xff]
        %v262 = vld [vmem:[%s196 + $0x1f8] sm:$0xff]
        %v263 = vlaneseq
        %v264 = vand.u32 %v263, 127
        %265 = vset.pattern.permute.xlu0 0
        %266 = vperm.xlu0 %265, %v199
        %v267 = vpop.permute.xlu0 %266
        %268 = vset.pattern.permute.xlu0 0
        %269 = vperm.xlu0 %268, %v200
        %v270 = vpop.permute.xlu0 %269
        %271 = vset.pattern.permute.xlu0 0
        %272 = vperm.xlu0 %271, %v201
        %v273 = vpop.permute.xlu0 %272
        %274 = vset.pattern.permute.xlu0 0
        %275 = vperm.xlu0 %274, %v202
        %v276 = vpop.permute.xlu0 %275
        %277 = vset.pattern.permute.xlu0 0
        %278 = vperm.xlu0 %277, %v203
        %v279 = vpop.permute.xlu0 %278
        %280 = vset.pattern.permute.xlu0 0
        %281 = vperm.xlu0 %280, %v204
        %v282 = vpop.permute.xlu0 %281
        %283 = vset.pattern.permute.xlu0 0
        %284 = vperm.xlu0 %283, %v205
        %v285 = vpop.permute.xlu0 %284
        %286 = vset.pattern.permute.xlu0 0
        %287 = vperm.xlu0 %286, %v206
        %v288 = vpop.permute.xlu0 %287
        %289 = vset.pattern.permute.xlu0 0
        %290 = vperm.xlu0 %289, %v207
        %v291 = vpop.permute.xlu0 %290
        %292 = vset.pattern.permute.xlu0 0
        %293 = vperm.xlu0 %292, %v208
        %v294 = vpop.permute.xlu0 %293
        %295 = vset.pattern.permute.xlu0 0
        %296 = vperm.xlu0 %295, %v209
        %v297 = vpop.permute.xlu0 %296
        %298 = vset.pattern.permute.xlu0 0
        %299 = vperm.xlu0 %298, %v210
        %v300 = vpop.permute.xlu0 %299
        %301 = vset.pattern.permute.xlu0 0
        %302 = vperm.xlu0 %301, %v211
        %v303 = vpop.permute.xlu0 %302
        %304 = vset.pattern.permute.xlu0 0
        %305 = vperm.xlu0 %304, %v212
        %v306 = vpop.permute.xlu0 %305
        %307 = vset.pattern.permute.xlu0 0
        %308 = vperm.xlu0 %307, %v213
        %v309 = vpop.permute.xlu0 %308
        %310 = vset.pattern.permute.xlu0 0
        %311 = vperm.xlu0 %310, %v214
        %v312 = vpop.permute.xlu0 %311
        %313 = vset.pattern.permute.xlu0 0
        %314 = vperm.xlu0 %313, %v215
        %v315 = vpop.permute.xlu0 %314
        %316 = vset.pattern.permute.xlu0 0
        %317 = vperm.xlu0 %316, %v216
        %v318 = vpop.permute.xlu0 %317
        %319 = vset.pattern.permute.xlu0 0
        %320 = vperm.xlu0 %319, %v217
        %v321 = vpop.permute.xlu0 %320
        %322 = vset.pattern.permute.xlu0 0
        %323 = vperm.xlu0 %322, %v218
        %v324 = vpop.permute.xlu0 %323
        %325 = vset.pattern.permute.xlu0 0
        %326 = vperm.xlu0 %325, %v219
        %v327 = vpop.permute.xlu0 %326
        %328 = vset.pattern.permute.xlu0 0
        %329 = vperm.xlu0 %328, %v220
        %v330 = vpop.permute.xlu0 %329
        %331 = vset.pattern.permute.xlu0 0
        %332 = vperm.xlu0 %331, %v221
        %v333 = vpop.permute.xlu0 %332
        %334 = vset.pattern.permute.xlu0 0
        %335 = vperm.xlu0 %334, %v222
        %v336 = vpop.permute.xlu0 %335
        %337 = vset.pattern.permute.xlu0 0
        %338 = vperm.xlu0 %337, %v223
        %v339 = vpop.permute.xlu0 %338
        %340 = vset.pattern.permute.xlu0 0
        %341 = vperm.xlu0 %340, %v224
        %v342 = vpop.permute.xlu0 %341
        %343 = vset.pattern.permute.xlu0 0
        %344 = vperm.xlu0 %343, %v225
        %v345 = vpop.permute.xlu0 %344
        %346 = vset.pattern.permute.xlu0 0
        %347 = vperm.xlu0 %346, %v226
        %v348 = vpop.permute.xlu0 %347
        %349 = vset.pattern.permute.xlu0 0
        %350 = vperm.xlu0 %349, %v227
        %v351 = vpop.permute.xlu0 %350
        %352 = vset.pattern.permute.xlu0 0
        %353 = vperm.xlu0 %352, %v228
        %v354 = vpop.permute.xlu0 %353
        %355 = vset.pattern.permute.xlu0 0
        %356 = vperm.xlu0 %355, %v229
        %v357 = vpop.permute.xlu0 %356
        %358 = vset.pattern.permute.xlu0 0
        %359 = vperm.xlu0 %358, %v230
        %v360 = vpop.permute.xlu0 %359
        %361 = vset.pattern.permute.xlu0 0
        %362 = vperm.xlu0 %361, %v231
        %v363 = vpop.permute.xlu0 %362
        %364 = vset.pattern.permute.xlu0 0
        %365 = vperm.xlu0 %364, %v232
        %v366 = vpop.permute.xlu0 %365
        %367 = vset.pattern.permute.xlu0 0
        %368 = vperm.xlu0 %367, %v233
        %v369 = vpop.permute.xlu0 %368
        %370 = vset.pattern.permute.xlu0 0
        %371 = vperm.xlu0 %370, %v234
        %v372 = vpop.permute.xlu0 %371
        %373 = vset.pattern.permute.xlu0 0
        %374 = vperm.xlu0 %373, %v235
        %v375 = vpop.permute.xlu0 %374
        %376 = vset.pattern.permute.xlu0 0
        %377 = vperm.xlu0 %376, %v236
        %v378 = vpop.permute.xlu0 %377
        %379 = vset.pattern.permute.xlu0 0
        %380 = vperm.xlu0 %379, %v237
        %v381 = vpop.permute.xlu0 %380
        %382 = vset.pattern.permute.xlu0 0
        %383 = vperm.xlu0 %382, %v238
        %v384 = vpop.permute.xlu0 %383
        %385 = vset.pattern.permute.xlu0 0
        %386 = vperm.xlu0 %385, %v239
        %v387 = vpop.permute.xlu0 %386
        %388 = vset.pattern.permute.xlu0 0
        %389 = vperm.xlu0 %388, %v240
        %v390 = vpop.permute.xlu0 %389
        %391 = vset.pattern.permute.xlu0 0
        %392 = vperm.xlu0 %391, %v241
        %v393 = vpop.permute.xlu0 %392
        %394 = vset.pattern.permute.xlu0 0
        %395 = vperm.xlu0 %394, %v242
        %v396 = vpop.permute.xlu0 %395
        %397 = vset.pattern.permute.xlu0 0
        %398 = vperm.xlu0 %397, %v243
        %v399 = vpop.permute.xlu0 %398
        %400 = vset.pattern.permute.xlu0 0
        %401 = vperm.xlu0 %400, %v244
        %v402 = vpop.permute.xlu0 %401
        %403 = vset.pattern.permute.xlu0 0
        %404 = vperm.xlu0 %403, %v245
        %v405 = vpop.permute.xlu0 %404
        %406 = vset.pattern.permute.xlu0 0
        %407 = vperm.xlu0 %406, %v246
        %v408 = vpop.permute.xlu0 %407
        %409 = vset.pattern.permute.xlu0 0
        %410 = vperm.xlu0 %409, %v247
        %v411 = vpop.permute.xlu0 %410
        %412 = vset.pattern.permute.xlu0 0
        %413 = vperm.xlu0 %412, %v248
        %v414 = vpop.permute.xlu0 %413
        %415 = vset.pattern.permute.xlu0 0
        %416 = vperm.xlu0 %415, %v249
        %v417 = vpop.permute.xlu0 %416
        %418 = vset.pattern.permute.xlu0 0
        %419 = vperm.xlu0 %418, %v250
        %v420 = vpop.permute.xlu0 %419
        %421 = vset.pattern.permute.xlu0 0
        %422 = vperm.xlu0 %421, %v251
        %v423 = vpop.permute.xlu0 %422
        %424 = vset.pattern.permute.xlu0 0
        %425 = vperm.xlu0 %424, %v252
        %v426 = vpop.permute.xlu0 %425
        %427 = vset.pattern.permute.xlu0 0
        %428 = vperm.xlu0 %427, %v253
        %v429 = vpop.permute.xlu0 %428
        %430 = vset.pattern.permute.xlu0 0
        %431 = vperm.xlu0 %430, %v254
        %v432 = vpop.permute.xlu0 %431
        %433 = vset.pattern.permute.xlu0 0
        %434 = vperm.xlu0 %433, %v255
        %v435 = vpop.permute.xlu0 %434
        %436 = vset.pattern.permute.xlu0 0
        %437 = vperm.xlu0 %436, %v256
        %v438 = vpop.permute.xlu0 %437
        %439 = vset.pattern.permute.xlu0 0
        %440 = vperm.xlu0 %439, %v257
        %v441 = vpop.permute.xlu0 %440
        %442 = vset.pattern.permute.xlu0 0
        %443 = vperm.xlu0 %442, %v258
        %v444 = vpop.permute.xlu0 %443
        %445 = vset.pattern.permute.xlu0 0
        %446 = vperm.xlu0 %445, %v259
        %v447 = vpop.permute.xlu0 %446
        %448 = vset.pattern.permute.xlu0 0
        %449 = vperm.xlu0 %448, %v260
        %v450 = vpop.permute.xlu0 %449
        %451 = vset.pattern.permute.xlu0 0
        %452 = vperm.xlu0 %451, %v261
        %v453 = vpop.permute.xlu0 %452
        %454 = vset.pattern.permute.xlu0 0
        %455 = vperm.xlu0 %454, %v262
        %v456 = vpop.permute.xlu0 %455
        %vm457 = vcmp.eq.s32.totalorder %v264, %v267
        %vm458 = vcmp.eq.s32.totalorder %v264, %v270
        %vm459 = vcmp.eq.s32.totalorder %v264, %v273
        %vm460 = vcmp.eq.s32.totalorder %v264, %v276
        %vm461 = vcmp.eq.s32.totalorder %v264, %v279
        %vm462 = vcmp.eq.s32.totalorder %v264, %v282
        %vm463 = vcmp.eq.s32.totalorder %v264, %v285
        %vm464 = vcmp.eq.s32.totalorder %v264, %v288
        %vm465 = vcmp.eq.s32.totalorder %v264, %v291
        %vm466 = vcmp.eq.s32.totalorder %v264, %v294
        %vm467 = vcmp.eq.s32.totalorder %v264, %v297
        %vm468 = vcmp.eq.s32.totalorder %v264, %v300
        %vm469 = vcmp.eq.s32.totalorder %v264, %v303
        %vm470 = vcmp.eq.s32.totalorder %v264, %v306
        %vm471 = vcmp.eq.s32.totalorder %v264, %v309
        %vm472 = vcmp.eq.s32.totalorder %v264, %v312
        %vm473 = vcmp.eq.s32.totalorder %v264, %v315
        %vm474 = vcmp.eq.s32.totalorder %v264, %v318
        %vm475 = vcmp.eq.s32.totalorder %v264, %v321
        %vm476 = vcmp.eq.s32.totalorder %v264, %v324
        %vm477 = vcmp.eq.s32.totalorder %v264, %v327
        %vm478 = vcmp.eq.s32.totalorder %v264, %v330
        %vm479 = vcmp.eq.s32.totalorder %v264, %v333
        %vm480 = vcmp.eq.s32.totalorder %v264, %v336
        %vm481 = vcmp.eq.s32.totalorder %v264, %v339
        %vm482 = vcmp.eq.s32.totalorder %v264, %v342
        %vm483 = vcmp.eq.s32.totalorder %v264, %v345
        %vm484 = vcmp.eq.s32.totalorder %v264, %v348
        %vm485 = vcmp.eq.s32.totalorder %v264, %v351
        %vm486 = vcmp.eq.s32.totalorder %v264, %v354
        %vm487 = vcmp.eq.s32.totalorder %v264, %v357
        %vm488 = vcmp.eq.s32.totalorder %v264, %v360
        %vm489 = vcmp.eq.s32.totalorder %v264, %v363
        %vm490 = vcmp.eq.s32.totalorder %v264, %v366
        %vm491 = vcmp.eq.s32.totalorder %v264, %v369
        %vm492 = vcmp.eq.s32.totalorder %v264, %v372
        %vm493 = vcmp.eq.s32.totalorder %v264, %v375
        %vm494 = vcmp.eq.s32.totalorder %v264, %v378
        %vm495 = vcmp.eq.s32.totalorder %v264, %v381
        %vm496 = vcmp.eq.s32.totalorder %v264, %v384
        %vm497 = vcmp.eq.s32.totalorder %v264, %v387
        %vm498 = vcmp.eq.s32.totalorder %v264, %v390
        %vm499 = vcmp.eq.s32.totalorder %v264, %v393
        %vm500 = vcmp.eq.s32.totalorder %v264, %v396
        %vm501 = vcmp.eq.s32.totalorder %v264, %v399
        %vm502 = vcmp.eq.s32.totalorder %v264, %v402
        %vm503 = vcmp.eq.s32.totalorder %v264, %v405
        %vm504 = vcmp.eq.s32.totalorder %v264, %v408
        %vm505 = vcmp.eq.s32.totalorder %v264, %v411
        %vm506 = vcmp.eq.s32.totalorder %v264, %v414
        %vm507 = vcmp.eq.s32.totalorder %v264, %v417
        %vm508 = vcmp.eq.s32.totalorder %v264, %v420
        %vm509 = vcmp.eq.s32.totalorder %v264, %v423
        %vm510 = vcmp.eq.s32.totalorder %v264, %v426
        %vm511 = vcmp.eq.s32.totalorder %v264, %v429
        %vm512 = vcmp.eq.s32.totalorder %v264, %v432
        %vm513 = vcmp.eq.s32.totalorder %v264, %v435
        %vm514 = vcmp.eq.s32.totalorder %v264, %v438
        %vm515 = vcmp.eq.s32.totalorder %v264, %v441
        %vm516 = vcmp.eq.s32.totalorder %v264, %v444
        %vm517 = vcmp.eq.s32.totalorder %v264, %v447
        %vm518 = vcmp.eq.s32.totalorder %v264, %v450
        %vm519 = vcmp.eq.s32.totalorder %v264, %v453
        %vm520 = vcmp.eq.s32.totalorder %v264, %v456
        %v521 = vsel %vm457, 1, 0
        %v522 = vsel %vm458, 1, 0
        %v523 = vsel %vm459, 1, 0
        %v524 = vsel %vm460, 1, 0
        %v525 = vsel %vm461, 1, 0
        %v526 = vsel %vm462, 1, 0
        %v527 = vsel %vm463, 1, 0
        %v528 = vsel %vm464, 1, 0
        %v529 = vsel %vm465, 1, 0
        %v530 = vsel %vm466, 1, 0
        %v531 = vsel %vm467, 1, 0
        %v532 = vsel %vm468, 1, 0
        %v533 = vsel %vm469, 1, 0
        %v534 = vsel %vm470, 1, 0
        %v535 = vsel %vm471, 1, 0
        %v536 = vsel %vm472, 1, 0
        %v537 = vsel %vm473, 1, 0
        %v538 = vsel %vm474, 1, 0
        %v539 = vsel %vm475, 1, 0
        %v540 = vsel %vm476, 1, 0
        %v541 = vsel %vm477, 1, 0
        %v542 = vsel %vm478, 1, 0
        %v543 = vsel %vm479, 1, 0
        %v544 = vsel %vm480, 1, 0
        %v545 = vsel %vm481, 1, 0
        %v546 = vsel %vm482, 1, 0
        %v547 = vsel %vm483, 1, 0
        %v548 = vsel %vm484, 1, 0
        %v549 = vsel %vm485, 1, 0
        %v550 = vsel %vm486, 1, 0
        %v551 = vsel %vm487, 1, 0
        %v552 = vsel %vm488, 1, 0
        %v553 = vsel %vm489, 1, 0
        %v554 = vsel %vm490, 1, 0
        %v555 = vsel %vm491, 1, 0
        %v556 = vsel %vm492, 1, 0
        %v557 = vsel %vm493, 1, 0
        %v558 = vsel %vm494, 1, 0
        %v559 = vsel %vm495, 1, 0
        %v560 = vsel %vm496, 1, 0
        %v561 = vsel %vm497, 1, 0
        %v562 = vsel %vm498, 1, 0
        %v563 = vsel %vm499, 1, 0
        %v564 = vsel %vm500, 1, 0
        %v565 = vsel %vm501, 1, 0
        %v566 = vsel %vm502, 1, 0
        %v567 = vsel %vm503, 1, 0
        %v568 = vsel %vm504, 1, 0
        %v569 = vsel %vm505, 1, 0
        %v570 = vsel %vm506, 1, 0
        %v571 = vsel %vm507, 1, 0
        %v572 = vsel %vm508, 1, 0
        %v573 = vsel %vm509, 1, 0
        %v574 = vsel %vm510, 1, 0
        %v575 = vsel %vm511, 1, 0
        %v576 = vsel %vm512, 1, 0
        %v577 = vsel %vm513, 1, 0
        %v578 = vsel %vm514, 1, 0
        %v579 = vsel %vm515, 1, 0
        %v580 = vsel %vm516, 1, 0
        %v581 = vsel %vm517, 1, 0
        %v582 = vsel %vm518, 1, 0
        %v583 = vsel %vm519, 1, 0
        %v584 = vsel %vm520, 1, 0
        %v585 = vcvt.s32.f32 %v521
        %v586 = vcvt.s32.f32 %v522
        %v587 = vcvt.s32.f32 %v523
        %v588 = vcvt.s32.f32 %v524
        %v589 = vcvt.s32.f32 %v525
        %v590 = vcvt.s32.f32 %v526
        %v591 = vcvt.s32.f32 %v527
        %v592 = vcvt.s32.f32 %v528
        %v593 = vcvt.s32.f32 %v529
        %v594 = vcvt.s32.f32 %v530
        %v595 = vcvt.s32.f32 %v531
        %v596 = vcvt.s32.f32 %v532
        %v597 = vcvt.s32.f32 %v533
        %v598 = vcvt.s32.f32 %v534
        %v599 = vcvt.s32.f32 %v535
        %v600 = vcvt.s32.f32 %v536
        %v601 = vcvt.s32.f32 %v537
        %v602 = vcvt.s32.f32 %v538
        %v603 = vcvt.s32.f32 %v539
        %v604 = vcvt.s32.f32 %v540
        %v605 = vcvt.s32.f32 %v541
        %v606 = vcvt.s32.f32 %v542
        %v607 = vcvt.s32.f32 %v543
        %v608 = vcvt.s32.f32 %v544
        %v609 = vcvt.s32.f32 %v545
        %v610 = vcvt.s32.f32 %v546
        %v611 = vcvt.s32.f32 %v547
        %v612 = vcvt.s32.f32 %v548
        %v613 = vcvt.s32.f32 %v549
        %v614 = vcvt.s32.f32 %v550
        %v615 = vcvt.s32.f32 %v551
        %v616 = vcvt.s32.f32 %v552
        %v617 = vcvt.s32.f32 %v553
        %v618 = vcvt.s32.f32 %v554
        %v619 = vcvt.s32.f32 %v555
        %v620 = vcvt.s32.f32 %v556
        %v621 = vcvt.s32.f32 %v557
        %v622 = vcvt.s32.f32 %v558
        %v623 = vcvt.s32.f32 %v559
        %v624 = vcvt.s32.f32 %v560
        %v625 = vcvt.s32.f32 %v561
        %v626 = vcvt.s32.f32 %v562
        %v627 = vcvt.s32.f32 %v563
        %v628 = vcvt.s32.f32 %v564
        %v629 = vcvt.s32.f32 %v565
        %v630 = vcvt.s32.f32 %v566
        %v631 = vcvt.s32.f32 %v567
        %v632 = vcvt.s32.f32 %v568
        %v633 = vcvt.s32.f32 %v569
        %v634 = vcvt.s32.f32 %v570
        %v635 = vcvt.s32.f32 %v571
        %v636 = vcvt.s32.f32 %v572
        %v637 = vcvt.s32.f32 %v573
        %v638 = vcvt.s32.f32 %v574
        %v639 = vcvt.s32.f32 %v575
        %v640 = vcvt.s32.f32 %v576
        %v641 = vcvt.s32.f32 %v577
        %v642 = vcvt.s32.f32 %v578
        %v643 = vcvt.s32.f32 %v579
        %v644 = vcvt.s32.f32 %v580
        %v645 = vcvt.s32.f32 %v581
        %v646 = vcvt.s32.f32 %v582
        %v647 = vcvt.s32.f32 %v583
        %v648 = vcvt.s32.f32 %v584
        %649 = vset.pattern.permute.xlu0 1
        %650 = vperm.xlu0 %649, %v199
        %v651 = vpop.permute.xlu0 %650
        %652 = vset.pattern.permute.xlu0 1
        %653 = vperm.xlu0 %652, %v200
        %v654 = vpop.permute.xlu0 %653
        %655 = vset.pattern.permute.xlu0 1
        %656 = vperm.xlu0 %655, %v201
        %v657 = vpop.permute.xlu0 %656
        %658 = vset.pattern.permute.xlu0 1
        %659 = vperm.xlu0 %658, %v202
        %v660 = vpop.permute.xlu0 %659
        %661 = vset.pattern.permute.xlu0 1
        %662 = vperm.xlu0 %661, %v203
        %v663 = vpop.permute.xlu0 %662
        %664 = vset.pattern.permute.xlu0 1
        %665 = vperm.xlu0 %664, %v204
        %v666 = vpop.permute.xlu0 %665
        %667 = vset.pattern.permute.xlu0 1
        %668 = vperm.xlu0 %667, %v205
        %v669 = vpop.permute.xlu0 %668
        %670 = vset.pattern.permute.xlu0 1
        %671 = vperm.xlu0 %670, %v206
        %v672 = vpop.permute.xlu0 %671
        %673 = vset.pattern.permute.xlu0 1
        %674 = vperm.xlu0 %673, %v207
        %v675 = vpop.permute.xlu0 %674
        %676 = vset.pattern.permute.xlu0 1
        %677 = vperm.xlu0 %676, %v208
        %v678 = vpop.permute.xlu0 %677
        %679 = vset.pattern.permute.xlu0 1
        %680 = vperm.xlu0 %679, %v209
        %v681 = vpop.permute.xlu0 %680
        %682 = vset.pattern.permute.xlu0 1
        %683 = vperm.xlu0 %682, %v210
        %v684 = vpop.permute.xlu0 %683
        %685 = vset.pattern.permute.xlu0 1
        %686 = vperm.xlu0 %685, %v211
        %v687 = vpop.permute.xlu0 %686
        %688 = vset.pattern.permute.xlu0 1
        %689 = vperm.xlu0 %688, %v212
        %v690 = vpop.permute.xlu0 %689
        %691 = vset.pattern.permute.xlu0 1
        %692 = vperm.xlu0 %691, %v213
        %v693 = vpop.permute.xlu0 %692
        %694 = vset.pattern.permute.xlu0 1
        %695 = vperm.xlu0 %694, %v214
        %v696 = vpop.permute.xlu0 %695
        %697 = vset.pattern.permute.xlu0 1
        %698 = vperm.xlu0 %697, %v215
        %v699 = vpop.permute.xlu0 %698
        %700 = vset.pattern.permute.xlu0 1
        %701 = vperm.xlu0 %700, %v216
        %v702 = vpop.permute.xlu0 %701
        %703 = vset.pattern.permute.xlu0 1
        %704 = vperm.xlu0 %703, %v217
        %v705 = vpop.permute.xlu0 %704
        %706 = vset.pattern.permute.xlu0 1
        %707 = vperm.xlu0 %706, %v218
        %v708 = vpop.permute.xlu0 %707
        %709 = vset.pattern.permute.xlu0 1
        %710 = vperm.xlu0 %709, %v219
        %v711 = vpop.permute.xlu0 %710
        %712 = vset.pattern.permute.xlu0 1
        %713 = vperm.xlu0 %712, %v220
        %v714 = vpop.permute.xlu0 %713
        %715 = vset.pattern.permute.xlu0 1
        %716 = vperm.xlu0 %715, %v221
        %v717 = vpop.permute.xlu0 %716
        %718 = vset.pattern.permute.xlu0 1
        %719 = vperm.xlu0 %718, %v222
        %v720 = vpop.permute.xlu0 %719
        %721 = vset.pattern.permute.xlu0 1
        %722 = vperm.xlu0 %721, %v223
        %v723 = vpop.permute.xlu0 %722
        %724 = vset.pattern.permute.xlu0 1
        %725 = vperm.xlu0 %724, %v224
        %v726 = vpop.permute.xlu0 %725
        %727 = vset.pattern.permute.xlu0 1
        %728 = vperm.xlu0 %727, %v225
        %v729 = vpop.permute.xlu0 %728
        %730 = vset.pattern.permute.xlu0 1
        %731 = vperm.xlu0 %730, %v226
        %v732 = vpop.permute.xlu0 %731
        %733 = vset.pattern.permute.xlu0 1
        %734 = vperm.xlu0 %733, %v227
        %v735 = vpop.permute.xlu0 %734
        %736 = vset.pattern.permute.xlu0 1
        %737 = vperm.xlu0 %736, %v228
        %v738 = vpop.permute.xlu0 %737
        %739 = vset.pattern.permute.xlu0 1
        %740 = vperm.xlu0 %739, %v229
        %v741 = vpop.permute.xlu0 %740
        %742 = vset.pattern.permute.xlu0 1
        %743 = vperm.xlu0 %742, %v230
        %v744 = vpop.permute.xlu0 %743
        %745 = vset.pattern.permute.xlu0 1
        %746 = vperm.xlu0 %745, %v231
        %v747 = vpop.permute.xlu0 %746
        %748 = vset.pattern.permute.xlu0 1
        %749 = vperm.xlu0 %748, %v232
        %v750 = vpop.permute.xlu0 %749
        %751 = vset.pattern.permute.xlu0 1
        %752 = vperm.xlu0 %751, %v233
        %v753 = vpop.permute.xlu0 %752
        %754 = vset.pattern.permute.xlu0 1
        %755 = vperm.xlu0 %754, %v234
        %v756 = vpop.permute.xlu0 %755
        %757 = vset.pattern.permute.xlu0 1
        %758 = vperm.xlu0 %757, %v235
        %v759 = vpop.permute.xlu0 %758
        %760 = vset.pattern.permute.xlu0 1
        %761 = vperm.xlu0 %760, %v236
        %v762 = vpop.permute.xlu0 %761
        %763 = vset.pattern.permute.xlu0 1
        %764 = vperm.xlu0 %763, %v237
        %v765 = vpop.permute.xlu0 %764
        %766 = vset.pattern.permute.xlu0 1
        %767 = vperm.xlu0 %766, %v238
        %v768 = vpop.permute.xlu0 %767
        %769 = vset.pattern.permute.xlu0 1
        %770 = vperm.xlu0 %769, %v239
        %v771 = vpop.permute.xlu0 %770
        %772 = vset.pattern.permute.xlu0 1
        %773 = vperm.xlu0 %772, %v240
        %v774 = vpop.permute.xlu0 %773
        %775 = vset.pattern.permute.xlu0 1
        %776 = vperm.xlu0 %775, %v241
        %v777 = vpop.permute.xlu0 %776
        %778 = vset.pattern.permute.xlu0 1
        %779 = vperm.xlu0 %778, %v242
        %v780 = vpop.permute.xlu0 %779
        %781 = vset.pattern.permute.xlu0 1
        %782 = vperm.xlu0 %781, %v243
        %v783 = vpop.permute.xlu0 %782
        %784 = vset.pattern.permute.xlu0 1
        %785 = vperm.xlu0 %784, %v244
        %v786 = vpop.permute.xlu0 %785
        %787 = vset.pattern.permute.xlu0 1
        %788 = vperm.xlu0 %787, %v245
        %v789 = vpop.permute.xlu0 %788
        %790 = vset.pattern.permute.xlu0 1
        %791 = vperm.xlu0 %790, %v246
        %v792 = vpop.permute.xlu0 %791
        %793 = vset.pattern.permute.xlu0 1
        %794 = vperm.xlu0 %793, %v247
        %v795 = vpop.permute.xlu0 %794
        %796 = vset.pattern.permute.xlu0 1
        %797 = vperm.xlu0 %796, %v248
        %v798 = vpop.permute.xlu0 %797
        %799 = vset.pattern.permute.xlu0 1
        %800 = vperm.xlu0 %799, %v249
        %v801 = vpop.permute.xlu0 %800
        %802 = vset.pattern.permute.xlu0 1
        %803 = vperm.xlu0 %802, %v250
        %v804 = vpop.permute.xlu0 %803
        %805 = vset.pattern.permute.xlu0 1
        %806 = vperm.xlu0 %805, %v251
        %v807 = vpop.permute.xlu0 %806
        %808 = vset.pattern.permute.xlu0 1
        %809 = vperm.xlu0 %808, %v252
        %v810 = vpop.permute.xlu0 %809
        %811 = vset.pattern.permute.xlu0 1
        %812 = vperm.xlu0 %811, %v253
        %v813 = vpop.permute.xlu0 %812
        %814 = vset.pattern.permute.xlu0 1
        %815 = vperm.xlu0 %814, %v254
        %v816 = vpop.permute.xlu0 %815
        %817 = vset.pattern.permute.xlu0 1
        %818 = vperm.xlu0 %817, %v255
        %v819 = vpop.permute.xlu0 %818
        %820 = vset.pattern.permute.xlu0 1
        %821 = vperm.xlu0 %820, %v256
        %v822 = vpop.permute.xlu0 %821
        %823 = vset.pattern.permute.xlu0 1
        %824 = vperm.xlu0 %823, %v257
        %v825 = vpop.permute.xlu0 %824
        %826 = vset.pattern.permute.xlu0 1
        %827 = vperm.xlu0 %826, %v258
        %v828 = vpop.permute.xlu0 %827
        %829 = vset.pattern.permute.xlu0 1
        %830 = vperm.xlu0 %829, %v259
        %v831 = vpop.permute.xlu0 %830
        %832 = vset.pattern.permute.xlu0 1
        %833 = vperm.xlu0 %832, %v260
        %v834 = vpop.permute.xlu0 %833
        %835 = vset.pattern.permute.xlu0 1
        %836 = vperm.xlu0 %835, %v261
        %v837 = vpop.permute.xlu0 %836
        %838 = vset.pattern.permute.xlu0 1
        %839 = vperm.xlu0 %838, %v262
        %v840 = vpop.permute.xlu0 %839
        %vm841 = vcmp.eq.s32.totalorder %v264, %v651
        %vm842 = vcmp.eq.s32.totalorder %v264, %v654
        %vm843 = vcmp.eq.s32.totalorder %v264, %v657
        %vm844 = vcmp.eq.s32.totalorder %v264, %v660
        %vm845 = vcmp.eq.s32.totalorder %v264, %v663
        %vm846 = vcmp.eq.s32.totalorder %v264, %v666
        %vm847 = vcmp.eq.s32.totalorder %v264, %v669
        %vm848 = vcmp.eq.s32.totalorder %v264, %v672
        %vm849 = vcmp.eq.s32.totalorder %v264, %v675
        %vm850 = vcmp.eq.s32.totalorder %v264, %v678
        %vm851 = vcmp.eq.s32.totalorder %v264, %v681
        %vm852 = vcmp.eq.s32.totalorder %v264, %v684
        %vm853 = vcmp.eq.s32.totalorder %v264, %v687
        %vm854 = vcmp.eq.s32.totalorder %v264, %v690
        %vm855 = vcmp.eq.s32.totalorder %v264, %v693
        %vm856 = vcmp.eq.s32.totalorder %v264, %v696
        %vm857 = vcmp.eq.s32.totalorder %v264, %v699
        %vm858 = vcmp.eq.s32.totalorder %v264, %v702
        %vm859 = vcmp.eq.s32.totalorder %v264, %v705
        %vm860 = vcmp.eq.s32.totalorder %v264, %v708
        %vm861 = vcmp.eq.s32.totalorder %v264, %v711
        %vm862 = vcmp.eq.s32.totalorder %v264, %v714
        %vm863 = vcmp.eq.s32.totalorder %v264, %v717
        %vm864 = vcmp.eq.s32.totalorder %v264, %v720
        %vm865 = vcmp.eq.s32.totalorder %v264, %v723
        %vm866 = vcmp.eq.s32.totalorder %v264, %v726
        %vm867 = vcmp.eq.s32.totalorder %v264, %v729
        %vm868 = vcmp.eq.s32.totalorder %v264, %v732
        %vm869 = vcmp.eq.s32.totalorder %v264, %v735
        %vm870 = vcmp.eq.s32.totalorder %v264, %v738
        %vm871 = vcmp.eq.s32.totalorder %v264, %v741
        %vm872 = vcmp.eq.s32.totalorder %v264, %v744
        %vm873 = vcmp.eq.s32.totalorder %v264, %v747
        %vm874 = vcmp.eq.s32.totalorder %v264, %v750
        %vm875 = vcmp.eq.s32.totalorder %v264, %v753
        %vm876 = vcmp.eq.s32.totalorder %v264, %v756
        %vm877 = vcmp.eq.s32.totalorder %v264, %v759
        %vm878 = vcmp.eq.s32.totalorder %v264, %v762
        %vm879 = vcmp.eq.s32.totalorder %v264, %v765
        %vm880 = vcmp.eq.s32.totalorder %v264, %v768
        %vm881 = vcmp.eq.s32.totalorder %v264, %v771
        %vm882 = vcmp.eq.s32.totalorder %v264, %v774
        %vm883 = vcmp.eq.s32.totalorder %v264, %v777
        %vm884 = vcmp.eq.s32.totalorder %v264, %v780
        %vm885 = vcmp.eq.s32.totalorder %v264, %v783
        %vm886 = vcmp.eq.s32.totalorder %v264, %v786
        %vm887 = vcmp.eq.s32.totalorder %v264, %v789
        %vm888 = vcmp.eq.s32.totalorder %v264, %v792
        %vm889 = vcmp.eq.s32.totalorder %v264, %v795
        %vm890 = vcmp.eq.s32.totalorder %v264, %v798
        %vm891 = vcmp.eq.s32.totalorder %v264, %v801
        %vm892 = vcmp.eq.s32.totalorder %v264, %v804
        %vm893 = vcmp.eq.s32.totalorder %v264, %v807
        %vm894 = vcmp.eq.s32.totalorder %v264, %v810
        %vm895 = vcmp.eq.s32.totalorder %v264, %v813
        %vm896 = vcmp.eq.s32.totalorder %v264, %v816
        %vm897 = vcmp.eq.s32.totalorder %v264, %v819
        %vm898 = vcmp.eq.s32.totalorder %v264, %v822
        %vm899 = vcmp.eq.s32.totalorder %v264, %v825
        %vm900 = vcmp.eq.s32.totalorder %v264, %v828
        %vm901 = vcmp.eq.s32.totalorder %v264, %v831
        %vm902 = vcmp.eq.s32.totalorder %v264, %v834
        %vm903 = vcmp.eq.s32.totalorder %v264, %v837
        %vm904 = vcmp.eq.s32.totalorder %v264, %v840
        %v905 = vsel %vm841, 1, 0
        %v906 = vsel %vm842, 1, 0
        %v907 = vsel %vm843, 1, 0
        %v908 = vsel %vm844, 1, 0
        %v909 = vsel %vm845, 1, 0
        %v910 = vsel %vm846, 1, 0
        %v911 = vsel %vm847, 1, 0
        %v912 = vsel %vm848, 1, 0
        %v913 = vsel %vm849, 1, 0
        %v914 = vsel %vm850, 1, 0
        %v915 = vsel %vm851, 1, 0
        %v916 = vsel %vm852, 1, 0
        %v917 = vsel %vm853, 1, 0
        %v918 = vsel %vm854, 1, 0
        %v919 = vsel %vm855, 1, 0
        %v920 = vsel %vm856, 1, 0
        %v921 = vsel %vm857, 1, 0
        %v922 = vsel %vm858, 1, 0
        %v923 = vsel %vm859, 1, 0
        %v924 = vsel %vm860, 1, 0
        %v925 = vsel %vm861, 1, 0
        %v926 = vsel %vm862, 1, 0
        %v927 = vsel %vm863, 1, 0
        %v928 = vsel %vm864, 1, 0
        %v929 = vsel %vm865, 1, 0
        %v930 = vsel %vm866, 1, 0
        %v931 = vsel %vm867, 1, 0
        %v932 = vsel %vm868, 1, 0
        %v933 = vsel %vm869, 1, 0
        %v934 = vsel %vm870, 1, 0
        %v935 = vsel %vm871, 1, 0
        %v936 = vsel %vm872, 1, 0
        %v937 = vsel %vm873, 1, 0
        %v938 = vsel %vm874, 1, 0
        %v939 = vsel %vm875, 1, 0
        %v940 = vsel %vm876, 1, 0
        %v941 = vsel %vm877, 1, 0
        %v942 = vsel %vm878, 1, 0
        %v943 = vsel %vm879, 1, 0
        %v944 = vsel %vm880, 1, 0
        %v945 = vsel %vm881, 1, 0
        %v946 = vsel %vm882, 1, 0
        %v947 = vsel %vm883, 1, 0
        %v948 = vsel %vm884, 1, 0
        %v949 = vsel %vm885, 1, 0
        %v950 = vsel %vm886, 1, 0
        %v951 = vsel %vm887, 1, 0
        %v952 = vsel %vm888, 1, 0
        %v953 = vsel %vm889, 1, 0
        %v954 = vsel %vm890, 1, 0
        %v955 = vsel %vm891, 1, 0
        %v956 = vsel %vm892, 1, 0
        %v957 = vsel %vm893, 1, 0
        %v958 = vsel %vm894, 1, 0
        %v959 = vsel %vm895, 1, 0
        %v960 = vsel %vm896, 1, 0
        %v961 = vsel %vm897, 1, 0
        %v962 = vsel %vm898, 1, 0
        %v963 = vsel %vm899, 1, 0
        %v964 = vsel %vm900, 1, 0
        %v965 = vsel %vm901, 1, 0
        %v966 = vsel %vm902, 1, 0
        %v967 = vsel %vm903, 1, 0
        %v968 = vsel %vm904, 1, 0
        %v969 = vcvt.s32.f32 %v905
        %v970 = vcvt.s32.f32 %v906
        %v971 = vcvt.s32.f32 %v907
        %v972 = vcvt.s32.f32 %v908
        %v973 = vcvt.s32.f32 %v909
        %v974 = vcvt.s32.f32 %v910
        %v975 = vcvt.s32.f32 %v911
        %v976 = vcvt.s32.f32 %v912
        %v977 = vcvt.s32.f32 %v913
        %v978 = vcvt.s32.f32 %v914
        %v979 = vcvt.s32.f32 %v915
        %v980 = vcvt.s32.f32 %v916
        %v981 = vcvt.s32.f32 %v917
        %v982 = vcvt.s32.f32 %v918
        %v983 = vcvt.s32.f32 %v919
        %v984 = vcvt.s32.f32 %v920
        %v985 = vcvt.s32.f32 %v921
        %v986 = vcvt.s32.f32 %v922
        %v987 = vcvt.s32.f32 %v923
        %v988 = vcvt.s32.f32 %v924
        %v989 = vcvt.s32.f32 %v925
        %v990 = vcvt.s32.f32 %v926
        %v991 = vcvt.s32.f32 %v927
        %v992 = vcvt.s32.f32 %v928
        %v993 = vcvt.s32.f32 %v929
        %v994 = vcvt.s32.f32 %v930
        %v995 = vcvt.s32.f32 %v931
        %v996 = vcvt.s32.f32 %v932
        %v997 = vcvt.s32.f32 %v933
        %v998 = vcvt.s32.f32 %v934
        %v999 = vcvt.s32.f32 %v935
        %v1000 = vcvt.s32.f32 %v936
        %v1001 = vcvt.s32.f32 %v937
        %v1002 = vcvt.s32.f32 %v938
        %v1003 = vcvt.s32.f32 %v939
        %v1004 = vcvt.s32.f32 %v940
        %v1005 = vcvt.s32.f32 %v941
        %v1006 = vcvt.s32.f32 %v942
        %v1007 = vcvt.s32.f32 %v943
        %v1008 = vcvt.s32.f32 %v944
        %v1009 = vcvt.s32.f32 %v945
        %v1010 = vcvt.s32.f32 %v946
        %v1011 = vcvt.s32.f32 %v947
        %v1012 = vcvt.s32.f32 %v948
        %v1013 = vcvt.s32.f32 %v949
        %v1014 = vcvt.s32.f32 %v950
        %v1015 = vcvt.s32.f32 %v951
        %v1016 = vcvt.s32.f32 %v952
        %v1017 = vcvt.s32.f32 %v953
        %v1018 = vcvt.s32.f32 %v954
        %v1019 = vcvt.s32.f32 %v955
        %v1020 = vcvt.s32.f32 %v956
        %v1021 = vcvt.s32.f32 %v957
        %v1022 = vcvt.s32.f32 %v958
        %v1023 = vcvt.s32.f32 %v959
        %v1024 = vcvt.s32.f32 %v960
        %v1025 = vcvt.s32.f32 %v961
        %v1026 = vcvt.s32.f32 %v962
        %v1027 = vcvt.s32.f32 %v963
        %v1028 = vcvt.s32.f32 %v964
        %v1029 = vcvt.s32.f32 %v965
        %v1030 = vcvt.s32.f32 %v966
        %v1031 = vcvt.s32.f32 %v967
        %v1032 = vcvt.s32.f32 %v968
        %1033 = vset.pattern.permute.xlu0 2
        %1034 = vperm.xlu0 %1033, %v199
        %v1035 = vpop.permute.xlu0 %1034
        %1036 = vset.pattern.permute.xlu0 2
        %1037 = vperm.xlu0 %1036, %v200
        %v1038 = vpop.permute.xlu0 %1037
        %1039 = vset.pattern.permute.xlu0 2
        %1040 = vperm.xlu0 %1039, %v201
        %v1041 = vpop.permute.xlu0 %1040
        %1042 = vset.pattern.permute.xlu0 2
        %1043 = vperm.xlu0 %1042, %v202
        %v1044 = vpop.permute.xlu0 %1043
        %1045 = vset.pattern.permute.xlu0 2
        %1046 = vperm.xlu0 %1045, %v203
        %v1047 = vpop.permute.xlu0 %1046
        %1048 = vset.pattern.permute.xlu0 2
        %1049 = vperm.xlu0 %1048, %v204
        %v1050 = vpop.permute.xlu0 %1049
        %1051 = vset.pattern.permute.xlu0 2
        %1052 = vperm.xlu0 %1051, %v205
        %v1053 = vpop.permute.xlu0 %1052
        %1054 = vset.pattern.permute.xlu0 2
        %1055 = vperm.xlu0 %1054, %v206
        %v1056 = vpop.permute.xlu0 %1055
        %1057 = vset.pattern.permute.xlu0 2
        %1058 = vperm.xlu0 %1057, %v207
        %v1059 = vpop.permute.xlu0 %1058
        %1060 = vset.pattern.permute.xlu0 2
        %1061 = vperm.xlu0 %1060, %v208
        %v1062 = vpop.permute.xlu0 %1061
        %1063 = vset.pattern.permute.xlu0 2
        %1064 = vperm.xlu0 %1063, %v209
        %v1065 = vpop.permute.xlu0 %1064
        %1066 = vset.pattern.permute.xlu0 2
        %1067 = vperm.xlu0 %1066, %v210
        %v1068 = vpop.permute.xlu0 %1067
        %1069 = vset.pattern.permute.xlu0 2
        %1070 = vperm.xlu0 %1069, %v211
        %v1071 = vpop.permute.xlu0 %1070
        %1072 = vset.pattern.permute.xlu0 2
        %1073 = vperm.xlu0 %1072, %v212
        %v1074 = vpop.permute.xlu0 %1073
        %1075 = vset.pattern.permute.xlu0 2
        %1076 = vperm.xlu0 %1075, %v213
        %v1077 = vpop.permute.xlu0 %1076
        %1078 = vset.pattern.permute.xlu0 2
        %1079 = vperm.xlu0 %1078, %v214
        %v1080 = vpop.permute.xlu0 %1079
        %1081 = vset.pattern.permute.xlu0 2
        %1082 = vperm.xlu0 %1081, %v215
        %v1083 = vpop.permute.xlu0 %1082
        %1084 = vset.pattern.permute.xlu0 2
        %1085 = vperm.xlu0 %1084, %v216
        %v1086 = vpop.permute.xlu0 %1085
        %1087 = vset.pattern.permute.xlu0 2
        %1088 = vperm.xlu0 %1087, %v217
        %v1089 = vpop.permute.xlu0 %1088
        %1090 = vset.pattern.permute.xlu0 2
        %1091 = vperm.xlu0 %1090, %v218
        %v1092 = vpop.permute.xlu0 %1091
        %1093 = vset.pattern.permute.xlu0 2
        %1094 = vperm.xlu0 %1093, %v219
        %v1095 = vpop.permute.xlu0 %1094
        %1096 = vset.pattern.permute.xlu0 2
        %1097 = vperm.xlu0 %1096, %v220
        %v1098 = vpop.permute.xlu0 %1097
        %1099 = vset.pattern.permute.xlu0 2
        %1100 = vperm.xlu0 %1099, %v221
        %v1101 = vpop.permute.xlu0 %1100
        %1102 = vset.pattern.permute.xlu0 2
        %1103 = vperm.xlu0 %1102, %v222
        %v1104 = vpop.permute.xlu0 %1103
        %1105 = vset.pattern.permute.xlu0 2
        %1106 = vperm.xlu0 %1105, %v223
        %v1107 = vpop.permute.xlu0 %1106
        %1108 = vset.pattern.permute.xlu0 2
        %1109 = vperm.xlu0 %1108, %v224
        %v1110 = vpop.permute.xlu0 %1109
        %1111 = vset.pattern.permute.xlu0 2
        %1112 = vperm.xlu0 %1111, %v225
        %v1113 = vpop.permute.xlu0 %1112
        %1114 = vset.pattern.permute.xlu0 2
        %1115 = vperm.xlu0 %1114, %v226
        %v1116 = vpop.permute.xlu0 %1115
        %1117 = vset.pattern.permute.xlu0 2
        %1118 = vperm.xlu0 %1117, %v227
        %v1119 = vpop.permute.xlu0 %1118
        %1120 = vset.pattern.permute.xlu0 2
        %1121 = vperm.xlu0 %1120, %v228
        %v1122 = vpop.permute.xlu0 %1121
        %1123 = vset.pattern.permute.xlu0 2
        %1124 = vperm.xlu0 %1123, %v229
        %v1125 = vpop.permute.xlu0 %1124
        %1126 = vset.pattern.permute.xlu0 2
        %1127 = vperm.xlu0 %1126, %v230
        %v1128 = vpop.permute.xlu0 %1127
        %1129 = vset.pattern.permute.xlu0 2
        %1130 = vperm.xlu0 %1129, %v231
        %v1131 = vpop.permute.xlu0 %1130
        %1132 = vset.pattern.permute.xlu0 2
        %1133 = vperm.xlu0 %1132, %v232
        %v1134 = vpop.permute.xlu0 %1133
        %1135 = vset.pattern.permute.xlu0 2
        %1136 = vperm.xlu0 %1135, %v233
        %v1137 = vpop.permute.xlu0 %1136
        %1138 = vset.pattern.permute.xlu0 2
        %1139 = vperm.xlu0 %1138, %v234
        %v1140 = vpop.permute.xlu0 %1139
        %1141 = vset.pattern.permute.xlu0 2
        %1142 = vperm.xlu0 %1141, %v235
        %v1143 = vpop.permute.xlu0 %1142
        %1144 = vset.pattern.permute.xlu0 2
        %1145 = vperm.xlu0 %1144, %v236
        %v1146 = vpop.permute.xlu0 %1145
        %1147 = vset.pattern.permute.xlu0 2
        %1148 = vperm.xlu0 %1147, %v237
        %v1149 = vpop.permute.xlu0 %1148
        %1150 = vset.pattern.permute.xlu0 2
        %1151 = vperm.xlu0 %1150, %v238
        %v1152 = vpop.permute.xlu0 %1151
        %1153 = vset.pattern.permute.xlu0 2
        %1154 = vperm.xlu0 %1153, %v239
        %v1155 = vpop.permute.xlu0 %1154
        %1156 = vset.pattern.permute.xlu0 2
        %1157 = vperm.xlu0 %1156, %v240
        %v1158 = vpop.permute.xlu0 %1157
        %1159 = vset.pattern.permute.xlu0 2
        %1160 = vperm.xlu0 %1159, %v241
        %v1161 = vpop.permute.xlu0 %1160
        %1162 = vset.pattern.permute.xlu0 2
        %1163 = vperm.xlu0 %1162, %v242
        %v1164 = vpop.permute.xlu0 %1163
        %1165 = vset.pattern.permute.xlu0 2
        %1166 = vperm.xlu0 %1165, %v243
        %v1167 = vpop.permute.xlu0 %1166
        %1168 = vset.pattern.permute.xlu0 2
        %1169 = vperm.xlu0 %1168, %v244
        %v1170 = vpop.permute.xlu0 %1169
        %1171 = vset.pattern.permute.xlu0 2
        %1172 = vperm.xlu0 %1171, %v245
        %v1173 = vpop.permute.xlu0 %1172
        %1174 = vset.pattern.permute.xlu0 2
        %1175 = vperm.xlu0 %1174, %v246
        %v1176 = vpop.permute.xlu0 %1175
        %1177 = vset.pattern.permute.xlu0 2
        %1178 = vperm.xlu0 %1177, %v247
        %v1179 = vpop.permute.xlu0 %1178
        %1180 = vset.pattern.permute.xlu0 2
        %1181 = vperm.xlu0 %1180, %v248
        %v1182 = vpop.permute.xlu0 %1181
        %1183 = vset.pattern.permute.xlu0 2
        %1184 = vperm.xlu0 %1183, %v249
        %v1185 = vpop.permute.xlu0 %1184
        %1186 = vset.pattern.permute.xlu0 2
        %1187 = vperm.xlu0 %1186, %v250
        %v1188 = vpop.permute.xlu0 %1187
        %1189 = vset.pattern.permute.xlu0 2
        %1190 = vperm.xlu0 %1189, %v251
        %v1191 = vpop.permute.xlu0 %1190
        %1192 = vset.pattern.permute.xlu0 2
        %1193 = vperm.xlu0 %1192, %v252
        %v1194 = vpop.permute.xlu0 %1193
        %1195 = vset.pattern.permute.xlu0 2
        %1196 = vperm.xlu0 %1195, %v253
        %v1197 = vpop.permute.xlu0 %1196
        %1198 = vset.pattern.permute.xlu0 2
        %1199 = vperm.xlu0 %1198, %v254
        %v1200 = vpop.permute.xlu0 %1199
        %1201 = vset.pattern.permute.xlu0 2
        %1202 = vperm.xlu0 %1201, %v255
        %v1203 = vpop.permute.xlu0 %1202
        %1204 = vset.pattern.permute.xlu0 2
        %1205 = vperm.xlu0 %1204, %v256
        %v1206 = vpop.permute.xlu0 %1205
        %1207 = vset.pattern.permute.xlu0 2
        %1208 = vperm.xlu0 %1207, %v257
        %v1209 = vpop.permute.xlu0 %1208
        %1210 = vset.pattern.permute.xlu0 2
        %1211 = vperm.xlu0 %1210, %v258
        %v1212 = vpop.permute.xlu0 %1211
        %1213 = vset.pattern.permute.xlu0 2
        %1214 = vperm.xlu0 %1213, %v259
        %v1215 = vpop.permute.xlu0 %1214
        %1216 = vset.pattern.permute.xlu0 2
        %1217 = vperm.xlu0 %1216, %v260
        %v1218 = vpop.permute.xlu0 %1217
        %1219 = vset.pattern.permute.xlu0 2
        %1220 = vperm.xlu0 %1219, %v261
        %v1221 = vpop.permute.xlu0 %1220
        %1222 = vset.pattern.permute.xlu0 2
        %1223 = vperm.xlu0 %1222, %v262
        %v1224 = vpop.permute.xlu0 %1223
        %vm1225 = vcmp.eq.s32.totalorder %v264, %v1035
        %vm1226 = vcmp.eq.s32.totalorder %v264, %v1038
        %vm1227 = vcmp.eq.s32.totalorder %v264, %v1041
        %vm1228 = vcmp.eq.s32.totalorder %v264, %v1044
        %vm1229 = vcmp.eq.s32.totalorder %v264, %v1047
        %vm1230 = vcmp.eq.s32.totalorder %v264, %v1050
        %vm1231 = vcmp.eq.s32.totalorder %v264, %v1053
        %vm1232 = vcmp.eq.s32.totalorder %v264, %v1056
        %vm1233 = vcmp.eq.s32.totalorder %v264, %v1059
        %vm1234 = vcmp.eq.s32.totalorder %v264, %v1062
        %vm1235 = vcmp.eq.s32.totalorder %v264, %v1065
        %vm1236 = vcmp.eq.s32.totalorder %v264, %v1068
        %vm1237 = vcmp.eq.s32.totalorder %v264, %v1071
        %vm1238 = vcmp.eq.s32.totalorder %v264, %v1074
        %vm1239 = vcmp.eq.s32.totalorder %v264, %v1077
        %vm1240 = vcmp.eq.s32.totalorder %v264, %v1080
        %vm1241 = vcmp.eq.s32.totalorder %v264, %v1083
        %vm1242 = vcmp.eq.s32.totalorder %v264, %v1086
        %vm1243 = vcmp.eq.s32.totalorder %v264, %v1089
        %vm1244 = vcmp.eq.s32.totalorder %v264, %v1092
        %vm1245 = vcmp.eq.s32.totalorder %v264, %v1095
        %vm1246 = vcmp.eq.s32.totalorder %v264, %v1098
        %vm1247 = vcmp.eq.s32.totalorder %v264, %v1101
        %vm1248 = vcmp.eq.s32.totalorder %v264, %v1104
        %vm1249 = vcmp.eq.s32.totalorder %v264, %v1107
        %vm1250 = vcmp.eq.s32.totalorder %v264, %v1110
        %vm1251 = vcmp.eq.s32.totalorder %v264, %v1113
        %vm1252 = vcmp.eq.s32.totalorder %v264, %v1116
        %vm1253 = vcmp.eq.s32.totalorder %v264, %v1119
        %vm1254 = vcmp.eq.s32.totalorder %v264, %v1122
        %vm1255 = vcmp.eq.s32.totalorder %v264, %v1125
        %vm1256 = vcmp.eq.s32.totalorder %v264, %v1128
        %vm1257 = vcmp.eq.s32.totalorder %v264, %v1131
        %vm1258 = vcmp.eq.s32.totalorder %v264, %v1134
        %vm1259 = vcmp.eq.s32.totalorder %v264, %v1137
        %vm1260 = vcmp.eq.s32.totalorder %v264, %v1140
        %vm1261 = vcmp.eq.s32.totalorder %v264, %v1143
        %vm1262 = vcmp.eq.s32.totalorder %v264, %v1146
        %vm1263 = vcmp.eq.s32.totalorder %v264, %v1149
        %vm1264 = vcmp.eq.s32.totalorder %v264, %v1152
        %vm1265 = vcmp.eq.s32.totalorder %v264, %v1155
        %vm1266 = vcmp.eq.s32.totalorder %v264, %v1158
        %vm1267 = vcmp.eq.s32.totalorder %v264, %v1161
        %vm1268 = vcmp.eq.s32.totalorder %v264, %v1164
        %vm1269 = vcmp.eq.s32.totalorder %v264, %v1167
        %vm1270 = vcmp.eq.s32.totalorder %v264, %v1170
        %vm1271 = vcmp.eq.s32.totalorder %v264, %v1173
        %vm1272 = vcmp.eq.s32.totalorder %v264, %v1176
        %vm1273 = vcmp.eq.s32.totalorder %v264, %v1179
        %vm1274 = vcmp.eq.s32.totalorder %v264, %v1182
        %vm1275 = vcmp.eq.s32.totalorder %v264, %v1185
        %vm1276 = vcmp.eq.s32.totalorder %v264, %v1188
        %vm1277 = vcmp.eq.s32.totalorder %v264, %v1191
        %vm1278 = vcmp.eq.s32.totalorder %v264, %v1194
        %vm1279 = vcmp.eq.s32.totalorder %v264, %v1197
        %vm1280 = vcmp.eq.s32.totalorder %v264, %v1200
        %vm1281 = vcmp.eq.s32.totalorder %v264, %v1203
        %vm1282 = vcmp.eq.s32.totalorder %v264, %v1206
        %vm1283 = vcmp.eq.s32.totalorder %v264, %v1209
        %vm1284 = vcmp.eq.s32.totalorder %v264, %v1212
        %vm1285 = vcmp.eq.s32.totalorder %v264, %v1215
        %vm1286 = vcmp.eq.s32.totalorder %v264, %v1218
        %vm1287 = vcmp.eq.s32.totalorder %v264, %v1221
        %vm1288 = vcmp.eq.s32.totalorder %v264, %v1224
        %v1289 = vsel %vm1225, 1, 0
        %v1290 = vsel %vm1226, 1, 0
        %v1291 = vsel %vm1227, 1, 0
        %v1292 = vsel %vm1228, 1, 0
        %v1293 = vsel %vm1229, 1, 0
        %v1294 = vsel %vm1230, 1, 0
        %v1295 = vsel %vm1231, 1, 0
        %v1296 = vsel %vm1232, 1, 0
        %v1297 = vsel %vm1233, 1, 0
        %v1298 = vsel %vm1234, 1, 0
        %v1299 = vsel %vm1235, 1, 0
        %v1300 = vsel %vm1236, 1, 0
        %v1301 = vsel %vm1237, 1, 0
        %v1302 = vsel %vm1238, 1, 0
        %v1303 = vsel %vm1239, 1, 0
        %v1304 = vsel %vm1240, 1, 0
        %v1305 = vsel %vm1241, 1, 0
        %v1306 = vsel %vm1242, 1, 0
        %v1307 = vsel %vm1243, 1, 0
        %v1308 = vsel %vm1244, 1, 0
        %v1309 = vsel %vm1245, 1, 0
        %v1310 = vsel %vm1246, 1, 0
        %v1311 = vsel %vm1247, 1, 0
        %v1312 = vsel %vm1248, 1, 0
        %v1313 = vsel %vm1249, 1, 0
        %v1314 = vsel %vm1250, 1, 0
        %v1315 = vsel %vm1251, 1, 0
        %v1316 = vsel %vm1252, 1, 0
        %v1317 = vsel %vm1253, 1, 0
        %v1318 = vsel %vm1254, 1, 0
        %v1319 = vsel %vm1255, 1, 0
        %v1320 = vsel %vm1256, 1, 0
        %v1321 = vsel %vm1257, 1, 0
        %v1322 = vsel %vm1258, 1, 0
        %v1323 = vsel %vm1259, 1, 0
        %v1324 = vsel %vm1260, 1, 0
        %v1325 = vsel %vm1261, 1, 0
        %v1326 = vsel %vm1262, 1, 0
        %v1327 = vsel %vm1263, 1, 0
        %v1328 = vsel %vm1264, 1, 0
        %v1329 = vsel %vm1265, 1, 0
        %v1330 = vsel %vm1266, 1, 0
        %v1331 = vsel %vm1267, 1, 0
        %v1332 = vsel %vm1268, 1, 0
        %v1333 = vsel %vm1269, 1, 0
        %v1334 = vsel %vm1270, 1, 0
        %v1335 = vsel %vm1271, 1, 0
        %v1336 = vsel %vm1272, 1, 0
        %v1337 = vsel %vm1273, 1, 0
        %v1338 = vsel %vm1274, 1, 0
        %v1339 = vsel %vm1275, 1, 0
        %v1340 = vsel %vm1276, 1, 0
        %v1341 = vsel %vm1277, 1, 0
        %v1342 = vsel %vm1278, 1, 0
        %v1343 = vsel %vm1279, 1, 0
        %v1344 = vsel %vm1280, 1, 0
        %v1345 = vsel %vm1281, 1, 0
        %v1346 = vsel %vm1282, 1, 0
        %v1347 = vsel %vm1283, 1, 0
        %v1348 = vsel %vm1284, 1, 0
        %v1349 = vsel %vm1285, 1, 0
        %v1350 = vsel %vm1286, 1, 0
        %v1351 = vsel %vm1287, 1, 0
        %v1352 = vsel %vm1288, 1, 0
        %v1353 = vcvt.s32.f32 %v1289
        %v1354 = vcvt.s32.f32 %v1290
        %v1355 = vcvt.s32.f32 %v1291
        %v1356 = vcvt.s32.f32 %v1292
        %v1357 = vcvt.s32.f32 %v1293
        %v1358 = vcvt.s32.f32 %v1294
        %v1359 = vcvt.s32.f32 %v1295
        %v1360 = vcvt.s32.f32 %v1296
        %v1361 = vcvt.s32.f32 %v1297
        %v1362 = vcvt.s32.f32 %v1298
        %v1363 = vcvt.s32.f32 %v1299
        %v1364 = vcvt.s32.f32 %v1300
        %v1365 = vcvt.s32.f32 %v1301
        %v1366 = vcvt.s32.f32 %v1302
        %v1367 = vcvt.s32.f32 %v1303
        %v1368 = vcvt.s32.f32 %v1304
        %v1369 = vcvt.s32.f32 %v1305
        %v1370 = vcvt.s32.f32 %v1306
        %v1371 = vcvt.s32.f32 %v1307
        %v1372 = vcvt.s32.f32 %v1308
        %v1373 = vcvt.s32.f32 %v1309
        %v1374 = vcvt.s32.f32 %v1310
        %v1375 = vcvt.s32.f32 %v1311
        %v1376 = vcvt.s32.f32 %v1312
        %v1377 = vcvt.s32.f32 %v1313
        %v1378 = vcvt.s32.f32 %v1314
        %v1379 = vcvt.s32.f32 %v1315
        %v1380 = vcvt.s32.f32 %v1316
        %v1381 = vcvt.s32.f32 %v1317
        %v1382 = vcvt.s32.f32 %v1318
        %v1383 = vcvt.s32.f32 %v1319
        %v1384 = vcvt.s32.f32 %v1320
        %v1385 = vcvt.s32.f32 %v1321
        %v1386 = vcvt.s32.f32 %v1322
        %v1387 = vcvt.s32.f32 %v1323
        %v1388 = vcvt.s32.f32 %v1324
        %v1389 = vcvt.s32.f32 %v1325
        %v1390 = vcvt.s32.f32 %v1326
        %v1391 = vcvt.s32.f32 %v1327
        %v1392 = vcvt.s32.f32 %v1328
        %v1393 = vcvt.s32.f32 %v1329
        %v1394 = vcvt.s32.f32 %v1330
        %v1395 = vcvt.s32.f32 %v1331
        %v1396 = vcvt.s32.f32 %v1332
        %v1397 = vcvt.s32.f32 %v1333
        %v1398 = vcvt.s32.f32 %v1334
        %v1399 = vcvt.s32.f32 %v1335
        %v1400 = vcvt.s32.f32 %v1336
        %v1401 = vcvt.s32.f32 %v1337
        %v1402 = vcvt.s32.f32 %v1338
        %v1403 = vcvt.s32.f32 %v1339
        %v1404 = vcvt.s32.f32 %v1340
        %v1405 = vcvt.s32.f32 %v1341
        %v1406 = vcvt.s32.f32 %v1342
        %v1407 = vcvt.s32.f32 %v1343
        %v1408 = vcvt.s32.f32 %v1344
        %v1409 = vcvt.s32.f32 %v1345
        %v1410 = vcvt.s32.f32 %v1346
        %v1411 = vcvt.s32.f32 %v1347
        %v1412 = vcvt.s32.f32 %v1348
        %v1413 = vcvt.s32.f32 %v1349
        %v1414 = vcvt.s32.f32 %v1350
        %v1415 = vcvt.s32.f32 %v1351
        %v1416 = vcvt.s32.f32 %v1352
        %1417 = vset.pattern.permute.xlu0 3
        %1418 = vperm.xlu0 %1417, %v199
        %v1419 = vpop.permute.xlu0 %1418
        %1420 = vset.pattern.permute.xlu0 3
        %1421 = vperm.xlu0 %1420, %v200
        %v1422 = vpop.permute.xlu0 %1421
        %1423 = vset.pattern.permute.xlu0 3
        %1424 = vperm.xlu0 %1423, %v201
        %v1425 = vpop.permute.xlu0 %1424
        %1426 = vset.pattern.permute.xlu0 3
        %1427 = vperm.xlu0 %1426, %v202
        %v1428 = vpop.permute.xlu0 %1427
        %1429 = vset.pattern.permute.xlu0 3
        %1430 = vperm.xlu0 %1429, %v203
        %v1431 = vpop.permute.xlu0 %1430
        %1432 = vset.pattern.permute.xlu0 3
        %1433 = vperm.xlu0 %1432, %v204
        %v1434 = vpop.permute.xlu0 %1433
        %1435 = vset.pattern.permute.xlu0 3
        %1436 = vperm.xlu0 %1435, %v205
        %v1437 = vpop.permute.xlu0 %1436
        %1438 = vset.pattern.permute.xlu0 3
        %1439 = vperm.xlu0 %1438, %v206
        %v1440 = vpop.permute.xlu0 %1439
        %1441 = vset.pattern.permute.xlu0 3
        %1442 = vperm.xlu0 %1441, %v207
        %v1443 = vpop.permute.xlu0 %1442
        %1444 = vset.pattern.permute.xlu0 3
        %1445 = vperm.xlu0 %1444, %v208
        %v1446 = vpop.permute.xlu0 %1445
        %1447 = vset.pattern.permute.xlu0 3
        %1448 = vperm.xlu0 %1447, %v209
        %v1449 = vpop.permute.xlu0 %1448
        %1450 = vset.pattern.permute.xlu0 3
        %1451 = vperm.xlu0 %1450, %v210
        %v1452 = vpop.permute.xlu0 %1451
        %1453 = vset.pattern.permute.xlu0 3
        %1454 = vperm.xlu0 %1453, %v211
        %v1455 = vpop.permute.xlu0 %1454
        %1456 = vset.pattern.permute.xlu0 3
        %1457 = vperm.xlu0 %1456, %v212
        %v1458 = vpop.permute.xlu0 %1457
        %1459 = vset.pattern.permute.xlu0 3
        %1460 = vperm.xlu0 %1459, %v213
        %v1461 = vpop.permute.xlu0 %1460
        %1462 = vset.pattern.permute.xlu0 3
        %1463 = vperm.xlu0 %1462, %v214
        %v1464 = vpop.permute.xlu0 %1463
        %1465 = vset.pattern.permute.xlu0 3
        %1466 = vperm.xlu0 %1465, %v215
        %v1467 = vpop.permute.xlu0 %1466
        %1468 = vset.pattern.permute.xlu0 3
        %1469 = vperm.xlu0 %1468, %v216
        %v1470 = vpop.permute.xlu0 %1469
        %1471 = vset.pattern.permute.xlu0 3
        %1472 = vperm.xlu0 %1471, %v217
        %v1473 = vpop.permute.xlu0 %1472
        %1474 = vset.pattern.permute.xlu0 3
        %1475 = vperm.xlu0 %1474, %v218
        %v1476 = vpop.permute.xlu0 %1475
        %1477 = vset.pattern.permute.xlu0 3
        %1478 = vperm.xlu0 %1477, %v219
        %v1479 = vpop.permute.xlu0 %1478
        %1480 = vset.pattern.permute.xlu0 3
        %1481 = vperm.xlu0 %1480, %v220
        %v1482 = vpop.permute.xlu0 %1481
        %1483 = vset.pattern.permute.xlu0 3
        %1484 = vperm.xlu0 %1483, %v221
        %v1485 = vpop.permute.xlu0 %1484
        %1486 = vset.pattern.permute.xlu0 3
        %1487 = vperm.xlu0 %1486, %v222
        %v1488 = vpop.permute.xlu0 %1487
        %1489 = vset.pattern.permute.xlu0 3
        %1490 = vperm.xlu0 %1489, %v223
        %v1491 = vpop.permute.xlu0 %1490
        %1492 = vset.pattern.permute.xlu0 3
        %1493 = vperm.xlu0 %1492, %v224
        %v1494 = vpop.permute.xlu0 %1493
        %1495 = vset.pattern.permute.xlu0 3
        %1496 = vperm.xlu0 %1495, %v225
        %v1497 = vpop.permute.xlu0 %1496
        %1498 = vset.pattern.permute.xlu0 3
        %1499 = vperm.xlu0 %1498, %v226
        %v1500 = vpop.permute.xlu0 %1499
        %1501 = vset.pattern.permute.xlu0 3
        %1502 = vperm.xlu0 %1501, %v227
        %v1503 = vpop.permute.xlu0 %1502
        %1504 = vset.pattern.permute.xlu0 3
        %1505 = vperm.xlu0 %1504, %v228
        %v1506 = vpop.permute.xlu0 %1505
        %1507 = vset.pattern.permute.xlu0 3
        %1508 = vperm.xlu0 %1507, %v229
        %v1509 = vpop.permute.xlu0 %1508
        %1510 = vset.pattern.permute.xlu0 3
        %1511 = vperm.xlu0 %1510, %v230
        %v1512 = vpop.permute.xlu0 %1511
        %1513 = vset.pattern.permute.xlu0 3
        %1514 = vperm.xlu0 %1513, %v231
        %v1515 = vpop.permute.xlu0 %1514
        %1516 = vset.pattern.permute.xlu0 3
        %1517 = vperm.xlu0 %1516, %v232
        %v1518 = vpop.permute.xlu0 %1517
        %1519 = vset.pattern.permute.xlu0 3
        %1520 = vperm.xlu0 %1519, %v233
        %v1521 = vpop.permute.xlu0 %1520
        %1522 = vset.pattern.permute.xlu0 3
        %1523 = vperm.xlu0 %1522, %v234
        %v1524 = vpop.permute.xlu0 %1523
        %1525 = vset.pattern.permute.xlu0 3
        %1526 = vperm.xlu0 %1525, %v235
        %v1527 = vpop.permute.xlu0 %1526
        %1528 = vset.pattern.permute.xlu0 3
        %1529 = vperm.xlu0 %1528, %v236
        %v1530 = vpop.permute.xlu0 %1529
        %1531 = vset.pattern.permute.xlu0 3
        %1532 = vperm.xlu0 %1531, %v237
        %v1533 = vpop.permute.xlu0 %1532
        %1534 = vset.pattern.permute.xlu0 3
        %1535 = vperm.xlu0 %1534, %v238
        %v1536 = vpop.permute.xlu0 %1535
        %1537 = vset.pattern.permute.xlu0 3
        %1538 = vperm.xlu0 %1537, %v239
        %v1539 = vpop.permute.xlu0 %1538
        %1540 = vset.pattern.permute.xlu0 3
        %1541 = vperm.xlu0 %1540, %v240
        %v1542 = vpop.permute.xlu0 %1541
        %1543 = vset.pattern.permute.xlu0 3
        %1544 = vperm.xlu0 %1543, %v241
        %v1545 = vpop.permute.xlu0 %1544
        %1546 = vset.pattern.permute.xlu0 3
        %1547 = vperm.xlu0 %1546, %v242
        %v1548 = vpop.permute.xlu0 %1547
        %1549 = vset.pattern.permute.xlu0 3
        %1550 = vperm.xlu0 %1549, %v243
        %v1551 = vpop.permute.xlu0 %1550
        %1552 = vset.pattern.permute.xlu0 3
        %1553 = vperm.xlu0 %1552, %v244
        %v1554 = vpop.permute.xlu0 %1553
        %1555 = vset.pattern.permute.xlu0 3
        %1556 = vperm.xlu0 %1555, %v245
        %v1557 = vpop.permute.xlu0 %1556
        %1558 = vset.pattern.permute.xlu0 3
        %1559 = vperm.xlu0 %1558, %v246
        %v1560 = vpop.permute.xlu0 %1559
        %1561 = vset.pattern.permute.xlu0 3
        %1562 = vperm.xlu0 %1561, %v247
        %v1563 = vpop.permute.xlu0 %1562
        %1564 = vset.pattern.permute.xlu0 3
        %1565 = vperm.xlu0 %1564, %v248
        %v1566 = vpop.permute.xlu0 %1565
        %1567 = vset.pattern.permute.xlu0 3
        %1568 = vperm.xlu0 %1567, %v249
        %v1569 = vpop.permute.xlu0 %1568
        %1570 = vset.pattern.permute.xlu0 3
        %1571 = vperm.xlu0 %1570, %v250
        %v1572 = vpop.permute.xlu0 %1571
        %1573 = vset.pattern.permute.xlu0 3
        %1574 = vperm.xlu0 %1573, %v251
        %v1575 = vpop.permute.xlu0 %1574
        %1576 = vset.pattern.permute.xlu0 3
        %1577 = vperm.xlu0 %1576, %v252
        %v1578 = vpop.permute.xlu0 %1577
        %1579 = vset.pattern.permute.xlu0 3
        %1580 = vperm.xlu0 %1579, %v253
        %v1581 = vpop.permute.xlu0 %1580
        %1582 = vset.pattern.permute.xlu0 3
        %1583 = vperm.xlu0 %1582, %v254
        %v1584 = vpop.permute.xlu0 %1583
        %1585 = vset.pattern.permute.xlu0 3
        %1586 = vperm.xlu0 %1585, %v255
        %v1587 = vpop.permute.xlu0 %1586
        %1588 = vset.pattern.permute.xlu0 3
        %1589 = vperm.xlu0 %1588, %v256
        %v1590 = vpop.permute.xlu0 %1589
        %1591 = vset.pattern.permute.xlu0 3
        %1592 = vperm.xlu0 %1591, %v257
        %v1593 = vpop.permute.xlu0 %1592
        %1594 = vset.pattern.permute.xlu0 3
        %1595 = vperm.xlu0 %1594, %v258
        %v1596 = vpop.permute.xlu0 %1595
        %1597 = vset.pattern.permute.xlu0 3
        %1598 = vperm.xlu0 %1597, %v259
        %v1599 = vpop.permute.xlu0 %1598
        %1600 = vset.pattern.permute.xlu0 3
        %1601 = vperm.xlu0 %1600, %v260
        %v1602 = vpop.permute.xlu0 %1601
        %1603 = vset.pattern.permute.xlu0 3
        %1604 = vperm.xlu0 %1603, %v261
        %v1605 = vpop.permute.xlu0 %1604
        %1606 = vset.pattern.permute.xlu0 3
        %1607 = vperm.xlu0 %1606, %v262
        %v1608 = vpop.permute.xlu0 %1607
        %vm1609 = vcmp.eq.s32.totalorder %v264, %v1419
        %vm1610 = vcmp.eq.s32.totalorder %v264, %v1422
        %vm1611 = vcmp.eq.s32.totalorder %v264, %v1425
        %vm1612 = vcmp.eq.s32.totalorder %v264, %v1428
        %vm1613 = vcmp.eq.s32.totalorder %v264, %v1431
        %vm1614 = vcmp.eq.s32.totalorder %v264, %v1434
        %vm1615 = vcmp.eq.s32.totalorder %v264, %v1437
        %vm1616 = vcmp.eq.s32.totalorder %v264, %v1440
        %vm1617 = vcmp.eq.s32.totalorder %v264, %v1443
        %vm1618 = vcmp.eq.s32.totalorder %v264, %v1446
        %vm1619 = vcmp.eq.s32.totalorder %v264, %v1449
        %vm1620 = vcmp.eq.s32.totalorder %v264, %v1452
        %vm1621 = vcmp.eq.s32.totalorder %v264, %v1455
        %vm1622 = vcmp.eq.s32.totalorder %v264, %v1458
        %vm1623 = vcmp.eq.s32.totalorder %v264, %v1461
        %vm1624 = vcmp.eq.s32.totalorder %v264, %v1464
        %vm1625 = vcmp.eq.s32.totalorder %v264, %v1467
        %vm1626 = vcmp.eq.s32.totalorder %v264, %v1470
        %vm1627 = vcmp.eq.s32.totalorder %v264, %v1473
        %vm1628 = vcmp.eq.s32.totalorder %v264, %v1476
        %vm1629 = vcmp.eq.s32.totalorder %v264, %v1479
        %vm1630 = vcmp.eq.s32.totalorder %v264, %v1482
        %vm1631 = vcmp.eq.s32.totalorder %v264, %v1485
        %vm1632 = vcmp.eq.s32.totalorder %v264, %v1488
        %vm1633 = vcmp.eq.s32.totalorder %v264, %v1491
        %vm1634 = vcmp.eq.s32.totalorder %v264, %v1494
        %vm1635 = vcmp.eq.s32.totalorder %v264, %v1497
        %vm1636 = vcmp.eq.s32.totalorder %v264, %v1500
        %vm1637 = vcmp.eq.s32.totalorder %v264, %v1503
        %vm1638 = vcmp.eq.s32.totalorder %v264, %v1506
        %vm1639 = vcmp.eq.s32.totalorder %v264, %v1509
        %vm1640 = vcmp.eq.s32.totalorder %v264, %v1512
        %vm1641 = vcmp.eq.s32.totalorder %v264, %v1515
        %vm1642 = vcmp.eq.s32.totalorder %v264, %v1518
        %vm1643 = vcmp.eq.s32.totalorder %v264, %v1521
        %vm1644 = vcmp.eq.s32.totalorder %v264, %v1524
        %vm1645 = vcmp.eq.s32.totalorder %v264, %v1527
        %vm1646 = vcmp.eq.s32.totalorder %v264, %v1530
        %vm1647 = vcmp.eq.s32.totalorder %v264, %v1533
        %vm1648 = vcmp.eq.s32.totalorder %v264, %v1536
        %vm1649 = vcmp.eq.s32.totalorder %v264, %v1539
        %vm1650 = vcmp.eq.s32.totalorder %v264, %v1542
        %vm1651 = vcmp.eq.s32.totalorder %v264, %v1545
        %vm1652 = vcmp.eq.s32.totalorder %v264, %v1548
        %vm1653 = vcmp.eq.s32.totalorder %v264, %v1551
        %vm1654 = vcmp.eq.s32.totalorder %v264, %v1554
        %vm1655 = vcmp.eq.s32.totalorder %v264, %v1557
        %vm1656 = vcmp.eq.s32.totalorder %v264, %v1560
        %vm1657 = vcmp.eq.s32.totalorder %v264, %v1563
        %vm1658 = vcmp.eq.s32.totalorder %v264, %v1566
        %vm1659 = vcmp.eq.s32.totalorder %v264, %v1569
        %vm1660 = vcmp.eq.s32.totalorder %v264, %v1572
        %vm1661 = vcmp.eq.s32.totalorder %v264, %v1575
        %vm1662 = vcmp.eq.s32.totalorder %v264, %v1578
        %vm1663 = vcmp.eq.s32.totalorder %v264, %v1581
        %vm1664 = vcmp.eq.s32.totalorder %v264, %v1584
        %vm1665 = vcmp.eq.s32.totalorder %v264, %v1587
        %vm1666 = vcmp.eq.s32.totalorder %v264, %v1590
        %vm1667 = vcmp.eq.s32.totalorder %v264, %v1593
        %vm1668 = vcmp.eq.s32.totalorder %v264, %v1596
        %vm1669 = vcmp.eq.s32.totalorder %v264, %v1599
        %vm1670 = vcmp.eq.s32.totalorder %v264, %v1602
        %vm1671 = vcmp.eq.s32.totalorder %v264, %v1605
        %vm1672 = vcmp.eq.s32.totalorder %v264, %v1608
        %v1673 = vsel %vm1609, 1, 0
        %v1674 = vsel %vm1610, 1, 0
        %v1675 = vsel %vm1611, 1, 0
        %v1676 = vsel %vm1612, 1, 0
        %v1677 = vsel %vm1613, 1, 0
        %v1678 = vsel %vm1614, 1, 0
        %v1679 = vsel %vm1615, 1, 0
        %v1680 = vsel %vm1616, 1, 0
        %v1681 = vsel %vm1617, 1, 0
        %v1682 = vsel %vm1618, 1, 0
        %v1683 = vsel %vm1619, 1, 0
        %v1684 = vsel %vm1620, 1, 0
        %v1685 = vsel %vm1621, 1, 0
        %v1686 = vsel %vm1622, 1, 0
        %v1687 = vsel %vm1623, 1, 0
        %v1688 = vsel %vm1624, 1, 0
        %v1689 = vsel %vm1625, 1, 0
        %v1690 = vsel %vm1626, 1, 0
        %v1691 = vsel %vm1627, 1, 0
        %v1692 = vsel %vm1628, 1, 0
        %v1693 = vsel %vm1629, 1, 0
        %v1694 = vsel %vm1630, 1, 0
        %v1695 = vsel %vm1631, 1, 0
        %v1696 = vsel %vm1632, 1, 0
        %v1697 = vsel %vm1633, 1, 0
        %v1698 = vsel %vm1634, 1, 0
        %v1699 = vsel %vm1635, 1, 0
        %v1700 = vsel %vm1636, 1, 0
        %v1701 = vsel %vm1637, 1, 0
        %v1702 = vsel %vm1638, 1, 0
        %v1703 = vsel %vm1639, 1, 0
        %v1704 = vsel %vm1640, 1, 0
        %v1705 = vsel %vm1641, 1, 0
        %v1706 = vsel %vm1642, 1, 0
        %v1707 = vsel %vm1643, 1, 0
        %v1708 = vsel %vm1644, 1, 0
        %v1709 = vsel %vm1645, 1, 0
        %v1710 = vsel %vm1646, 1, 0
        %v1711 = vsel %vm1647, 1, 0
        %v1712 = vsel %vm1648, 1, 0
        %v1713 = vsel %vm1649, 1, 0
        %v1714 = vsel %vm1650, 1, 0
        %v1715 = vsel %vm1651, 1, 0
        %v1716 = vsel %vm1652, 1, 0
        %v1717 = vsel %vm1653, 1, 0
        %v1718 = vsel %vm1654, 1, 0
        %v1719 = vsel %vm1655, 1, 0
        %v1720 = vsel %vm1656, 1, 0
        %v1721 = vsel %vm1657, 1, 0
        %v1722 = vsel %vm1658, 1, 0
        %v1723 = vsel %vm1659, 1, 0
        %v1724 = vsel %vm1660, 1, 0
        %v1725 = vsel %vm1661, 1, 0
        %v1726 = vsel %vm1662, 1, 0
        %v1727 = vsel %vm1663, 1, 0
        %v1728 = vsel %vm1664, 1, 0
        %v1729 = vsel %vm1665, 1, 0
        %v1730 = vsel %vm1666, 1, 0
        %v1731 = vsel %vm1667, 1, 0
        %v1732 = vsel %vm1668, 1, 0
        %v1733 = vsel %vm1669, 1, 0
        %v1734 = vsel %vm1670, 1, 0
        %v1735 = vsel %vm1671, 1, 0
        %v1736 = vsel %vm1672, 1, 0
        %v1737 = vcvt.s32.f32 %v1673
        %v1738 = vcvt.s32.f32 %v1674
        %v1739 = vcvt.s32.f32 %v1675
        %v1740 = vcvt.s32.f32 %v1676
        %v1741 = vcvt.s32.f32 %v1677
        %v1742 = vcvt.s32.f32 %v1678
        %v1743 = vcvt.s32.f32 %v1679
        %v1744 = vcvt.s32.f32 %v1680
        %v1745 = vcvt.s32.f32 %v1681
        %v1746 = vcvt.s32.f32 %v1682
        %v1747 = vcvt.s32.f32 %v1683
        %v1748 = vcvt.s32.f32 %v1684
        %v1749 = vcvt.s32.f32 %v1685
        %v1750 = vcvt.s32.f32 %v1686
        %v1751 = vcvt.s32.f32 %v1687
        %v1752 = vcvt.s32.f32 %v1688
        %v1753 = vcvt.s32.f32 %v1689
        %v1754 = vcvt.s32.f32 %v1690
        %v1755 = vcvt.s32.f32 %v1691
        %v1756 = vcvt.s32.f32 %v1692
        %v1757 = vcvt.s32.f32 %v1693
        %v1758 = vcvt.s32.f32 %v1694
        %v1759 = vcvt.s32.f32 %v1695
        %v1760 = vcvt.s32.f32 %v1696
        %v1761 = vcvt.s32.f32 %v1697
        %v1762 = vcvt.s32.f32 %v1698
        %v1763 = vcvt.s32.f32 %v1699
        %v1764 = vcvt.s32.f32 %v1700
        %v1765 = vcvt.s32.f32 %v1701
        %v1766 = vcvt.s32.f32 %v1702
        %v1767 = vcvt.s32.f32 %v1703
        %v1768 = vcvt.s32.f32 %v1704
        %v1769 = vcvt.s32.f32 %v1705
        %v1770 = vcvt.s32.f32 %v1706
        %v1771 = vcvt.s32.f32 %v1707
        %v1772 = vcvt.s32.f32 %v1708
        %v1773 = vcvt.s32.f32 %v1709
        %v1774 = vcvt.s32.f32 %v1710
        %v1775 = vcvt.s32.f32 %v1711
        %v1776 = vcvt.s32.f32 %v1712
        %v1777 = vcvt.s32.f32 %v1713
        %v1778 = vcvt.s32.f32 %v1714
        %v1779 = vcvt.s32.f32 %v1715
        %v1780 = vcvt.s32.f32 %v1716
        %v1781 = vcvt.s32.f32 %v1717
        %v1782 = vcvt.s32.f32 %v1718
        %v1783 = vcvt.s32.f32 %v1719
        %v1784 = vcvt.s32.f32 %v1720
        %v1785 = vcvt.s32.f32 %v1721
        %v1786 = vcvt.s32.f32 %v1722
        %v1787 = vcvt.s32.f32 %v1723
        %v1788 = vcvt.s32.f32 %v1724
        %v1789 = vcvt.s32.f32 %v1725
        %v1790 = vcvt.s32.f32 %v1726
        %v1791 = vcvt.s32.f32 %v1727
        %v1792 = vcvt.s32.f32 %v1728
        %v1793 = vcvt.s32.f32 %v1729
        %v1794 = vcvt.s32.f32 %v1730
        %v1795 = vcvt.s32.f32 %v1731
        %v1796 = vcvt.s32.f32 %v1732
        %v1797 = vcvt.s32.f32 %v1733
        %v1798 = vcvt.s32.f32 %v1734
        %v1799 = vcvt.s32.f32 %v1735
        %v1800 = vcvt.s32.f32 %v1736
        %v1801 = vld [vmem:[%s1] sm:$0xff]
        %v1802 = vld [vmem:[%s1 + $0x8] sm:$0xff]
        %v1803 = vld [vmem:[%s1 + $0x10] sm:$0xff]
        %v1804 = vld [vmem:[%s1 + $0x18] sm:$0xff]
        %v1805 = vld [vmem:[%s1 + $0x20] sm:$0xff]
        %v1806 = vld [vmem:[%s1 + $0x28] sm:$0xff]
        %v1807 = vld [vmem:[%s1 + $0x30] sm:$0xff]
        %v1808 = vld [vmem:[%s1 + $0x38] sm:$0xff]
        %v1809 = vld [vmem:[%s1 + $0x40] sm:$0xff]
        %v1810 = vld [vmem:[%s1 + $0x48] sm:$0xff]
        %v1811 = vld [vmem:[%s1 + $0x50] sm:$0xff]
        %v1812 = vld [vmem:[%s1 + $0x58] sm:$0xff]
        %v1813 = vld [vmem:[%s1 + $0x60] sm:$0xff]
        %v1814 = vld [vmem:[%s1 + $0x68] sm:$0xff]
        %v1815 = vld [vmem:[%s1 + $0x70] sm:$0xff]
        %v1816 = vld [vmem:[%s1 + $0x78] sm:$0xff]
        %v1817 = vld [vmem:[%s1 + $0x80] sm:$0xff]
        %v1818 = vld [vmem:[%s1 + $0x88] sm:$0xff]
        %v1819 = vld [vmem:[%s1 + $0x90] sm:$0xff]
        %v1820 = vld [vmem:[%s1 + $0x98] sm:$0xff]
        %v1821 = vld [vmem:[%s1 + $0xa0] sm:$0xff]
        %v1822 = vld [vmem:[%s1 + $0xa8] sm:$0xff]
        %v1823 = vld [vmem:[%s1 + $0xb0] sm:$0xff]
        %v1824 = vld [vmem:[%s1 + $0xb8] sm:$0xff]
        %v1825 = vld [vmem:[%s1 + $0xc0] sm:$0xff]
        %v1826 = vld [vmem:[%s1 + $0xc8] sm:$0xff]
        %v1827 = vld [vmem:[%s1 + $0xd0] sm:$0xff]
        %v1828 = vld [vmem:[%s1 + $0xd8] sm:$0xff]
        %v1829 = vld [vmem:[%s1 + $0xe0] sm:$0xff]
        %v1830 = vld [vmem:[%s1 + $0xe8] sm:$0xff]
        %v1831 = vld [vmem:[%s1 + $0xf0] sm:$0xff]
        %v1832 = vld [vmem:[%s1 + $0xf8] sm:$0xff]
        %v1833 = vld [vmem:[%s1 + $0x100] sm:$0xff]
        %v1834 = vld [vmem:[%s1 + $0x108] sm:$0xff]
        %v1835 = vld [vmem:[%s1 + $0x110] sm:$0xff]
        %v1836 = vld [vmem:[%s1 + $0x118] sm:$0xff]
        %v1837 = vld [vmem:[%s1 + $0x120] sm:$0xff]
        %v1838 = vld [vmem:[%s1 + $0x128] sm:$0xff]
        %v1839 = vld [vmem:[%s1 + $0x130] sm:$0xff]
        %v1840 = vld [vmem:[%s1 + $0x138] sm:$0xff]
        %v1841 = vld [vmem:[%s1 + $0x140] sm:$0xff]
        %v1842 = vld [vmem:[%s1 + $0x148] sm:$0xff]
        %v1843 = vld [vmem:[%s1 + $0x150] sm:$0xff]
        %v1844 = vld [vmem:[%s1 + $0x158] sm:$0xff]
        %v1845 = vld [vmem:[%s1 + $0x160] sm:$0xff]
        %v1846 = vld [vmem:[%s1 + $0x168] sm:$0xff]
        %v1847 = vld [vmem:[%s1 + $0x170] sm:$0xff]
        %v1848 = vld [vmem:[%s1 + $0x178] sm:$0xff]
        %v1849 = vld [vmem:[%s1 + $0x180] sm:$0xff]
        %v1850 = vld [vmem:[%s1 + $0x188] sm:$0xff]
        %v1851 = vld [vmem:[%s1 + $0x190] sm:$0xff]
        %v1852 = vld [vmem:[%s1 + $0x198] sm:$0xff]
        %v1853 = vld [vmem:[%s1 + $0x1a0] sm:$0xff]
        %v1854 = vld [vmem:[%s1 + $0x1a8] sm:$0xff]
        %v1855 = vld [vmem:[%s1 + $0x1b0] sm:$0xff]
        %v1856 = vld [vmem:[%s1 + $0x1b8] sm:$0xff]
        %v1857 = vld [vmem:[%s1 + $0x1c0] sm:$0xff]
        %v1858 = vld [vmem:[%s1 + $0x1c8] sm:$0xff]
        %v1859 = vld [vmem:[%s1 + $0x1d0] sm:$0xff]
        %v1860 = vld [vmem:[%s1 + $0x1d8] sm:$0xff]
        %v1861 = vld [vmem:[%s1 + $0x1e0] sm:$0xff]
        %v1862 = vld [vmem:[%s1 + $0x1e8] sm:$0xff]
        %v1863 = vld [vmem:[%s1 + $0x1f0] sm:$0xff]
        %v1864 = vld [vmem:[%s1 + $0x1f8] sm:$0xff]
        %v1865 = vld [vmem:[%s3] sm:$0x1]
        %v1866 = vlaneseq
        %v1867 = vshrl.u32 %v1866, 7
        %v1868 = vsub.s32 0, %v1867
        %v1869 = vrot.slane %v1865, %v1868
        %1870 = vmatprep.subr.mxu0 0.0
        %1871 = vmatpush1.msra.mxu0 %v1801
        %1872 = vmatprep.subr.mxu0 0.0
        %1873 = vmatpush1.msra.mxu0 %v1802
        %1874 = vmatprep.subr.mxu0 0.0
        %1875 = vmatpush1.msra.mxu0 %v1803
        %1876 = vmatprep.subr.mxu0 0.0
        %1877 = vmatpush1.msra.mxu0 %v1804
        %1878 = vmatprep.subr.mxu0 0.0
        %1879 = vmatpush1.msra.mxu0 %v1805
        %1880 = vmatprep.subr.mxu0 0.0
        %1881 = vmatpush1.msra.mxu0 %v1806
        %1882 = vmatprep.subr.mxu0 0.0
        %1883 = vmatpush1.msra.mxu0 %v1807
        %1884 = vmatprep.subr.mxu0 0.0
        %1885 = vmatpush1.msra.mxu0 %v1808
        %1886 = vmatprep.subr.mxu0 0.0
        %1887 = vmatpush1.msra.mxu0 %v1809
        %1888 = vmatprep.subr.mxu0 0.0
        %1889 = vmatpush1.msra.mxu0 %v1810
        %1890 = vmatprep.subr.mxu0 0.0
        %1891 = vmatpush1.msra.mxu0 %v1811
        %1892 = vmatprep.subr.mxu0 0.0
        %1893 = vmatpush1.msra.mxu0 %v1812
        %1894 = vmatprep.subr.mxu0 0.0
        %1895 = vmatpush1.msra.mxu0 %v1813
        %1896 = vmatprep.subr.mxu0 0.0
        %1897 = vmatpush1.msra.mxu0 %v1814
        %1898 = vmatprep.subr.mxu0 0.0
        %1899 = vmatpush1.msra.mxu0 %v1815
        %1900 = vmatprep.subr.mxu0 0.0
        %1901 = vmatpush1.msra.mxu0 %v1816
        %1902 = vmatprep.subr.mxu0 0.0
        %1903 = vmatpush1.msra.mxu0 %v1817
        %1904 = vmatprep.subr.mxu0 0.0
        %1905 = vmatpush1.msra.mxu0 %v1818
        %1906 = vmatprep.subr.mxu0 0.0
        %1907 = vmatpush1.msra.mxu0 %v1819
        %1908 = vmatprep.subr.mxu0 0.0
        %1909 = vmatpush1.msra.mxu0 %v1820
        %1910 = vmatprep.subr.mxu0 0.0
        %1911 = vmatpush1.msra.mxu0 %v1821
        %1912 = vmatprep.subr.mxu0 0.0
        %1913 = vmatpush1.msra.mxu0 %v1822
        %1914 = vmatprep.subr.mxu0 0.0
        %1915 = vmatpush1.msra.mxu0 %v1823
        %1916 = vmatprep.subr.mxu0 0.0
        %1917 = vmatpush1.msra.mxu0 %v1824
        %1918 = vmatprep.subr.mxu0 0.0
        %1919 = vmatpush1.msra.mxu0 %v1825
        %1920 = vmatprep.subr.mxu0 0.0
        %1921 = vmatpush1.msra.mxu0 %v1826
        %1922 = vmatprep.subr.mxu0 0.0
        %1923 = vmatpush1.msra.mxu0 %v1827
        %1924 = vmatprep.subr.mxu0 0.0
        %1925 = vmatpush1.msra.mxu0 %v1828
        %1926 = vmatprep.subr.mxu0 0.0
        %1927 = vmatpush1.msra.mxu0 %v1829
        %1928 = vmatprep.subr.mxu0 0.0
        %1929 = vmatpush1.msra.mxu0 %v1830
        %1930 = vmatprep.subr.mxu0 0.0
        %1931 = vmatpush1.msra.mxu0 %v1831
        %1932 = vmatprep.subr.mxu0 0.0
        %1933 = vmatpush1.msra.mxu0 %v1832
        %1934 = vmatprep.mubr.f32.mxu0 %v969
        %1935 = vmatmul.mubr.f32.gmra.mrb[0].mxu0 %v585
        %v1936 = vpop.f32.mrb[0].mxu0
        %v1937 = vadd.f32 %v1869, %v1936
        %v1938 = vpop.f32.mrb[0].mxu0
        %1939 = vmatprep.mubr.f32.mxu0 %v970
        %1940 = vmatmul.mubr.f32.gmra.mrb[0].mxu0 %v586
        %v1941 = vpop.f32.mrb[0].mxu0
        %v1942 = vadd.f32 %v1869, %v1941
        %v1943 = vpop.f32.mrb[0].mxu0
        %1944 = vmatprep.mubr.f32.mxu0 %v971
        %1945 = vmatmul.mubr.f32.gmra.mrb[0].mxu0 %v587
        %v1946 = vpop.f32.mrb[0].mxu0
        %v1947 = vadd.f32 %v1869, %v1946
        %v1948 = vpop.f32.mrb[0].mxu0
        %1949 = vmatprep.mubr.f32.mxu0 %v972
        %1950 = vmatmul.mubr.f32.gmra.mrb[0].mxu0 %v588
        %v1951 = vpop.f32.mrb[0].mxu0
        %v1952 = vadd.f32 %v1869, %v1951
        %v1953 = vpop.f32.mrb[0].mxu0
        %1954 = vmatprep.mubr.f32.mxu0 %v973
        %1955 = vmatmul.mubr.f32.gmra.mrb[0].mxu0 %v589
        %v1956 = vpop.f32.mrb[0].mxu0
        %v1957 = vadd.f32 %v1869, %v1956
        %v1958 = vpop.f32.mrb[0].mxu0
        %1959 = vmatprep.mubr.f32.mxu0 %v974
        %1960 = vmatmul.mubr.f32.gmra.mrb[0].mxu0 %v590
        %v1961 = vpop.f32.mrb[0].mxu0
        %v1962 = vadd.f32 %v1869, %v1961
        %v1963 = vpop.f32.mrb[0].mxu0
        %1964 = vmatprep.mubr.f32.mxu0 %v975
        %1965 = vmatmul.mubr.f32.gmra.mrb[0].mxu0 %v591
        %v1966 = vpop.f32.mrb[0].mxu0
        %v1967 = vadd.f32 %v1869, %v1966
        %v1968 = vpop.f32.mrb[0].mxu0
        %1969 = vmatprep.mubr.f32.mxu0 %v976
        %1970 = vmatmul.mubr.f32.gmra.mrb[0].mxu0 %v592
        %v1971 = vpop.f32.mrb[0].mxu0
        %v1972 = vadd.f32 %v1869, %v1971
        %v1973 = vpop.f32.mrb[0].mxu0
        %1974 = vmatprep.mubr.f32.mxu0 %v977
        %1975 = vmatmul.mubr.f32.gmra.mrb[0].mxu0 %v593
        %v1976 = vpop.f32.mrb[0].mxu0
        %v1977 = vadd.f32 %v1869, %v1976
        %v1978 = vpop.f32.mrb[0].mxu0
        %1979 = vmatprep.mubr.f32.mxu0 %v978
        %1980 = vmatmul.mubr.f32.gmra.mrb[0].mxu0 %v594
        %v1981 = vpop.f32.mrb[0].mxu0
        %v1982 = vadd.f32 %v1869, %v1981
        %v1983 = vpop.f32.mrb[0].mxu0
        %1984 = vmatprep.mubr.f32.mxu0 %v979
        %1985 = vmatmul.mubr.f32.gmra.mrb[0].mxu0 %v595
        %v1986 = vpop.f32.mrb[0].mxu0
        %v1987 = vadd.f32 %v1869, %v1986
        %v1988 = vpop.f32.mrb[0].mxu0
        %1989 = vmatprep.mubr.f32.mxu0 %v980
        %1990 = vmatmul.mubr.f32.gmra.mrb[0].mxu0 %v596
        %v1991 = vpop.f32.mrb[0].mxu0
        %v1992 = vadd.f32 %v1869, %v1991
        %v1993 = vpop.f32.mrb[0].mxu0
        %1994 = vmatprep.mubr.f32.mxu0 %v981
        %1995 = vmatmul.mubr.f32.gmra.mrb[0].mxu0 %v597
        %v1996 = vpop.f32.mrb[0].mxu0
        %v1997 = vadd.f32 %v1869, %v1996
        %v1998 = vpop.f32.mrb[0].mxu0
        %1999 = vmatprep.mubr.f32.mxu0 %v982
        %2000 = vmatmul.mubr.f32.gmra.mrb[0].mxu0 %v598
        %v2001 = vpop.f32.mrb[0].mxu0
        %v2002 = vadd.f32 %v1869, %v2001
        %v2003 = vpop.f32.mrb[0].mxu0
        %2004 = vmatprep.mubr.f32.mxu0 %v983
        %2005 = vmatmul.mubr.f32.gmra.mrb[0].mxu0 %v599
        %v2006 = vpop.f32.mrb[0].mxu0
        %v2007 = vadd.f32 %v1869, %v2006
        %v2008 = vpop.f32.mrb[0].mxu0
        %2009 = vmatprep.mubr.f32.mxu0 %v984
        %2010 = vmatmul.mubr.f32.gmra.mrb[0].mxu0 %v600
        %v2011 = vpop.f32.mrb[0].mxu0
        %v2012 = vadd.f32 %v1869, %v2011
        %v2013 = vpop.f32.mrb[0].mxu0
        %2014 = vmatprep.mubr.f32.mxu0 %v985
        %2015 = vmatmul.mubr.f32.gmra.mrb[0].mxu0 %v601
        %v2016 = vpop.f32.mrb[0].mxu0
        %v2017 = vadd.f32 %v1869, %v2016
        %v2018 = vpop.f32.mrb[0].mxu0
        %2019 = vmatprep.mubr.f32.mxu0 %v986
        %2020 = vmatmul.mubr.f32.gmra.mrb[0].mxu0 %v602
        %v2021 = vpop.f32.mrb[0].mxu0
        %v2022 = vadd.f32 %v1869, %v2021
        %v2023 = vpop.f32.mrb[0].mxu0
        %2024 = vmatprep.mubr.f32.mxu0 %v987
        %2025 = vmatmul.mubr.f32.gmra.mrb[0].mxu0 %v603
        %v2026 = vpop.f32.mrb[0].mxu0
        %v2027 = vadd.f32 %v1869, %v2026
        %v2028 = vpop.f32.mrb[0].mxu0
        %2029 = vmatprep.mubr.f32.mxu0 %v988
        %2030 = vmatmul.mubr.f32.gmra.mrb[0].mxu0 %v604
        %v2031 = vpop.f32.mrb[0].mxu0
        %v2032 = vadd.f32 %v1869, %v2031
        %v2033 = vpop.f32.mrb[0].mxu0
        %2034 = vmatprep.mubr.f32.mxu0 %v989
        %2035 = vmatmul.mubr.f32.gmra.mrb[0].mxu0 %v605
        %v2036 = vpop.f32.mrb[0].mxu0
        %v2037 = vadd.f32 %v1869, %v2036
        %v2038 = vpop.f32.mrb[0].mxu0
        %2039 = vmatprep.mubr.f32.mxu0 %v990
        %2040 = vmatmul.mubr.f32.gmra.mrb[0].mxu0 %v606
        %v2041 = vpop.f32.mrb[0].mxu0
        %v2042 = vadd.f32 %v1869, %v2041
        %v2043 = vpop.f32.mrb[0].mxu0
        %2044 = vmatprep.mubr.f32.mxu0 %v991
        %2045 = vmatmul.mubr.f32.gmra.mrb[0].mxu0 %v607
        %v2046 = vpop.f32.mrb[0].mxu0
        %v2047 = vadd.f32 %v1869, %v2046
        %v2048 = vpop.f32.mrb[0].mxu0
        %2049 = vmatprep.mubr.f32.mxu0 %v992
        %2050 = vmatmul.mubr.f32.gmra.mrb[0].mxu0 %v608
        %v2051 = vpop.f32.mrb[0].mxu0
        %v2052 = vadd.f32 %v1869, %v2051
        %v2053 = vpop.f32.mrb[0].mxu0
        %2054 = vmatprep.mubr.f32.mxu0 %v993
        %2055 = vmatmul.mubr.f32.gmra.mrb[0].mxu0 %v609
        %v2056 = vpop.f32.mrb[0].mxu0
        %v2057 = vadd.f32 %v1869, %v2056
        %v2058 = vpop.f32.mrb[0].mxu0
        %2059 = vmatprep.mubr.f32.mxu0 %v994
        %2060 = vmatmul.mubr.f32.gmra.mrb[0].mxu0 %v610
        %v2061 = vpop.f32.mrb[0].mxu0
        %v2062 = vadd.f32 %v1869, %v2061
        %v2063 = vpop.f32.mrb[0].mxu0
        %2064 = vmatprep.mubr.f32.mxu0 %v995
        %2065 = vmatmul.mubr.f32.gmra.mrb[0].mxu0 %v611
        %v2066 = vpop.f32.mrb[0].mxu0
        %v2067 = vadd.f32 %v1869, %v2066
        %v2068 = vpop.f32.mrb[0].mxu0
        %2069 = vmatprep.mubr.f32.mxu0 %v996
        %2070 = vmatmul.mubr.f32.gmra.mrb[0].mxu0 %v612
        %v2071 = vpop.f32.mrb[0].mxu0
        %v2072 = vadd.f32 %v1869, %v2071
        %v2073 = vpop.f32.mrb[0].mxu0
        %2074 = vmatprep.mubr.f32.mxu0 %v997
        %2075 = vmatmul.mubr.f32.gmra.mrb[0].mxu0 %v613
        %v2076 = vpop.f32.mrb[0].mxu0
        %v2077 = vadd.f32 %v1869, %v2076
        %v2078 = vpop.f32.mrb[0].mxu0
        %2079 = vmatprep.mubr.f32.mxu0 %v998
        %2080 = vmatmul.mubr.f32.gmra.mrb[0].mxu0 %v614
        %v2081 = vpop.f32.mrb[0].mxu0
        %v2082 = vadd.f32 %v1869, %v2081
        %v2083 = vpop.f32.mrb[0].mxu0
        %2084 = vmatprep.mubr.f32.mxu0 %v999
        %2085 = vmatmul.mubr.f32.gmra.mrb[0].mxu0 %v615
        %v2086 = vpop.f32.mrb[0].mxu0
        %v2087 = vadd.f32 %v1869, %v2086
        %v2088 = vpop.f32.mrb[0].mxu0
        %2089 = vmatprep.mubr.f32.mxu0 %v1000
        %2090 = vmatmul.mubr.f32.gmra.mrb[0].mxu0 %v616
        %v2091 = vpop.f32.mrb[0].mxu0
        %v2092 = vadd.f32 %v1869, %v2091
        %v2093 = vpop.f32.mrb[0].mxu0
        %2094 = vmatprep.mubr.f32.mxu0 %v1001
        %2095 = vmatmul.mubr.f32.gmra.mrb[0].mxu0 %v617
        %v2096 = vpop.f32.mrb[0].mxu0
        %v2097 = vadd.f32 %v1869, %v2096
        %v2098 = vpop.f32.mrb[0].mxu0
        %2099 = vmatprep.mubr.f32.mxu0 %v1002
        %2100 = vmatmul.mubr.f32.gmra.mrb[0].mxu0 %v618
        %v2101 = vpop.f32.mrb[0].mxu0
        %v2102 = vadd.f32 %v1869, %v2101
        %v2103 = vpop.f32.mrb[0].mxu0
        %2104 = vmatprep.mubr.f32.mxu0 %v1003
        %2105 = vmatmul.mubr.f32.gmra.mrb[0].mxu0 %v619
        %v2106 = vpop.f32.mrb[0].mxu0
        %v2107 = vadd.f32 %v1869, %v2106
        %v2108 = vpop.f32.mrb[0].mxu0
        %2109 = vmatprep.mubr.f32.mxu0 %v1004
        %2110 = vmatmul.mubr.f32.gmra.mrb[0].mxu0 %v620
        %v2111 = vpop.f32.mrb[0].mxu0
        %v2112 = vadd.f32 %v1869, %v2111
        %v2113 = vpop.f32.mrb[0].mxu0
        %2114 = vmatprep.mubr.f32.mxu0 %v1005
        %2115 = vmatmul.mubr.f32.gmra.mrb[0].mxu0 %v621
        %v2116 = vpop.f32.mrb[0].mxu0
        %v2117 = vadd.f32 %v1869, %v2116
        %v2118 = vpop.f32.mrb[0].mxu0
        %2119 = vmatprep.mubr.f32.mxu0 %v1006
        %2120 = vmatmul.mubr.f32.gmra.mrb[0].mxu0 %v622
        %v2121 = vpop.f32.mrb[0].mxu0
        %v2122 = vadd.f32 %v1869, %v2121
        %v2123 = vpop.f32.mrb[0].mxu0
        %2124 = vmatprep.mubr.f32.mxu0 %v1007
        %2125 = vmatmul.mubr.f32.gmra.mrb[0].mxu0 %v623
        %v2126 = vpop.f32.mrb[0].mxu0
        %v2127 = vadd.f32 %v1869, %v2126
        %v2128 = vpop.f32.mrb[0].mxu0
        %2129 = vmatprep.mubr.f32.mxu0 %v1008
        %2130 = vmatmul.mubr.f32.gmra.mrb[0].mxu0 %v624
        %v2131 = vpop.f32.mrb[0].mxu0
        %v2132 = vadd.f32 %v1869, %v2131
        %v2133 = vpop.f32.mrb[0].mxu0
        %2134 = vmatprep.mubr.f32.mxu0 %v1009
        %2135 = vmatmul.mubr.f32.gmra.mrb[0].mxu0 %v625
        %v2136 = vpop.f32.mrb[0].mxu0
        %v2137 = vadd.f32 %v1869, %v2136
        %v2138 = vpop.f32.mrb[0].mxu0
        %2139 = vmatprep.mubr.f32.mxu0 %v1010
        %2140 = vmatmul.mubr.f32.gmra.mrb[0].mxu0 %v626
        %v2141 = vpop.f32.mrb[0].mxu0
        %v2142 = vadd.f32 %v1869, %v2141
        %v2143 = vpop.f32.mrb[0].mxu0
        %2144 = vmatprep.mubr.f32.mxu0 %v1011
        %2145 = vmatmul.mubr.f32.gmra.mrb[0].mxu0 %v627
        %v2146 = vpop.f32.mrb[0].mxu0
        %v2147 = vadd.f32 %v1869, %v2146
        %v2148 = vpop.f32.mrb[0].mxu0
        %2149 = vmatprep.mubr.f32.mxu0 %v1012
        %2150 = vmatmul.mubr.f32.gmra.mrb[0].mxu0 %v628
        %v2151 = vpop.f32.mrb[0].mxu0
        %v2152 = vadd.f32 %v1869, %v2151
        %v2153 = vpop.f32.mrb[0].mxu0
        %2154 = vmatprep.mubr.f32.mxu0 %v1013
        %2155 = vmatmul.mubr.f32.gmra.mrb[0].mxu0 %v629
        %v2156 = vpop.f32.mrb[0].mxu0
        %v2157 = vadd.f32 %v1869, %v2156
        %v2158 = vpop.f32.mrb[0].mxu0
        %2159 = vmatprep.mubr.f32.mxu0 %v1014
        %2160 = vmatmul.mubr.f32.gmra.mrb[0].mxu0 %v630
        %v2161 = vpop.f32.mrb[0].mxu0
        %v2162 = vadd.f32 %v1869, %v2161
        %v2163 = vpop.f32.mrb[0].mxu0
        %2164 = vmatprep.mubr.f32.mxu0 %v1015
        %2165 = vmatmul.mubr.f32.gmra.mrb[0].mxu0 %v631
        %v2166 = vpop.f32.mrb[0].mxu0
        %v2167 = vadd.f32 %v1869, %v2166
        %v2168 = vpop.f32.mrb[0].mxu0
        %2169 = vmatprep.mubr.f32.mxu0 %v1016
        %2170 = vmatmul.mubr.f32.gmra.mrb[0].mxu0 %v632
        %v2171 = vpop.f32.mrb[0].mxu0
        %v2172 = vadd.f32 %v1869, %v2171
        %v2173 = vpop.f32.mrb[0].mxu0
        %2174 = vmatprep.mubr.f32.mxu0 %v1017
        %2175 = vmatmul.mubr.f32.gmra.mrb[0].mxu0 %v633
        %v2176 = vpop.f32.mrb[0].mxu0
        %v2177 = vadd.f32 %v1869, %v2176
        %v2178 = vpop.f32.mrb[0].mxu0
        %2179 = vmatprep.mubr.f32.mxu0 %v1018
        %2180 = vmatmul.mubr.f32.gmra.mrb[0].mxu0 %v634
        %v2181 = vpop.f32.mrb[0].mxu0
        %v2182 = vadd.f32 %v1869, %v2181
        %v2183 = vpop.f32.mrb[0].mxu0
        %2184 = vmatprep.mubr.f32.mxu0 %v1019
        %2185 = vmatmul.mubr.f32.gmra.mrb[0].mxu0 %v635
        %v2186 = vpop.f32.mrb[0].mxu0
        %v2187 = vadd.f32 %v1869, %v2186
        %v2188 = vpop.f32.mrb[0].mxu0
        %2189 = vmatprep.mubr.f32.mxu0 %v1020
        %2190 = vmatmul.mubr.f32.gmra.mrb[0].mxu0 %v636
        %v2191 = vpop.f32.mrb[0].mxu0
        %v2192 = vadd.f32 %v1869, %v2191
        %v2193 = vpop.f32.mrb[0].mxu0
        %2194 = vmatprep.mubr.f32.mxu0 %v1021
        %2195 = vmatmul.mubr.f32.gmra.mrb[0].mxu0 %v637
        %v2196 = vpop.f32.mrb[0].mxu0
        %v2197 = vadd.f32 %v1869, %v2196
        %v2198 = vpop.f32.mrb[0].mxu0
        %2199 = vmatprep.mubr.f32.mxu0 %v1022
        %2200 = vmatmul.mubr.f32.gmra.mrb[0].mxu0 %v638
        %v2201 = vpop.f32.mrb[0].mxu0
        %v2202 = vadd.f32 %v1869, %v2201
        %v2203 = vpop.f32.mrb[0].mxu0
        %2204 = vmatprep.mubr.f32.mxu0 %v1023
        %2205 = vmatmul.mubr.f32.gmra.mrb[0].mxu0 %v639
        %v2206 = vpop.f32.mrb[0].mxu0
        %v2207 = vadd.f32 %v1869, %v2206
        %v2208 = vpop.f32.mrb[0].mxu0
        %2209 = vmatprep.mubr.f32.mxu0 %v1024
        %2210 = vmatmul.mubr.f32.gmra.mrb[0].mxu0 %v640
        %v2211 = vpop.f32.mrb[0].mxu0
        %v2212 = vadd.f32 %v1869, %v2211
        %v2213 = vpop.f32.mrb[0].mxu0
        %2214 = vmatprep.mubr.f32.mxu0 %v1025
        %2215 = vmatmul.mubr.f32.gmra.mrb[0].mxu0 %v641
        %v2216 = vpop.f32.mrb[0].mxu0
        %v2217 = vadd.f32 %v1869, %v2216
        %v2218 = vpop.f32.mrb[0].mxu0
        %2219 = vmatprep.mubr.f32.mxu0 %v1026
        %2220 = vmatmul.mubr.f32.gmra.mrb[0].mxu0 %v642
        %v2221 = vpop.f32.mrb[0].mxu0
        %v2222 = vadd.f32 %v1869, %v2221
        %v2223 = vpop.f32.mrb[0].mxu0
        %2224 = vmatprep.mubr.f32.mxu0 %v1027
        %2225 = vmatmul.mubr.f32.gmra.mrb[0].mxu0 %v643
        %v2226 = vpop.f32.mrb[0].mxu0
        %v2227 = vadd.f32 %v1869, %v2226
        %v2228 = vpop.f32.mrb[0].mxu0
        %2229 = vmatprep.mubr.f32.mxu0 %v1028
        %2230 = vmatmul.mubr.f32.gmra.mrb[0].mxu0 %v644
        %v2231 = vpop.f32.mrb[0].mxu0
        %v2232 = vadd.f32 %v1869, %v2231
        %v2233 = vpop.f32.mrb[0].mxu0
        %2234 = vmatprep.mubr.f32.mxu0 %v1029
        %2235 = vmatmul.mubr.f32.gmra.mrb[0].mxu0 %v645
        %v2236 = vpop.f32.mrb[0].mxu0
        %v2237 = vadd.f32 %v1869, %v2236
        %v2238 = vpop.f32.mrb[0].mxu0
        %2239 = vmatprep.mubr.f32.mxu0 %v1030
        %2240 = vmatmul.mubr.f32.gmra.mrb[0].mxu0 %v646
        %v2241 = vpop.f32.mrb[0].mxu0
        %v2242 = vadd.f32 %v1869, %v2241
        %v2243 = vpop.f32.mrb[0].mxu0
        %2244 = vmatprep.mubr.f32.mxu0 %v1031
        %2245 = vmatmul.mubr.f32.gmra.mrb[0].mxu0 %v647
        %v2246 = vpop.f32.mrb[0].mxu0
        %v2247 = vadd.f32 %v1869, %v2246
        %v2248 = vpop.f32.mrb[0].mxu0
        %2249 = vmatprep.mubr.f32.mxu0 %v1032
        %2250 = vmatmul.mubr.f32.gmra.mrb[0].mxu0 %v648
        %v2251 = vpop.f32.mrb[0].mxu0
        %v2252 = vadd.f32 %v1869, %v2251
        %v2253 = vpop.f32.mrb[0].mxu0
        %2254 = vdwg.mxu0
        %2255 = vmatprep.subr.mxu0 0.0
        %2256 = vmatpush1.msra.mxu0 %v1833
        %2257 = vmatprep.subr.mxu0 0.0
        %2258 = vmatpush1.msra.mxu0 %v1834
        %2259 = vmatprep.subr.mxu0 0.0
        %2260 = vmatpush1.msra.mxu0 %v1835
        %2261 = vmatprep.subr.mxu0 0.0
        %2262 = vmatpush1.msra.mxu0 %v1836
        %2263 = vmatprep.subr.mxu0 0.0
        %2264 = vmatpush1.msra.mxu0 %v1837
        %2265 = vmatprep.subr.mxu0 0.0
        %2266 = vmatpush1.msra.mxu0 %v1838
        %2267 = vmatprep.subr.mxu0 0.0
        %2268 = vmatpush1.msra.mxu0 %v1839
        %2269 = vmatprep.subr.mxu0 0.0
        %2270 = vmatpush1.msra.mxu0 %v1840
        %2271 = vmatprep.subr.mxu0 0.0
        %2272 = vmatpush1.msra.mxu0 %v1841
        %2273 = vmatprep.subr.mxu0 0.0
        %2274 = vmatpush1.msra.mxu0 %v1842
        %2275 = vmatprep.subr.mxu0 0.0
        %2276 = vmatpush1.msra.mxu0 %v1843
        %2277 = vmatprep.subr.mxu0 0.0
        %2278 = vmatpush1.msra.mxu0 %v1844
        %2279 = vmatprep.subr.mxu0 0.0
        %2280 = vmatpush1.msra.mxu0 %v1845
        %2281 = vmatprep.subr.mxu0 0.0
        %2282 = vmatpush1.msra.mxu0 %v1846
        %2283 = vmatprep.subr.mxu0 0.0
        %2284 = vmatpush1.msra.mxu0 %v1847
        %2285 = vmatprep.subr.mxu0 0.0
        %2286 = vmatpush1.msra.mxu0 %v1848
        %2287 = vmatprep.subr.mxu0 0.0
        %2288 = vmatpush1.msra.mxu0 %v1849
        %2289 = vmatprep.subr.mxu0 0.0
        %2290 = vmatpush1.msra.mxu0 %v1850
        %2291 = vmatprep.subr.mxu0 0.0
        %2292 = vmatpush1.msra.mxu0 %v1851
        %2293 = vmatprep.subr.mxu0 0.0
        %2294 = vmatpush1.msra.mxu0 %v1852
        %2295 = vmatprep.subr.mxu0 0.0
        %2296 = vmatpush1.msra.mxu0 %v1853
        %2297 = vmatprep.subr.mxu0 0.0
        %2298 = vmatpush1.msra.mxu0 %v1854
        %2299 = vmatprep.subr.mxu0 0.0
        %2300 = vmatpush1.msra.mxu0 %v1855
        %2301 = vmatprep.subr.mxu0 0.0
        %2302 = vmatpush1.msra.mxu0 %v1856
        %2303 = vmatprep.subr.mxu0 0.0
        %2304 = vmatpush1.msra.mxu0 %v1857
        %2305 = vmatprep.subr.mxu0 0.0
        %2306 = vmatpush1.msra.mxu0 %v1858
        %2307 = vmatprep.subr.mxu0 0.0
        %2308 = vmatpush1.msra.mxu0 %v1859
        %2309 = vmatprep.subr.mxu0 0.0
        %2310 = vmatpush1.msra.mxu0 %v1860
        %2311 = vmatprep.subr.mxu0 0.0
        %2312 = vmatpush1.msra.mxu0 %v1861
        %2313 = vmatprep.subr.mxu0 0.0
        %2314 = vmatpush1.msra.mxu0 %v1862
        %2315 = vmatprep.subr.mxu0 0.0
        %2316 = vmatpush1.msra.mxu0 %v1863
        %2317 = vmatprep.subr.mxu0 0.0
        %2318 = vmatpush1.msra.mxu0 %v1864
        %2319 = vmatprep.mubr.f32.mxu0 %v1737
        %2320 = vmatmul.mubr.f32.gmra.mrb[0].mxu0 %v1353
        %v2321 = vpop.f32.mrb[0].mxu0
        %v2322 = vadd.f32 %v1937, %v2321
        %v2323 = vpop.f32.mrb[0].mxu0
        %2324 = vmatprep.mubr.f32.mxu0 %v1738
        %2325 = vmatmul.mubr.f32.gmra.mrb[0].mxu0 %v1354
        %v2326 = vpop.f32.mrb[0].mxu0
        %v2327 = vadd.f32 %v1942, %v2326
        %v2328 = vpop.f32.mrb[0].mxu0
        %2329 = vmatprep.mubr.f32.mxu0 %v1739
        %2330 = vmatmul.mubr.f32.gmra.mrb[0].mxu0 %v1355
        %v2331 = vpop.f32.mrb[0].mxu0
        %v2332 = vadd.f32 %v1947, %v2331
        %v2333 = vpop.f32.mrb[0].mxu0
        %2334 = vmatprep.mubr.f32.mxu0 %v1740
        %2335 = vmatmul.mubr.f32.gmra.mrb[0].mxu0 %v1356
        %v2336 = vpop.f32.mrb[0].mxu0
        %v2337 = vadd.f32 %v1952, %v2336
        %v2338 = vpop.f32.mrb[0].mxu0
        %2339 = vmatprep.mubr.f32.mxu0 %v1741
        %2340 = vmatmul.mubr.f32.gmra.mrb[0].mxu0 %v1357
        %v2341 = vpop.f32.mrb[0].mxu0
        %v2342 = vadd.f32 %v1957, %v2341
        %v2343 = vpop.f32.mrb[0].mxu0
        %2344 = vmatprep.mubr.f32.mxu0 %v1742
        %2345 = vmatmul.mubr.f32.gmra.mrb[0].mxu0 %v1358
        %v2346 = vpop.f32.mrb[0].mxu0
        %v2347 = vadd.f32 %v1962, %v2346
        %v2348 = vpop.f32.mrb[0].mxu0
        %2349 = vmatprep.mubr.f32.mxu0 %v1743
        %2350 = vmatmul.mubr.f32.gmra.mrb[0].mxu0 %v1359
        %v2351 = vpop.f32.mrb[0].mxu0
        %v2352 = vadd.f32 %v1967, %v2351
        %v2353 = vpop.f32.mrb[0].mxu0
        %2354 = vmatprep.mubr.f32.mxu0 %v1744
        %2355 = vmatmul.mubr.f32.gmra.mrb[0].mxu0 %v1360
        %v2356 = vpop.f32.mrb[0].mxu0
        %v2357 = vadd.f32 %v1972, %v2356
        %v2358 = vpop.f32.mrb[0].mxu0
        %2359 = vmatprep.mubr.f32.mxu0 %v1745
        %2360 = vmatmul.mubr.f32.gmra.mrb[0].mxu0 %v1361
        %v2361 = vpop.f32.mrb[0].mxu0
        %v2362 = vadd.f32 %v1977, %v2361
        %v2363 = vpop.f32.mrb[0].mxu0
        %2364 = vmatprep.mubr.f32.mxu0 %v1746
        %2365 = vmatmul.mubr.f32.gmra.mrb[0].mxu0 %v1362
        %v2366 = vpop.f32.mrb[0].mxu0
        %v2367 = vadd.f32 %v1982, %v2366
        %v2368 = vpop.f32.mrb[0].mxu0
        %2369 = vmatprep.mubr.f32.mxu0 %v1747
        %2370 = vmatmul.mubr.f32.gmra.mrb[0].mxu0 %v1363
        %v2371 = vpop.f32.mrb[0].mxu0
        %v2372 = vadd.f32 %v1987, %v2371
        %v2373 = vpop.f32.mrb[0].mxu0
        %2374 = vmatprep.mubr.f32.mxu0 %v1748
        %2375 = vmatmul.mubr.f32.gmra.mrb[0].mxu0 %v1364
        %v2376 = vpop.f32.mrb[0].mxu0
        %v2377 = vadd.f32 %v1992, %v2376
        %v2378 = vpop.f32.mrb[0].mxu0
        %2379 = vmatprep.mubr.f32.mxu0 %v1749
        %2380 = vmatmul.mubr.f32.gmra.mrb[0].mxu0 %v1365
        %v2381 = vpop.f32.mrb[0].mxu0
        %v2382 = vadd.f32 %v1997, %v2381
        %v2383 = vpop.f32.mrb[0].mxu0
        %2384 = vmatprep.mubr.f32.mxu0 %v1750
        %2385 = vmatmul.mubr.f32.gmra.mrb[0].mxu0 %v1366
        %v2386 = vpop.f32.mrb[0].mxu0
        %v2387 = vadd.f32 %v2002, %v2386
        %v2388 = vpop.f32.mrb[0].mxu0
        %2389 = vmatprep.mubr.f32.mxu0 %v1751
        %2390 = vmatmul.mubr.f32.gmra.mrb[0].mxu0 %v1367
        %v2391 = vpop.f32.mrb[0].mxu0
        %v2392 = vadd.f32 %v2007, %v2391
        %v2393 = vpop.f32.mrb[0].mxu0
        %2394 = vmatprep.mubr.f32.mxu0 %v1752
        %2395 = vmatmul.mubr.f32.gmra.mrb[0].mxu0 %v1368
        %v2396 = vpop.f32.mrb[0].mxu0
        %v2397 = vadd.f32 %v2012, %v2396
        %v2398 = vpop.f32.mrb[0].mxu0
        %2399 = vmatprep.mubr.f32.mxu0 %v1753
        %2400 = vmatmul.mubr.f32.gmra.mrb[0].mxu0 %v1369
        %v2401 = vpop.f32.mrb[0].mxu0
        %v2402 = vadd.f32 %v2017, %v2401
        %v2403 = vpop.f32.mrb[0].mxu0
        %2404 = vmatprep.mubr.f32.mxu0 %v1754
        %2405 = vmatmul.mubr.f32.gmra.mrb[0].mxu0 %v1370
        %v2406 = vpop.f32.mrb[0].mxu0
        %v2407 = vadd.f32 %v2022, %v2406
        %v2408 = vpop.f32.mrb[0].mxu0
        %2409 = vmatprep.mubr.f32.mxu0 %v1755
        %2410 = vmatmul.mubr.f32.gmra.mrb[0].mxu0 %v1371
        %v2411 = vpop.f32.mrb[0].mxu0
        %v2412 = vadd.f32 %v2027, %v2411
        %v2413 = vpop.f32.mrb[0].mxu0
        %2414 = vmatprep.mubr.f32.mxu0 %v1756
        %2415 = vmatmul.mubr.f32.gmra.mrb[0].mxu0 %v1372
        %v2416 = vpop.f32.mrb[0].mxu0
        %v2417 = vadd.f32 %v2032, %v2416
        %v2418 = vpop.f32.mrb[0].mxu0
        %2419 = vmatprep.mubr.f32.mxu0 %v1757
        %2420 = vmatmul.mubr.f32.gmra.mrb[0].mxu0 %v1373
        %v2421 = vpop.f32.mrb[0].mxu0
        %v2422 = vadd.f32 %v2037, %v2421
        %v2423 = vpop.f32.mrb[0].mxu0
        %2424 = vmatprep.mubr.f32.mxu0 %v1758
        %2425 = vmatmul.mubr.f32.gmra.mrb[0].mxu0 %v1374
        %v2426 = vpop.f32.mrb[0].mxu0
        %v2427 = vadd.f32 %v2042, %v2426
        %v2428 = vpop.f32.mrb[0].mxu0
        %2429 = vmatprep.mubr.f32.mxu0 %v1759
        %2430 = vmatmul.mubr.f32.gmra.mrb[0].mxu0 %v1375
        %v2431 = vpop.f32.mrb[0].mxu0
        %v2432 = vadd.f32 %v2047, %v2431
        %v2433 = vpop.f32.mrb[0].mxu0
        %2434 = vmatprep.mubr.f32.mxu0 %v1760
        %2435 = vmatmul.mubr.f32.gmra.mrb[0].mxu0 %v1376
        %v2436 = vpop.f32.mrb[0].mxu0
        %v2437 = vadd.f32 %v2052, %v2436
        %v2438 = vpop.f32.mrb[0].mxu0
        %2439 = vmatprep.mubr.f32.mxu0 %v1761
        %2440 = vmatmul.mubr.f32.gmra.mrb[0].mxu0 %v1377
        %v2441 = vpop.f32.mrb[0].mxu0
        %v2442 = vadd.f32 %v2057, %v2441
        %v2443 = vpop.f32.mrb[0].mxu0
        %2444 = vmatprep.mubr.f32.mxu0 %v1762
        %2445 = vmatmul.mubr.f32.gmra.mrb[0].mxu0 %v1378
        %v2446 = vpop.f32.mrb[0].mxu0
        %v2447 = vadd.f32 %v2062, %v2446
        %v2448 = vpop.f32.mrb[0].mxu0
        %2449 = vmatprep.mubr.f32.mxu0 %v1763
        %2450 = vmatmul.mubr.f32.gmra.mrb[0].mxu0 %v1379
        %v2451 = vpop.f32.mrb[0].mxu0
        %v2452 = vadd.f32 %v2067, %v2451
        %v2453 = vpop.f32.mrb[0].mxu0
        %2454 = vmatprep.mubr.f32.mxu0 %v1764
        %2455 = vmatmul.mubr.f32.gmra.mrb[0].mxu0 %v1380
        %v2456 = vpop.f32.mrb[0].mxu0
        %v2457 = vadd.f32 %v2072, %v2456
        %v2458 = vpop.f32.mrb[0].mxu0
        %2459 = vmatprep.mubr.f32.mxu0 %v1765
        %2460 = vmatmul.mubr.f32.gmra.mrb[0].mxu0 %v1381
        %v2461 = vpop.f32.mrb[0].mxu0
        %v2462 = vadd.f32 %v2077, %v2461
        %v2463 = vpop.f32.mrb[0].mxu0
        %2464 = vmatprep.mubr.f32.mxu0 %v1766
        %2465 = vmatmul.mubr.f32.gmra.mrb[0].mxu0 %v1382
        %v2466 = vpop.f32.mrb[0].mxu0
        %v2467 = vadd.f32 %v2082, %v2466
        %v2468 = vpop.f32.mrb[0].mxu0
        %2469 = vmatprep.mubr.f32.mxu0 %v1767
        %2470 = vmatmul.mubr.f32.gmra.mrb[0].mxu0 %v1383
        %v2471 = vpop.f32.mrb[0].mxu0
        %v2472 = vadd.f32 %v2087, %v2471
        %v2473 = vpop.f32.mrb[0].mxu0
        %2474 = vmatprep.mubr.f32.mxu0 %v1768
        %2475 = vmatmul.mubr.f32.gmra.mrb[0].mxu0 %v1384
        %v2476 = vpop.f32.mrb[0].mxu0
        %v2477 = vadd.f32 %v2092, %v2476
        %v2478 = vpop.f32.mrb[0].mxu0
        %2479 = vmatprep.mubr.f32.mxu0 %v1769
        %2480 = vmatmul.mubr.f32.gmra.mrb[0].mxu0 %v1385
        %v2481 = vpop.f32.mrb[0].mxu0
        %v2482 = vadd.f32 %v2097, %v2481
        %v2483 = vpop.f32.mrb[0].mxu0
        %2484 = vmatprep.mubr.f32.mxu0 %v1770
        %2485 = vmatmul.mubr.f32.gmra.mrb[0].mxu0 %v1386
        %v2486 = vpop.f32.mrb[0].mxu0
        %v2487 = vadd.f32 %v2102, %v2486
        %v2488 = vpop.f32.mrb[0].mxu0
        %2489 = vmatprep.mubr.f32.mxu0 %v1771
        %2490 = vmatmul.mubr.f32.gmra.mrb[0].mxu0 %v1387
        %v2491 = vpop.f32.mrb[0].mxu0
        %v2492 = vadd.f32 %v2107, %v2491
        %v2493 = vpop.f32.mrb[0].mxu0
        %2494 = vmatprep.mubr.f32.mxu0 %v1772
        %2495 = vmatmul.mubr.f32.gmra.mrb[0].mxu0 %v1388
        %v2496 = vpop.f32.mrb[0].mxu0
        %v2497 = vadd.f32 %v2112, %v2496
        %v2498 = vpop.f32.mrb[0].mxu0
        %2499 = vmatprep.mubr.f32.mxu0 %v1773
        %2500 = vmatmul.mubr.f32.gmra.mrb[0].mxu0 %v1389
        %v2501 = vpop.f32.mrb[0].mxu0
        %v2502 = vadd.f32 %v2117, %v2501
        %v2503 = vpop.f32.mrb[0].mxu0
        %2504 = vmatprep.mubr.f32.mxu0 %v1774
        %2505 = vmatmul.mubr.f32.gmra.mrb[0].mxu0 %v1390
        %v2506 = vpop.f32.mrb[0].mxu0
        %v2507 = vadd.f32 %v2122, %v2506
        %v2508 = vpop.f32.mrb[0].mxu0
        %2509 = vmatprep.mubr.f32.mxu0 %v1775
        %2510 = vmatmul.mubr.f32.gmra.mrb[0].mxu0 %v1391
        %v2511 = vpop.f32.mrb[0].mxu0
        %v2512 = vadd.f32 %v2127, %v2511
        %v2513 = vpop.f32.mrb[0].mxu0
        %2514 = vmatprep.mubr.f32.mxu0 %v1776
        %2515 = vmatmul.mubr.f32.gmra.mrb[0].mxu0 %v1392
        %v2516 = vpop.f32.mrb[0].mxu0
        %v2517 = vadd.f32 %v2132, %v2516
        %v2518 = vpop.f32.mrb[0].mxu0
        %2519 = vmatprep.mubr.f32.mxu0 %v1777
        %2520 = vmatmul.mubr.f32.gmra.mrb[0].mxu0 %v1393
        %v2521 = vpop.f32.mrb[0].mxu0
        %v2522 = vadd.f32 %v2137, %v2521
        %v2523 = vpop.f32.mrb[0].mxu0
        %2524 = vmatprep.mubr.f32.mxu0 %v1778
        %2525 = vmatmul.mubr.f32.gmra.mrb[0].mxu0 %v1394
        %v2526 = vpop.f32.mrb[0].mxu0
        %v2527 = vadd.f32 %v2142, %v2526
        %v2528 = vpop.f32.mrb[0].mxu0
        %2529 = vmatprep.mubr.f32.mxu0 %v1779
        %2530 = vmatmul.mubr.f32.gmra.mrb[0].mxu0 %v1395
        %v2531 = vpop.f32.mrb[0].mxu0
        %v2532 = vadd.f32 %v2147, %v2531
        %v2533 = vpop.f32.mrb[0].mxu0
        %2534 = vmatprep.mubr.f32.mxu0 %v1780
        %2535 = vmatmul.mubr.f32.gmra.mrb[0].mxu0 %v1396
        %v2536 = vpop.f32.mrb[0].mxu0
        %v2537 = vadd.f32 %v2152, %v2536
        %v2538 = vpop.f32.mrb[0].mxu0
        %2539 = vmatprep.mubr.f32.mxu0 %v1781
        %2540 = vmatmul.mubr.f32.gmra.mrb[0].mxu0 %v1397
        %v2541 = vpop.f32.mrb[0].mxu0
        %v2542 = vadd.f32 %v2157, %v2541
        %v2543 = vpop.f32.mrb[0].mxu0
        %2544 = vmatprep.mubr.f32.mxu0 %v1782
        %2545 = vmatmul.mubr.f32.gmra.mrb[0].mxu0 %v1398
        %v2546 = vpop.f32.mrb[0].mxu0
        %v2547 = vadd.f32 %v2162, %v2546
        %v2548 = vpop.f32.mrb[0].mxu0
        %2549 = vmatprep.mubr.f32.mxu0 %v1783
        %2550 = vmatmul.mubr.f32.gmra.mrb[0].mxu0 %v1399
        %v2551 = vpop.f32.mrb[0].mxu0
        %v2552 = vadd.f32 %v2167, %v2551
        %v2553 = vpop.f32.mrb[0].mxu0
        %2554 = vmatprep.mubr.f32.mxu0 %v1784
        %2555 = vmatmul.mubr.f32.gmra.mrb[0].mxu0 %v1400
        %v2556 = vpop.f32.mrb[0].mxu0
        %v2557 = vadd.f32 %v2172, %v2556
        %v2558 = vpop.f32.mrb[0].mxu0
        %2559 = vmatprep.mubr.f32.mxu0 %v1785
        %2560 = vmatmul.mubr.f32.gmra.mrb[0].mxu0 %v1401
        %v2561 = vpop.f32.mrb[0].mxu0
        %v2562 = vadd.f32 %v2177, %v2561
        %v2563 = vpop.f32.mrb[0].mxu0
        %2564 = vmatprep.mubr.f32.mxu0 %v1786
        %2565 = vmatmul.mubr.f32.gmra.mrb[0].mxu0 %v1402
        %v2566 = vpop.f32.mrb[0].mxu0
        %v2567 = vadd.f32 %v2182, %v2566
        %v2568 = vpop.f32.mrb[0].mxu0
        %2569 = vmatprep.mubr.f32.mxu0 %v1787
        %2570 = vmatmul.mubr.f32.gmra.mrb[0].mxu0 %v1403
        %v2571 = vpop.f32.mrb[0].mxu0
        %v2572 = vadd.f32 %v2187, %v2571
        %v2573 = vpop.f32.mrb[0].mxu0
        %2574 = vmatprep.mubr.f32.mxu0 %v1788
        %2575 = vmatmul.mubr.f32.gmra.mrb[0].mxu0 %v1404
        %v2576 = vpop.f32.mrb[0].mxu0
        %v2577 = vadd.f32 %v2192, %v2576
        %v2578 = vpop.f32.mrb[0].mxu0
        %2579 = vmatprep.mubr.f32.mxu0 %v1789
        %2580 = vmatmul.mubr.f32.gmra.mrb[0].mxu0 %v1405
        %v2581 = vpop.f32.mrb[0].mxu0
        %v2582 = vadd.f32 %v2197, %v2581
        %v2583 = vpop.f32.mrb[0].mxu0
        %2584 = vmatprep.mubr.f32.mxu0 %v1790
        %2585 = vmatmul.mubr.f32.gmra.mrb[0].mxu0 %v1406
        %v2586 = vpop.f32.mrb[0].mxu0
        %v2587 = vadd.f32 %v2202, %v2586
        %v2588 = vpop.f32.mrb[0].mxu0
        %2589 = vmatprep.mubr.f32.mxu0 %v1791
        %2590 = vmatmul.mubr.f32.gmra.mrb[0].mxu0 %v1407
        %v2591 = vpop.f32.mrb[0].mxu0
        %v2592 = vadd.f32 %v2207, %v2591
        %v2593 = vpop.f32.mrb[0].mxu0
        %2594 = vmatprep.mubr.f32.mxu0 %v1792
        %2595 = vmatmul.mubr.f32.gmra.mrb[0].mxu0 %v1408
        %v2596 = vpop.f32.mrb[0].mxu0
        %v2597 = vadd.f32 %v2212, %v2596
        %v2598 = vpop.f32.mrb[0].mxu0
        %2599 = vmatprep.mubr.f32.mxu0 %v1793
        %2600 = vmatmul.mubr.f32.gmra.mrb[0].mxu0 %v1409
        %v2601 = vpop.f32.mrb[0].mxu0
        %v2602 = vadd.f32 %v2217, %v2601
        %v2603 = vpop.f32.mrb[0].mxu0
        %2604 = vmatprep.mubr.f32.mxu0 %v1794
        %2605 = vmatmul.mubr.f32.gmra.mrb[0].mxu0 %v1410
        %v2606 = vpop.f32.mrb[0].mxu0
        %v2607 = vadd.f32 %v2222, %v2606
        %v2608 = vpop.f32.mrb[0].mxu0
        %2609 = vmatprep.mubr.f32.mxu0 %v1795
        %2610 = vmatmul.mubr.f32.gmra.mrb[0].mxu0 %v1411
        %v2611 = vpop.f32.mrb[0].mxu0
        %v2612 = vadd.f32 %v2227, %v2611
        %v2613 = vpop.f32.mrb[0].mxu0
        %2614 = vmatprep.mubr.f32.mxu0 %v1796
        %2615 = vmatmul.mubr.f32.gmra.mrb[0].mxu0 %v1412
        %v2616 = vpop.f32.mrb[0].mxu0
        %v2617 = vadd.f32 %v2232, %v2616
        %v2618 = vpop.f32.mrb[0].mxu0
        %2619 = vmatprep.mubr.f32.mxu0 %v1797
        %2620 = vmatmul.mubr.f32.gmra.mrb[0].mxu0 %v1413
        %v2621 = vpop.f32.mrb[0].mxu0
        %v2622 = vadd.f32 %v2237, %v2621
        %v2623 = vpop.f32.mrb[0].mxu0
        %2624 = vmatprep.mubr.f32.mxu0 %v1798
        %2625 = vmatmul.mubr.f32.gmra.mrb[0].mxu0 %v1414
        %v2626 = vpop.f32.mrb[0].mxu0
        %v2627 = vadd.f32 %v2242, %v2626
        %v2628 = vpop.f32.mrb[0].mxu0
        %2629 = vmatprep.mubr.f32.mxu0 %v1799
        %2630 = vmatmul.mubr.f32.gmra.mrb[0].mxu0 %v1415
        %v2631 = vpop.f32.mrb[0].mxu0
        %v2632 = vadd.f32 %v2247, %v2631
        %v2633 = vpop.f32.mrb[0].mxu0
        %2634 = vmatprep.mubr.f32.mxu0 %v1800
        %2635 = vmatmul.mubr.f32.gmra.mrb[0].mxu0 %v1416
        %v2636 = vpop.f32.mrb[0].mxu0
        %v2637 = vadd.f32 %v2252, %v2636
        %v2638 = vpop.f32.mrb[0].mxu0
        %2639 = vdwg.mxu0
        %v2640 = vmax.f32 %v2322, 0.0
        %v2641 = vmax.f32 %v2327, 0.0
        %v2642 = vmax.f32 %v2332, 0.0
        %v2643 = vmax.f32 %v2337, 0.0
        %v2644 = vmax.f32 %v2342, 0.0
        %v2645 = vmax.f32 %v2347, 0.0
        %v2646 = vmax.f32 %v2352, 0.0
        %v2647 = vmax.f32 %v2357, 0.0
        %v2648 = vmax.f32 %v2362, 0.0
        %v2649 = vmax.f32 %v2367, 0.0
        %v2650 = vmax.f32 %v2372, 0.0
        %v2651 = vmax.f32 %v2377, 0.0
        %v2652 = vmax.f32 %v2382, 0.0
        %v2653 = vmax.f32 %v2387, 0.0
        %v2654 = vmax.f32 %v2392, 0.0
        %v2655 = vmax.f32 %v2397, 0.0
        %v2656 = vmax.f32 %v2402, 0.0
        %v2657 = vmax.f32 %v2407, 0.0
        %v2658 = vmax.f32 %v2412, 0.0
        %v2659 = vmax.f32 %v2417, 0.0
        %v2660 = vmax.f32 %v2422, 0.0
        %v2661 = vmax.f32 %v2427, 0.0
        %v2662 = vmax.f32 %v2432, 0.0
        %v2663 = vmax.f32 %v2437, 0.0
        %v2664 = vmax.f32 %v2442, 0.0
        %v2665 = vmax.f32 %v2447, 0.0
        %v2666 = vmax.f32 %v2452, 0.0
        %v2667 = vmax.f32 %v2457, 0.0
        %v2668 = vmax.f32 %v2462, 0.0
        %v2669 = vmax.f32 %v2467, 0.0
        %v2670 = vmax.f32 %v2472, 0.0
        %v2671 = vmax.f32 %v2477, 0.0
        %v2672 = vmax.f32 %v2482, 0.0
        %v2673 = vmax.f32 %v2487, 0.0
        %v2674 = vmax.f32 %v2492, 0.0
        %v2675 = vmax.f32 %v2497, 0.0
        %v2676 = vmax.f32 %v2502, 0.0
        %v2677 = vmax.f32 %v2507, 0.0
        %v2678 = vmax.f32 %v2512, 0.0
        %v2679 = vmax.f32 %v2517, 0.0
        %v2680 = vmax.f32 %v2522, 0.0
        %v2681 = vmax.f32 %v2527, 0.0
        %v2682 = vmax.f32 %v2532, 0.0
        %v2683 = vmax.f32 %v2537, 0.0
        %v2684 = vmax.f32 %v2542, 0.0
        %v2685 = vmax.f32 %v2547, 0.0
        %v2686 = vmax.f32 %v2552, 0.0
        %v2687 = vmax.f32 %v2557, 0.0
        %v2688 = vmax.f32 %v2562, 0.0
        %v2689 = vmax.f32 %v2567, 0.0
        %v2690 = vmax.f32 %v2572, 0.0
        %v2691 = vmax.f32 %v2577, 0.0
        %v2692 = vmax.f32 %v2582, 0.0
        %v2693 = vmax.f32 %v2587, 0.0
        %v2694 = vmax.f32 %v2592, 0.0
        %v2695 = vmax.f32 %v2597, 0.0
        %v2696 = vmax.f32 %v2602, 0.0
        %v2697 = vmax.f32 %v2607, 0.0
        %v2698 = vmax.f32 %v2612, 0.0
        %v2699 = vmax.f32 %v2617, 0.0
        %v2700 = vmax.f32 %v2622, 0.0
        %v2701 = vmax.f32 %v2627, 0.0
        %v2702 = vmax.f32 %v2632, 0.0
        %v2703 = vmax.f32 %v2637, 0.0
        %v2704 = vld [vmem:[%s2] sm:$0xff]
        %v2705 = vld [vmem:[%s2 + $0x8] sm:$0xff]
        %v2706 = vld [vmem:[%s2 + $0x10] sm:$0xff]
        %v2707 = vld [vmem:[%s2 + $0x18] sm:$0xff]
        %v2708 = vld [vmem:[%s2 + $0x20] sm:$0xff]
        %v2709 = vld [vmem:[%s2 + $0x28] sm:$0xff]
        %v2710 = vld [vmem:[%s2 + $0x30] sm:$0xff]
        %v2711 = vld [vmem:[%s2 + $0x38] sm:$0xff]
        %v2712 = vld [vmem:[%s2 + $0x40] sm:$0xff]
        %v2713 = vld [vmem:[%s2 + $0x48] sm:$0xff]
        %v2714 = vld [vmem:[%s2 + $0x50] sm:$0xff]
        %v2715 = vld [vmem:[%s2 + $0x58] sm:$0xff]
        %v2716 = vld [vmem:[%s2 + $0x60] sm:$0xff]
        %v2717 = vld [vmem:[%s2 + $0x68] sm:$0xff]
        %v2718 = vld [vmem:[%s2 + $0x70] sm:$0xff]
        %v2719 = vld [vmem:[%s2 + $0x78] sm:$0xff]
        %v2720 = vld [vmem:[%s3 + $0x1] sm:$0x1]
        %v2721 = vlaneseq
        %v2722 = vshrl.u32 %v2721, 7
        %v2723 = vsub.s32 0, %v2722
        %v2724 = vrot.slane %v2720, %v2723
        %2725 = vmatprep.subr.mxu0 0.0
        %2726 = vmatpush1.msra.mxu0 %v2704
        %2727 = vmatprep.subr.mxu0 0.0
        %2728 = vmatpush1.msra.mxu0 %v2705
        %2729 = vmatprep.subr.mxu0 0.0
        %2730 = vmatpush1.msra.mxu0 %v2706
        %2731 = vmatprep.subr.mxu0 0.0
        %2732 = vmatpush1.msra.mxu0 %v2707
        %2733 = vmatprep.subr.mxu0 0.0
        %2734 = vmatpush1.msra.mxu0 %v2708
        %2735 = vmatprep.subr.mxu0 0.0
        %2736 = vmatpush1.msra.mxu0 %v2709
        %2737 = vmatprep.subr.mxu0 0.0
        %2738 = vmatpush1.msra.mxu0 %v2710
        %2739 = vmatprep.subr.mxu0 0.0
        %2740 = vmatpush1.msra.mxu0 %v2711
        %2741 = vmatprep.subr.mxu0 0.0
        %2742 = vmatpush1.msra.mxu0 %v2712
        %2743 = vmatprep.subr.mxu0 0.0
        %2744 = vmatpush1.msra.mxu0 %v2713
        %2745 = vmatprep.subr.mxu0 0.0
        %2746 = vmatpush1.msra.mxu0 %v2714
        %2747 = vmatprep.subr.mxu0 0.0
        %2748 = vmatpush1.msra.mxu0 %v2715
        %2749 = vmatprep.subr.mxu0 0.0
        %2750 = vmatpush1.msra.mxu0 %v2716
        %2751 = vmatprep.subr.mxu0 0.0
        %2752 = vmatpush1.msra.mxu0 %v2717
        %2753 = vmatprep.subr.mxu0 0.0
        %2754 = vmatpush1.msra.mxu0 %v2718
        %2755 = vmatprep.subr.mxu0 0.0
        %2756 = vmatpush1.msra.mxu0 %v2719
        %2757 = vmatprep.subr.mxu0 0.0
        %2758 = vmatpush1.msra.mxu0 0.0
        %2759 = vmatprep.subr.mxu0 0.0
        %2760 = vmatpush1.msra.mxu0 0.0
        %2761 = vmatprep.subr.mxu0 0.0
        %2762 = vmatpush1.msra.mxu0 0.0
        %2763 = vmatprep.subr.mxu0 0.0
        %2764 = vmatpush1.msra.mxu0 0.0
        %2765 = vmatprep.subr.mxu0 0.0
        %2766 = vmatpush1.msra.mxu0 0.0
        %2767 = vmatprep.subr.mxu0 0.0
        %2768 = vmatpush1.msra.mxu0 0.0
        %2769 = vmatprep.subr.mxu0 0.0
        %2770 = vmatpush1.msra.mxu0 0.0
        %2771 = vmatprep.subr.mxu0 0.0
        %2772 = vmatpush1.msra.mxu0 0.0
        %2773 = vmatprep.subr.mxu0 0.0
        %2774 = vmatpush1.msra.mxu0 0.0
        %2775 = vmatprep.subr.mxu0 0.0
        %2776 = vmatpush1.msra.mxu0 0.0
        %2777 = vmatprep.subr.mxu0 0.0
        %2778 = vmatpush1.msra.mxu0 0.0
        %2779 = vmatprep.subr.mxu0 0.0
        %2780 = vmatpush1.msra.mxu0 0.0
        %2781 = vmatprep.subr.mxu0 0.0
        %2782 = vmatpush1.msra.mxu0 0.0
        %2783 = vmatprep.subr.mxu0 0.0
        %2784 = vmatpush1.msra.mxu0 0.0
        %2785 = vmatprep.subr.mxu0 0.0
        %2786 = vmatpush1.msra.mxu0 0.0
        %2787 = vmatprep.subr.mxu0 0.0
        %2788 = vmatpush1.msra.mxu0 0.0
        %2789 = vmatprep.mubr.f32.mxu0 0.0
        %2790 = vmatmul.mubr.f32.gmra.mrb[0].mxu0 %v2640
        %v2791 = vpop.f32.mrb[0].mxu0
        %v2792 = vadd.f32 %v2724, %v2791
        %v2793 = vpop.f32.mrb[0].mxu0
        %2794 = vmatprep.mubr.f32.mxu0 0.0
        %2795 = vmatmul.mubr.f32.gmra.mrb[0].mxu0 %v2641
        %v2796 = vpop.f32.mrb[0].mxu0
        %v2797 = vadd.f32 %v2724, %v2796
        %v2798 = vpop.f32.mrb[0].mxu0
        %2799 = vmatprep.mubr.f32.mxu0 0.0
        %2800 = vmatmul.mubr.f32.gmra.mrb[0].mxu0 %v2642
        %v2801 = vpop.f32.mrb[0].mxu0
        %v2802 = vadd.f32 %v2724, %v2801
        %v2803 = vpop.f32.mrb[0].mxu0
        %2804 = vmatprep.mubr.f32.mxu0 0.0
        %2805 = vmatmul.mubr.f32.gmra.mrb[0].mxu0 %v2643
        %v2806 = vpop.f32.mrb[0].mxu0
        %v2807 = vadd.f32 %v2724, %v2806
        %v2808 = vpop.f32.mrb[0].mxu0
        %2809 = vmatprep.mubr.f32.mxu0 0.0
        %2810 = vmatmul.mubr.f32.gmra.mrb[0].mxu0 %v2644
        %v2811 = vpop.f32.mrb[0].mxu0
        %v2812 = vadd.f32 %v2724, %v2811
        %v2813 = vpop.f32.mrb[0].mxu0
        %2814 = vmatprep.mubr.f32.mxu0 0.0
        %2815 = vmatmul.mubr.f32.gmra.mrb[0].mxu0 %v2645
        %v2816 = vpop.f32.mrb[0].mxu0
        %v2817 = vadd.f32 %v2724, %v2816
        %v2818 = vpop.f32.mrb[0].mxu0
        %2819 = vmatprep.mubr.f32.mxu0 0.0
        %2820 = vmatmul.mubr.f32.gmra.mrb[0].mxu0 %v2646
        %v2821 = vpop.f32.mrb[0].mxu0
        %v2822 = vadd.f32 %v2724, %v2821
        %v2823 = vpop.f32.mrb[0].mxu0
        %2824 = vmatprep.mubr.f32.mxu0 0.0
        %2825 = vmatmul.mubr.f32.gmra.mrb[0].mxu0 %v2647
        %v2826 = vpop.f32.mrb[0].mxu0
        %v2827 = vadd.f32 %v2724, %v2826
        %v2828 = vpop.f32.mrb[0].mxu0
        %2829 = vmatprep.mubr.f32.mxu0 0.0
        %2830 = vmatmul.mubr.f32.gmra.mrb[0].mxu0 %v2648
        %v2831 = vpop.f32.mrb[0].mxu0
        %v2832 = vadd.f32 %v2724, %v2831
        %v2833 = vpop.f32.mrb[0].mxu0
        %2834 = vmatprep.mubr.f32.mxu0 0.0
        %2835 = vmatmul.mubr.f32.gmra.mrb[0].mxu0 %v2649
        %v2836 = vpop.f32.mrb[0].mxu0
        %v2837 = vadd.f32 %v2724, %v2836
        %v2838 = vpop.f32.mrb[0].mxu0
        %2839 = vmatprep.mubr.f32.mxu0 0.0
        %2840 = vmatmul.mubr.f32.gmra.mrb[0].mxu0 %v2650
        %v2841 = vpop.f32.mrb[0].mxu0
        %v2842 = vadd.f32 %v2724, %v2841
        %v2843 = vpop.f32.mrb[0].mxu0
        %2844 = vmatprep.mubr.f32.mxu0 0.0
        %2845 = vmatmul.mubr.f32.gmra.mrb[0].mxu0 %v2651
        %v2846 = vpop.f32.mrb[0].mxu0
        %v2847 = vadd.f32 %v2724, %v2846
        %v2848 = vpop.f32.mrb[0].mxu0
        %2849 = vmatprep.mubr.f32.mxu0 0.0
        %2850 = vmatmul.mubr.f32.gmra.mrb[0].mxu0 %v2652
        %v2851 = vpop.f32.mrb[0].mxu0
        %v2852 = vadd.f32 %v2724, %v2851
        %v2853 = vpop.f32.mrb[0].mxu0
        %2854 = vmatprep.mubr.f32.mxu0 0.0
        %2855 = vmatmul.mubr.f32.gmra.mrb[0].mxu0 %v2653
        %v2856 = vpop.f32.mrb[0].mxu0
        %v2857 = vadd.f32 %v2724, %v2856
        %v2858 = vpop.f32.mrb[0].mxu0
        %2859 = vmatprep.mubr.f32.mxu0 0.0
        %2860 = vmatmul.mubr.f32.gmra.mrb[0].mxu0 %v2654
        %v2861 = vpop.f32.mrb[0].mxu0
        %v2862 = vadd.f32 %v2724, %v2861
        %v2863 = vpop.f32.mrb[0].mxu0
        %2864 = vmatprep.mubr.f32.mxu0 0.0
        %2865 = vmatmul.mubr.f32.gmra.mrb[0].mxu0 %v2655
        %v2866 = vpop.f32.mrb[0].mxu0
        %v2867 = vadd.f32 %v2724, %v2866
        %v2868 = vpop.f32.mrb[0].mxu0
        %2869 = vmatprep.mubr.f32.mxu0 0.0
        %2870 = vmatmul.mubr.f32.gmra.mrb[0].mxu0 %v2656
        %v2871 = vpop.f32.mrb[0].mxu0
        %v2872 = vadd.f32 %v2724, %v2871
        %v2873 = vpop.f32.mrb[0].mxu0
        %2874 = vmatprep.mubr.f32.mxu0 0.0
        %2875 = vmatmul.mubr.f32.gmra.mrb[0].mxu0 %v2657
        %v2876 = vpop.f32.mrb[0].mxu0
        %v2877 = vadd.f32 %v2724, %v2876
        %v2878 = vpop.f32.mrb[0].mxu0
        %2879 = vmatprep.mubr.f32.mxu0 0.0
        %2880 = vmatmul.mubr.f32.gmra.mrb[0].mxu0 %v2658
        %v2881 = vpop.f32.mrb[0].mxu0
        %v2882 = vadd.f32 %v2724, %v2881
        %v2883 = vpop.f32.mrb[0].mxu0
        %2884 = vmatprep.mubr.f32.mxu0 0.0
        %2885 = vmatmul.mubr.f32.gmra.mrb[0].mxu0 %v2659
        %v2886 = vpop.f32.mrb[0].mxu0
        %v2887 = vadd.f32 %v2724, %v2886
        %v2888 = vpop.f32.mrb[0].mxu0
        %2889 = vmatprep.mubr.f32.mxu0 0.0
        %2890 = vmatmul.mubr.f32.gmra.mrb[0].mxu0 %v2660
        %v2891 = vpop.f32.mrb[0].mxu0
        %v2892 = vadd.f32 %v2724, %v2891
        %v2893 = vpop.f32.mrb[0].mxu0
        %2894 = vmatprep.mubr.f32.mxu0 0.0
        %2895 = vmatmul.mubr.f32.gmra.mrb[0].mxu0 %v2661
        %v2896 = vpop.f32.mrb[0].mxu0
        %v2897 = vadd.f32 %v2724, %v2896
        %v2898 = vpop.f32.mrb[0].mxu0
        %2899 = vmatprep.mubr.f32.mxu0 0.0
        %2900 = vmatmul.mubr.f32.gmra.mrb[0].mxu0 %v2662
        %v2901 = vpop.f32.mrb[0].mxu0
        %v2902 = vadd.f32 %v2724, %v2901
        %v2903 = vpop.f32.mrb[0].mxu0
        %2904 = vmatprep.mubr.f32.mxu0 0.0
        %2905 = vmatmul.mubr.f32.gmra.mrb[0].mxu0 %v2663
        %v2906 = vpop.f32.mrb[0].mxu0
        %v2907 = vadd.f32 %v2724, %v2906
        %v2908 = vpop.f32.mrb[0].mxu0
        %2909 = vmatprep.mubr.f32.mxu0 0.0
        %2910 = vmatmul.mubr.f32.gmra.mrb[0].mxu0 %v2664
        %v2911 = vpop.f32.mrb[0].mxu0
        %v2912 = vadd.f32 %v2724, %v2911
        %v2913 = vpop.f32.mrb[0].mxu0
        %2914 = vmatprep.mubr.f32.mxu0 0.0
        %2915 = vmatmul.mubr.f32.gmra.mrb[0].mxu0 %v2665
        %v2916 = vpop.f32.mrb[0].mxu0
        %v2917 = vadd.f32 %v2724, %v2916
        %v2918 = vpop.f32.mrb[0].mxu0
        %2919 = vmatprep.mubr.f32.mxu0 0.0
        %2920 = vmatmul.mubr.f32.gmra.mrb[0].mxu0 %v2666
        %v2921 = vpop.f32.mrb[0].mxu0
        %v2922 = vadd.f32 %v2724, %v2921
        %v2923 = vpop.f32.mrb[0].mxu0
        %2924 = vmatprep.mubr.f32.mxu0 0.0
        %2925 = vmatmul.mubr.f32.gmra.mrb[0].mxu0 %v2667
        %v2926 = vpop.f32.mrb[0].mxu0
        %v2927 = vadd.f32 %v2724, %v2926
        %v2928 = vpop.f32.mrb[0].mxu0
        %2929 = vmatprep.mubr.f32.mxu0 0.0
        %2930 = vmatmul.mubr.f32.gmra.mrb[0].mxu0 %v2668
        %v2931 = vpop.f32.mrb[0].mxu0
        %v2932 = vadd.f32 %v2724, %v2931
        %v2933 = vpop.f32.mrb[0].mxu0
        %2934 = vmatprep.mubr.f32.mxu0 0.0
        %2935 = vmatmul.mubr.f32.gmra.mrb[0].mxu0 %v2669
        %v2936 = vpop.f32.mrb[0].mxu0
        %v2937 = vadd.f32 %v2724, %v2936
        %v2938 = vpop.f32.mrb[0].mxu0
        %2939 = vmatprep.mubr.f32.mxu0 0.0
        %2940 = vmatmul.mubr.f32.gmra.mrb[0].mxu0 %v2670
        %v2941 = vpop.f32.mrb[0].mxu0
        %v2942 = vadd.f32 %v2724, %v2941
        %v2943 = vpop.f32.mrb[0].mxu0
        %2944 = vmatprep.mubr.f32.mxu0 0.0
        %2945 = vmatmul.mubr.f32.gmra.mrb[0].mxu0 %v2671
        %v2946 = vpop.f32.mrb[0].mxu0
        %v2947 = vadd.f32 %v2724, %v2946
        %v2948 = vpop.f32.mrb[0].mxu0
        %2949 = vmatprep.mubr.f32.mxu0 0.0
        %2950 = vmatmul.mubr.f32.gmra.mrb[0].mxu0 %v2672
        %v2951 = vpop.f32.mrb[0].mxu0
        %v2952 = vadd.f32 %v2724, %v2951
        %v2953 = vpop.f32.mrb[0].mxu0
        %2954 = vmatprep.mubr.f32.mxu0 0.0
        %2955 = vmatmul.mubr.f32.gmra.mrb[0].mxu0 %v2673
        %v2956 = vpop.f32.mrb[0].mxu0
        %v2957 = vadd.f32 %v2724, %v2956
        %v2958 = vpop.f32.mrb[0].mxu0
        %2959 = vmatprep.mubr.f32.mxu0 0.0
        %2960 = vmatmul.mubr.f32.gmra.mrb[0].mxu0 %v2674
        %v2961 = vpop.f32.mrb[0].mxu0
        %v2962 = vadd.f32 %v2724, %v2961
        %v2963 = vpop.f32.mrb[0].mxu0
        %2964 = vmatprep.mubr.f32.mxu0 0.0
        %2965 = vmatmul.mubr.f32.gmra.mrb[0].mxu0 %v2675
        %v2966 = vpop.f32.mrb[0].mxu0
        %v2967 = vadd.f32 %v2724, %v2966
        %v2968 = vpop.f32.mrb[0].mxu0
        %2969 = vmatprep.mubr.f32.mxu0 0.0
        %2970 = vmatmul.mubr.f32.gmra.mrb[0].mxu0 %v2676
        %v2971 = vpop.f32.mrb[0].mxu0
        %v2972 = vadd.f32 %v2724, %v2971
        %v2973 = vpop.f32.mrb[0].mxu0
        %2974 = vmatprep.mubr.f32.mxu0 0.0
        %2975 = vmatmul.mubr.f32.gmra.mrb[0].mxu0 %v2677
        %v2976 = vpop.f32.mrb[0].mxu0
        %v2977 = vadd.f32 %v2724, %v2976
        %v2978 = vpop.f32.mrb[0].mxu0
        %2979 = vmatprep.mubr.f32.mxu0 0.0
        %2980 = vmatmul.mubr.f32.gmra.mrb[0].mxu0 %v2678
        %v2981 = vpop.f32.mrb[0].mxu0
        %v2982 = vadd.f32 %v2724, %v2981
        %v2983 = vpop.f32.mrb[0].mxu0
        %2984 = vmatprep.mubr.f32.mxu0 0.0
        %2985 = vmatmul.mubr.f32.gmra.mrb[0].mxu0 %v2679
        %v2986 = vpop.f32.mrb[0].mxu0
        %v2987 = vadd.f32 %v2724, %v2986
        %v2988 = vpop.f32.mrb[0].mxu0
        %2989 = vmatprep.mubr.f32.mxu0 0.0
        %2990 = vmatmul.mubr.f32.gmra.mrb[0].mxu0 %v2680
        %v2991 = vpop.f32.mrb[0].mxu0
        %v2992 = vadd.f32 %v2724, %v2991
        %v2993 = vpop.f32.mrb[0].mxu0
        %2994 = vmatprep.mubr.f32.mxu0 0.0
        %2995 = vmatmul.mubr.f32.gmra.mrb[0].mxu0 %v2681
        %v2996 = vpop.f32.mrb[0].mxu0
        %v2997 = vadd.f32 %v2724, %v2996
        %v2998 = vpop.f32.mrb[0].mxu0
        %2999 = vmatprep.mubr.f32.mxu0 0.0
        %3000 = vmatmul.mubr.f32.gmra.mrb[0].mxu0 %v2682
        %v3001 = vpop.f32.mrb[0].mxu0
        %v3002 = vadd.f32 %v2724, %v3001
        %v3003 = vpop.f32.mrb[0].mxu0
        %3004 = vmatprep.mubr.f32.mxu0 0.0
        %3005 = vmatmul.mubr.f32.gmra.mrb[0].mxu0 %v2683
        %v3006 = vpop.f32.mrb[0].mxu0
        %v3007 = vadd.f32 %v2724, %v3006
        %v3008 = vpop.f32.mrb[0].mxu0
        %3009 = vmatprep.mubr.f32.mxu0 0.0
        %3010 = vmatmul.mubr.f32.gmra.mrb[0].mxu0 %v2684
        %v3011 = vpop.f32.mrb[0].mxu0
        %v3012 = vadd.f32 %v2724, %v3011
        %v3013 = vpop.f32.mrb[0].mxu0
        %3014 = vmatprep.mubr.f32.mxu0 0.0
        %3015 = vmatmul.mubr.f32.gmra.mrb[0].mxu0 %v2685
        %v3016 = vpop.f32.mrb[0].mxu0
        %v3017 = vadd.f32 %v2724, %v3016
        %v3018 = vpop.f32.mrb[0].mxu0
        %3019 = vmatprep.mubr.f32.mxu0 0.0
        %3020 = vmatmul.mubr.f32.gmra.mrb[0].mxu0 %v2686
        %v3021 = vpop.f32.mrb[0].mxu0
        %v3022 = vadd.f32 %v2724, %v3021
        %v3023 = vpop.f32.mrb[0].mxu0
        %3024 = vmatprep.mubr.f32.mxu0 0.0
        %3025 = vmatmul.mubr.f32.gmra.mrb[0].mxu0 %v2687
        %v3026 = vpop.f32.mrb[0].mxu0
        %v3027 = vadd.f32 %v2724, %v3026
        %v3028 = vpop.f32.mrb[0].mxu0
        %3029 = vmatprep.mubr.f32.mxu0 0.0
        %3030 = vmatmul.mubr.f32.gmra.mrb[0].mxu0 %v2688
        %v3031 = vpop.f32.mrb[0].mxu0
        %v3032 = vadd.f32 %v2724, %v3031
        %v3033 = vpop.f32.mrb[0].mxu0
        %3034 = vmatprep.mubr.f32.mxu0 0.0
        %3035 = vmatmul.mubr.f32.gmra.mrb[0].mxu0 %v2689
        %v3036 = vpop.f32.mrb[0].mxu0
        %v3037 = vadd.f32 %v2724, %v3036
        %v3038 = vpop.f32.mrb[0].mxu0
        %3039 = vmatprep.mubr.f32.mxu0 0.0
        %3040 = vmatmul.mubr.f32.gmra.mrb[0].mxu0 %v2690
        %v3041 = vpop.f32.mrb[0].mxu0
        %v3042 = vadd.f32 %v2724, %v3041
        %v3043 = vpop.f32.mrb[0].mxu0
        %3044 = vmatprep.mubr.f32.mxu0 0.0
        %3045 = vmatmul.mubr.f32.gmra.mrb[0].mxu0 %v2691
        %v3046 = vpop.f32.mrb[0].mxu0
        %v3047 = vadd.f32 %v2724, %v3046
        %v3048 = vpop.f32.mrb[0].mxu0
        %3049 = vmatprep.mubr.f32.mxu0 0.0
        %3050 = vmatmul.mubr.f32.gmra.mrb[0].mxu0 %v2692
        %v3051 = vpop.f32.mrb[0].mxu0
        %v3052 = vadd.f32 %v2724, %v3051
        %v3053 = vpop.f32.mrb[0].mxu0
        %3054 = vmatprep.mubr.f32.mxu0 0.0
        %3055 = vmatmul.mubr.f32.gmra.mrb[0].mxu0 %v2693
        %v3056 = vpop.f32.mrb[0].mxu0
        %v3057 = vadd.f32 %v2724, %v3056
        %v3058 = vpop.f32.mrb[0].mxu0
        %3059 = vmatprep.mubr.f32.mxu0 0.0
        %3060 = vmatmul.mubr.f32.gmra.mrb[0].mxu0 %v2694
        %v3061 = vpop.f32.mrb[0].mxu0
        %v3062 = vadd.f32 %v2724, %v3061
        %v3063 = vpop.f32.mrb[0].mxu0
        %3064 = vmatprep.mubr.f32.mxu0 0.0
        %3065 = vmatmul.mubr.f32.gmra.mrb[0].mxu0 %v2695
        %v3066 = vpop.f32.mrb[0].mxu0
        %v3067 = vadd.f32 %v2724, %v3066
        %v3068 = vpop.f32.mrb[0].mxu0
        %3069 = vmatprep.mubr.f32.mxu0 0.0
        %3070 = vmatmul.mubr.f32.gmra.mrb[0].mxu0 %v2696
        %v3071 = vpop.f32.mrb[0].mxu0
        %v3072 = vadd.f32 %v2724, %v3071
        %v3073 = vpop.f32.mrb[0].mxu0
        %3074 = vmatprep.mubr.f32.mxu0 0.0
        %3075 = vmatmul.mubr.f32.gmra.mrb[0].mxu0 %v2697
        %v3076 = vpop.f32.mrb[0].mxu0
        %v3077 = vadd.f32 %v2724, %v3076
        %v3078 = vpop.f32.mrb[0].mxu0
        %3079 = vmatprep.mubr.f32.mxu0 0.0
        %3080 = vmatmul.mubr.f32.gmra.mrb[0].mxu0 %v2698
        %v3081 = vpop.f32.mrb[0].mxu0
        %v3082 = vadd.f32 %v2724, %v3081
        %v3083 = vpop.f32.mrb[0].mxu0
        %3084 = vmatprep.mubr.f32.mxu0 0.0
        %3085 = vmatmul.mubr.f32.gmra.mrb[0].mxu0 %v2699
        %v3086 = vpop.f32.mrb[0].mxu0
        %v3087 = vadd.f32 %v2724, %v3086
        %v3088 = vpop.f32.mrb[0].mxu0
        %3089 = vmatprep.mubr.f32.mxu0 0.0
        %3090 = vmatmul.mubr.f32.gmra.mrb[0].mxu0 %v2700
        %v3091 = vpop.f32.mrb[0].mxu0
        %v3092 = vadd.f32 %v2724, %v3091
        %v3093 = vpop.f32.mrb[0].mxu0
        %3094 = vmatprep.mubr.f32.mxu0 0.0
        %3095 = vmatmul.mubr.f32.gmra.mrb[0].mxu0 %v2701
        %v3096 = vpop.f32.mrb[0].mxu0
        %v3097 = vadd.f32 %v2724, %v3096
        %v3098 = vpop.f32.mrb[0].mxu0
        %3099 = vmatprep.mubr.f32.mxu0 0.0
        %3100 = vmatmul.mubr.f32.gmra.mrb[0].mxu0 %v2702
        %v3101 = vpop.f32.mrb[0].mxu0
        %v3102 = vadd.f32 %v2724, %v3101
        %v3103 = vpop.f32.mrb[0].mxu0
        %3104 = vmatprep.mubr.f32.mxu0 0.0
        %3105 = vmatmul.mubr.f32.gmra.mrb[0].mxu0 %v2703
        %v3106 = vpop.f32.mrb[0].mxu0
        %v3107 = vadd.f32 %v2724, %v3106
        %v3108 = vpop.f32.mrb[0].mxu0
        %3109 = vdwg.mxu0
        %3110 = vmax.xlane.f32.xlu0 %v2792
        %v3111 = vpop.xlane.xlu0 %3110
        %3112 = vmax.xlane.f32.xlu0 %v2797
        %v3113 = vpop.xlane.xlu0 %3112
        %3114 = vmax.xlane.f32.xlu0 %v2802
        %v3115 = vpop.xlane.xlu0 %3114
        %3116 = vmax.xlane.f32.xlu0 %v2807
        %v3117 = vpop.xlane.xlu0 %3116
        %3118 = vmax.xlane.f32.xlu0 %v2812
        %v3119 = vpop.xlane.xlu0 %3118
        %3120 = vmax.xlane.f32.xlu0 %v2817
        %v3121 = vpop.xlane.xlu0 %3120
        %3122 = vmax.xlane.f32.xlu0 %v2822
        %v3123 = vpop.xlane.xlu0 %3122
        %3124 = vmax.xlane.f32.xlu0 %v2827
        %v3125 = vpop.xlane.xlu0 %3124
        %3126 = vmax.xlane.f32.xlu0 %v2832
        %v3127 = vpop.xlane.xlu0 %3126
        %3128 = vmax.xlane.f32.xlu0 %v2837
        %v3129 = vpop.xlane.xlu0 %3128
        %3130 = vmax.xlane.f32.xlu0 %v2842
        %v3131 = vpop.xlane.xlu0 %3130
        %3132 = vmax.xlane.f32.xlu0 %v2847
        %v3133 = vpop.xlane.xlu0 %3132
        %3134 = vmax.xlane.f32.xlu0 %v2852
        %v3135 = vpop.xlane.xlu0 %3134
        %3136 = vmax.xlane.f32.xlu0 %v2857
        %v3137 = vpop.xlane.xlu0 %3136
        %3138 = vmax.xlane.f32.xlu0 %v2862
        %v3139 = vpop.xlane.xlu0 %3138
        %3140 = vmax.xlane.f32.xlu0 %v2867
        %v3141 = vpop.xlane.xlu0 %3140
        %3142 = vmax.xlane.f32.xlu0 %v2872
        %v3143 = vpop.xlane.xlu0 %3142
        %3144 = vmax.xlane.f32.xlu0 %v2877
        %v3145 = vpop.xlane.xlu0 %3144
        %3146 = vmax.xlane.f32.xlu0 %v2882
        %v3147 = vpop.xlane.xlu0 %3146
        %3148 = vmax.xlane.f32.xlu0 %v2887
        %v3149 = vpop.xlane.xlu0 %3148
        %3150 = vmax.xlane.f32.xlu0 %v2892
        %v3151 = vpop.xlane.xlu0 %3150
        %3152 = vmax.xlane.f32.xlu0 %v2897
        %v3153 = vpop.xlane.xlu0 %3152
        %3154 = vmax.xlane.f32.xlu0 %v2902
        %v3155 = vpop.xlane.xlu0 %3154
        %3156 = vmax.xlane.f32.xlu0 %v2907
        %v3157 = vpop.xlane.xlu0 %3156
        %3158 = vmax.xlane.f32.xlu0 %v2912
        %v3159 = vpop.xlane.xlu0 %3158
        %3160 = vmax.xlane.f32.xlu0 %v2917
        %v3161 = vpop.xlane.xlu0 %3160
        %3162 = vmax.xlane.f32.xlu0 %v2922
        %v3163 = vpop.xlane.xlu0 %3162
        %3164 = vmax.xlane.f32.xlu0 %v2927
        %v3165 = vpop.xlane.xlu0 %3164
        %3166 = vmax.xlane.f32.xlu0 %v2932
        %v3167 = vpop.xlane.xlu0 %3166
        %3168 = vmax.xlane.f32.xlu0 %v2937
        %v3169 = vpop.xlane.xlu0 %3168
        %3170 = vmax.xlane.f32.xlu0 %v2942
        %v3171 = vpop.xlane.xlu0 %3170
        %3172 = vmax.xlane.f32.xlu0 %v2947
        %v3173 = vpop.xlane.xlu0 %3172
        %3174 = vmax.xlane.f32.xlu0 %v2952
        %v3175 = vpop.xlane.xlu0 %3174
        %3176 = vmax.xlane.f32.xlu0 %v2957
        %v3177 = vpop.xlane.xlu0 %3176
        %3178 = vmax.xlane.f32.xlu0 %v2962
        %v3179 = vpop.xlane.xlu0 %3178
        %3180 = vmax.xlane.f32.xlu0 %v2967
        %v3181 = vpop.xlane.xlu0 %3180
        %3182 = vmax.xlane.f32.xlu0 %v2972
        %v3183 = vpop.xlane.xlu0 %3182
        %3184 = vmax.xlane.f32.xlu0 %v2977
        %v3185 = vpop.xlane.xlu0 %3184
        %3186 = vmax.xlane.f32.xlu0 %v2982
        %v3187 = vpop.xlane.xlu0 %3186
        %3188 = vmax.xlane.f32.xlu0 %v2987
        %v3189 = vpop.xlane.xlu0 %3188
        %3190 = vmax.xlane.f32.xlu0 %v2992
        %v3191 = vpop.xlane.xlu0 %3190
        %3192 = vmax.xlane.f32.xlu0 %v2997
        %v3193 = vpop.xlane.xlu0 %3192
        %3194 = vmax.xlane.f32.xlu0 %v3002
        %v3195 = vpop.xlane.xlu0 %3194
        %3196 = vmax.xlane.f32.xlu0 %v3007
        %v3197 = vpop.xlane.xlu0 %3196
        %3198 = vmax.xlane.f32.xlu0 %v3012
        %v3199 = vpop.xlane.xlu0 %3198
        %3200 = vmax.xlane.f32.xlu0 %v3017
        %v3201 = vpop.xlane.xlu0 %3200
        %3202 = vmax.xlane.f32.xlu0 %v3022
        %v3203 = vpop.xlane.xlu0 %3202
        %3204 = vmax.xlane.f32.xlu0 %v3027
        %v3205 = vpop.xlane.xlu0 %3204
        %3206 = vmax.xlane.f32.xlu0 %v3032
        %v3207 = vpop.xlane.xlu0 %3206
        %3208 = vmax.xlane.f32.xlu0 %v3037
        %v3209 = vpop.xlane.xlu0 %3208
        %3210 = vmax.xlane.f32.xlu0 %v3042
        %v3211 = vpop.xlane.xlu0 %3210
        %3212 = vmax.xlane.f32.xlu0 %v3047
        %v3213 = vpop.xlane.xlu0 %3212
        %3214 = vmax.xlane.f32.xlu0 %v3052
        %v3215 = vpop.xlane.xlu0 %3214
        %3216 = vmax.xlane.f32.xlu0 %v3057
        %v3217 = vpop.xlane.xlu0 %3216
        %3218 = vmax.xlane.f32.xlu0 %v3062
        %v3219 = vpop.xlane.xlu0 %3218
        %3220 = vmax.xlane.f32.xlu0 %v3067
        %v3221 = vpop.xlane.xlu0 %3220
        %3222 = vmax.xlane.f32.xlu0 %v3072
        %v3223 = vpop.xlane.xlu0 %3222
        %3224 = vmax.xlane.f32.xlu0 %v3077
        %v3225 = vpop.xlane.xlu0 %3224
        %3226 = vmax.xlane.f32.xlu0 %v3082
        %v3227 = vpop.xlane.xlu0 %3226
        %3228 = vmax.xlane.f32.xlu0 %v3087
        %v3229 = vpop.xlane.xlu0 %3228
        %3230 = vmax.xlane.f32.xlu0 %v3092
        %v3231 = vpop.xlane.xlu0 %3230
        %3232 = vmax.xlane.f32.xlu0 %v3097
        %v3233 = vpop.xlane.xlu0 %3232
        %3234 = vmax.xlane.f32.xlu0 %v3102
        %v3235 = vpop.xlane.xlu0 %3234
        %3236 = vmax.xlane.f32.xlu0 %v3107
        %v3237 = vpop.xlane.xlu0 %3236
        %v3238 = vsub.f32 %v2792, %v3111
        %v3239 = vsub.f32 %v2797, %v3113
        %v3240 = vsub.f32 %v2802, %v3115
        %v3241 = vsub.f32 %v2807, %v3117
        %v3242 = vsub.f32 %v2812, %v3119
        %v3243 = vsub.f32 %v2817, %v3121
        %v3244 = vsub.f32 %v2822, %v3123
        %v3245 = vsub.f32 %v2827, %v3125
        %v3246 = vsub.f32 %v2832, %v3127
        %v3247 = vsub.f32 %v2837, %v3129
        %v3248 = vsub.f32 %v2842, %v3131
        %v3249 = vsub.f32 %v2847, %v3133
        %v3250 = vsub.f32 %v2852, %v3135
        %v3251 = vsub.f32 %v2857, %v3137
        %v3252 = vsub.f32 %v2862, %v3139
        %v3253 = vsub.f32 %v2867, %v3141
        %v3254 = vsub.f32 %v2872, %v3143
        %v3255 = vsub.f32 %v2877, %v3145
        %v3256 = vsub.f32 %v2882, %v3147
        %v3257 = vsub.f32 %v2887, %v3149
        %v3258 = vsub.f32 %v2892, %v3151
        %v3259 = vsub.f32 %v2897, %v3153
        %v3260 = vsub.f32 %v2902, %v3155
        %v3261 = vsub.f32 %v2907, %v3157
        %v3262 = vsub.f32 %v2912, %v3159
        %v3263 = vsub.f32 %v2917, %v3161
        %v3264 = vsub.f32 %v2922, %v3163
        %v3265 = vsub.f32 %v2927, %v3165
        %v3266 = vsub.f32 %v2932, %v3167
        %v3267 = vsub.f32 %v2937, %v3169
        %v3268 = vsub.f32 %v2942, %v3171
        %v3269 = vsub.f32 %v2947, %v3173
        %v3270 = vsub.f32 %v2952, %v3175
        %v3271 = vsub.f32 %v2957, %v3177
        %v3272 = vsub.f32 %v2962, %v3179
        %v3273 = vsub.f32 %v2967, %v3181
        %v3274 = vsub.f32 %v2972, %v3183
        %v3275 = vsub.f32 %v2977, %v3185
        %v3276 = vsub.f32 %v2982, %v3187
        %v3277 = vsub.f32 %v2987, %v3189
        %v3278 = vsub.f32 %v2992, %v3191
        %v3279 = vsub.f32 %v2997, %v3193
        %v3280 = vsub.f32 %v3002, %v3195
        %v3281 = vsub.f32 %v3007, %v3197
        %v3282 = vsub.f32 %v3012, %v3199
        %v3283 = vsub.f32 %v3017, %v3201
        %v3284 = vsub.f32 %v3022, %v3203
        %v3285 = vsub.f32 %v3027, %v3205
        %v3286 = vsub.f32 %v3032, %v3207
        %v3287 = vsub.f32 %v3037, %v3209
        %v3288 = vsub.f32 %v3042, %v3211
        %v3289 = vsub.f32 %v3047, %v3213
        %v3290 = vsub.f32 %v3052, %v3215
        %v3291 = vsub.f32 %v3057, %v3217
        %v3292 = vsub.f32 %v3062, %v3219
        %v3293 = vsub.f32 %v3067, %v3221
        %v3294 = vsub.f32 %v3072, %v3223
        %v3295 = vsub.f32 %v3077, %v3225
        %v3296 = vsub.f32 %v3082, %v3227
        %v3297 = vsub.f32 %v3087, %v3229
        %v3298 = vsub.f32 %v3092, %v3231
        %v3299 = vsub.f32 %v3097, %v3233
        %v3300 = vsub.f32 %v3102, %v3235
        %v3301 = vsub.f32 %v3107, %v3237
        %v3302 = vmul.f32 %v3238, 1.442695
        %v3303 = vpow.pop %v3302
        %v3304 = vmul.f32 %v3239, 1.442695
        %v3305 = vpow.pop %v3304
        %v3306 = vmul.f32 %v3240, 1.442695
        %v3307 = vpow.pop %v3306
        %v3308 = vmul.f32 %v3241, 1.442695
        %v3309 = vpow.pop %v3308
        %v3310 = vmul.f32 %v3242, 1.442695
        %v3311 = vpow.pop %v3310
        %v3312 = vmul.f32 %v3243, 1.442695
        %v3313 = vpow.pop %v3312
        %v3314 = vmul.f32 %v3244, 1.442695
        %v3315 = vpow.pop %v3314
        %v3316 = vmul.f32 %v3245, 1.442695
        %v3317 = vpow.pop %v3316
        %v3318 = vmul.f32 %v3246, 1.442695
        %v3319 = vpow.pop %v3318
        %v3320 = vmul.f32 %v3247, 1.442695
        %v3321 = vpow.pop %v3320
        %v3322 = vmul.f32 %v3248, 1.442695
        %v3323 = vpow.pop %v3322
        %v3324 = vmul.f32 %v3249, 1.442695
        %v3325 = vpow.pop %v3324
        %v3326 = vmul.f32 %v3250, 1.442695
        %v3327 = vpow.pop %v3326
        %v3328 = vmul.f32 %v3251, 1.442695
        %v3329 = vpow.pop %v3328
        %v3330 = vmul.f32 %v3252, 1.442695
        %v3331 = vpow.pop %v3330
        %v3332 = vmul.f32 %v3253, 1.442695
        %v3333 = vpow.pop %v3332
        %v3334 = vmul.f32 %v3254, 1.442695
        %v3335 = vpow.pop %v3334
        %v3336 = vmul.f32 %v3255, 1.442695
        %v3337 = vpow.pop %v3336
        %v3338 = vmul.f32 %v3256, 1.442695
        %v3339 = vpow.pop %v3338
        %v3340 = vmul.f32 %v3257, 1.442695
        %v3341 = vpow.pop %v3340
        %v3342 = vmul.f32 %v3258, 1.442695
        %v3343 = vpow.pop %v3342
        %v3344 = vmul.f32 %v3259, 1.442695
        %v3345 = vpow.pop %v3344
        %v3346 = vmul.f32 %v3260, 1.442695
        %v3347 = vpow.pop %v3346
        %v3348 = vmul.f32 %v3261, 1.442695
        %v3349 = vpow.pop %v3348
        %v3350 = vmul.f32 %v3262, 1.442695
        %v3351 = vpow.pop %v3350
        %v3352 = vmul.f32 %v3263, 1.442695
        %v3353 = vpow.pop %v3352
        %v3354 = vmul.f32 %v3264, 1.442695
        %v3355 = vpow.pop %v3354
        %v3356 = vmul.f32 %v3265, 1.442695
        %v3357 = vpow.pop %v3356
        %v3358 = vmul.f32 %v3266, 1.442695
        %v3359 = vpow.pop %v3358
        %v3360 = vmul.f32 %v3267, 1.442695
        %v3361 = vpow.pop %v3360
        %v3362 = vmul.f32 %v3268, 1.442695
        %v3363 = vpow.pop %v3362
        %v3364 = vmul.f32 %v3269, 1.442695
        %v3365 = vpow.pop %v3364
        %v3366 = vmul.f32 %v3270, 1.442695
        %v3367 = vpow.pop %v3366
        %v3368 = vmul.f32 %v3271, 1.442695
        %v3369 = vpow.pop %v3368
        %v3370 = vmul.f32 %v3272, 1.442695
        %v3371 = vpow.pop %v3370
        %v3372 = vmul.f32 %v3273, 1.442695
        %v3373 = vpow.pop %v3372
        %v3374 = vmul.f32 %v3274, 1.442695
        %v3375 = vpow.pop %v3374
        %v3376 = vmul.f32 %v3275, 1.442695
        %v3377 = vpow.pop %v3376
        %v3378 = vmul.f32 %v3276, 1.442695
        %v3379 = vpow.pop %v3378
        %v3380 = vmul.f32 %v3277, 1.442695
        %v3381 = vpow.pop %v3380
        %v3382 = vmul.f32 %v3278, 1.442695
        %v3383 = vpow.pop %v3382
        %v3384 = vmul.f32 %v3279, 1.442695
        %v3385 = vpow.pop %v3384
        %v3386 = vmul.f32 %v3280, 1.442695
        %v3387 = vpow.pop %v3386
        %v3388 = vmul.f32 %v3281, 1.442695
        %v3389 = vpow.pop %v3388
        %v3390 = vmul.f32 %v3282, 1.442695
        %v3391 = vpow.pop %v3390
        %v3392 = vmul.f32 %v3283, 1.442695
        %v3393 = vpow.pop %v3392
        %v3394 = vmul.f32 %v3284, 1.442695
        %v3395 = vpow.pop %v3394
        %v3396 = vmul.f32 %v3285, 1.442695
        %v3397 = vpow.pop %v3396
        %v3398 = vmul.f32 %v3286, 1.442695
        %v3399 = vpow.pop %v3398
        %v3400 = vmul.f32 %v3287, 1.442695
        %v3401 = vpow.pop %v3400
        %v3402 = vmul.f32 %v3288, 1.442695
        %v3403 = vpow.pop %v3402
        %v3404 = vmul.f32 %v3289, 1.442695
        %v3405 = vpow.pop %v3404
        %v3406 = vmul.f32 %v3290, 1.442695
        %v3407 = vpow.pop %v3406
        %v3408 = vmul.f32 %v3291, 1.442695
        %v3409 = vpow.pop %v3408
        %v3410 = vmul.f32 %v3292, 1.442695
        %v3411 = vpow.pop %v3410
        %v3412 = vmul.f32 %v3293, 1.442695
        %v3413 = vpow.pop %v3412
        %v3414 = vmul.f32 %v3294, 1.442695
        %v3415 = vpow.pop %v3414
        %v3416 = vmul.f32 %v3295, 1.442695
        %v3417 = vpow.pop %v3416
        %v3418 = vmul.f32 %v3296, 1.442695
        %v3419 = vpow.pop %v3418
        %v3420 = vmul.f32 %v3297, 1.442695
        %v3421 = vpow.pop %v3420
        %v3422 = vmul.f32 %v3298, 1.442695
        %v3423 = vpow.pop %v3422
        %v3424 = vmul.f32 %v3299, 1.442695
        %v3425 = vpow.pop %v3424
        %v3426 = vmul.f32 %v3300, 1.442695
        %v3427 = vpow.pop %v3426
        %v3428 = vmul.f32 %v3301, 1.442695
        %v3429 = vpow.pop %v3428
        %3430 = vadd.xlane.f32.xlu0 %v3303
        %v3431 = vpop.xlane.xlu0 %3430
        %3432 = vadd.xlane.f32.xlu0 %v3305
        %v3433 = vpop.xlane.xlu0 %3432
        %3434 = vadd.xlane.f32.xlu0 %v3307
        %v3435 = vpop.xlane.xlu0 %3434
        %3436 = vadd.xlane.f32.xlu0 %v3309
        %v3437 = vpop.xlane.xlu0 %3436
        %3438 = vadd.xlane.f32.xlu0 %v3311
        %v3439 = vpop.xlane.xlu0 %3438
        %3440 = vadd.xlane.f32.xlu0 %v3313
        %v3441 = vpop.xlane.xlu0 %3440
        %3442 = vadd.xlane.f32.xlu0 %v3315
        %v3443 = vpop.xlane.xlu0 %3442
        %3444 = vadd.xlane.f32.xlu0 %v3317
        %v3445 = vpop.xlane.xlu0 %3444
        %3446 = vadd.xlane.f32.xlu0 %v3319
        %v3447 = vpop.xlane.xlu0 %3446
        %3448 = vadd.xlane.f32.xlu0 %v3321
        %v3449 = vpop.xlane.xlu0 %3448
        %3450 = vadd.xlane.f32.xlu0 %v3323
        %v3451 = vpop.xlane.xlu0 %3450
        %3452 = vadd.xlane.f32.xlu0 %v3325
        %v3453 = vpop.xlane.xlu0 %3452
        %3454 = vadd.xlane.f32.xlu0 %v3327
        %v3455 = vpop.xlane.xlu0 %3454
        %3456 = vadd.xlane.f32.xlu0 %v3329
        %v3457 = vpop.xlane.xlu0 %3456
        %3458 = vadd.xlane.f32.xlu0 %v3331
        %v3459 = vpop.xlane.xlu0 %3458
        %3460 = vadd.xlane.f32.xlu0 %v3333
        %v3461 = vpop.xlane.xlu0 %3460
        %3462 = vadd.xlane.f32.xlu0 %v3335
        %v3463 = vpop.xlane.xlu0 %3462
        %3464 = vadd.xlane.f32.xlu0 %v3337
        %v3465 = vpop.xlane.xlu0 %3464
        %3466 = vadd.xlane.f32.xlu0 %v3339
        %v3467 = vpop.xlane.xlu0 %3466
        %3468 = vadd.xlane.f32.xlu0 %v3341
        %v3469 = vpop.xlane.xlu0 %3468
        %3470 = vadd.xlane.f32.xlu0 %v3343
        %v3471 = vpop.xlane.xlu0 %3470
        %3472 = vadd.xlane.f32.xlu0 %v3345
        %v3473 = vpop.xlane.xlu0 %3472
        %3474 = vadd.xlane.f32.xlu0 %v3347
        %v3475 = vpop.xlane.xlu0 %3474
        %3476 = vadd.xlane.f32.xlu0 %v3349
        %v3477 = vpop.xlane.xlu0 %3476
        %3478 = vadd.xlane.f32.xlu0 %v3351
        %v3479 = vpop.xlane.xlu0 %3478
        %3480 = vadd.xlane.f32.xlu0 %v3353
        %v3481 = vpop.xlane.xlu0 %3480
        %3482 = vadd.xlane.f32.xlu0 %v3355
        %v3483 = vpop.xlane.xlu0 %3482
        %3484 = vadd.xlane.f32.xlu0 %v3357
        %v3485 = vpop.xlane.xlu0 %3484
        %3486 = vadd.xlane.f32.xlu0 %v3359
        %v3487 = vpop.xlane.xlu0 %3486
        %3488 = vadd.xlane.f32.xlu0 %v3361
        %v3489 = vpop.xlane.xlu0 %3488
        %3490 = vadd.xlane.f32.xlu0 %v3363
        %v3491 = vpop.xlane.xlu0 %3490
        %3492 = vadd.xlane.f32.xlu0 %v3365
        %v3493 = vpop.xlane.xlu0 %3492
        %3494 = vadd.xlane.f32.xlu0 %v3367
        %v3495 = vpop.xlane.xlu0 %3494
        %3496 = vadd.xlane.f32.xlu0 %v3369
        %v3497 = vpop.xlane.xlu0 %3496
        %3498 = vadd.xlane.f32.xlu0 %v3371
        %v3499 = vpop.xlane.xlu0 %3498
        %3500 = vadd.xlane.f32.xlu0 %v3373
        %v3501 = vpop.xlane.xlu0 %3500
        %3502 = vadd.xlane.f32.xlu0 %v3375
        %v3503 = vpop.xlane.xlu0 %3502
        %3504 = vadd.xlane.f32.xlu0 %v3377
        %v3505 = vpop.xlane.xlu0 %3504
        %3506 = vadd.xlane.f32.xlu0 %v3379
        %v3507 = vpop.xlane.xlu0 %3506
        %3508 = vadd.xlane.f32.xlu0 %v3381
        %v3509 = vpop.xlane.xlu0 %3508
        %3510 = vadd.xlane.f32.xlu0 %v3383
        %v3511 = vpop.xlane.xlu0 %3510
        %3512 = vadd.xlane.f32.xlu0 %v3385
        %v3513 = vpop.xlane.xlu0 %3512
        %3514 = vadd.xlane.f32.xlu0 %v3387
        %v3515 = vpop.xlane.xlu0 %3514
        %3516 = vadd.xlane.f32.xlu0 %v3389
        %v3517 = vpop.xlane.xlu0 %3516
        %3518 = vadd.xlane.f32.xlu0 %v3391
        %v3519 = vpop.xlane.xlu0 %3518
        %3520 = vadd.xlane.f32.xlu0 %v3393
        %v3521 = vpop.xlane.xlu0 %3520
        %3522 = vadd.xlane.f32.xlu0 %v3395
        %v3523 = vpop.xlane.xlu0 %3522
        %3524 = vadd.xlane.f32.xlu0 %v3397
        %v3525 = vpop.xlane.xlu0 %3524
        %3526 = vadd.xlane.f32.xlu0 %v3399
        %v3527 = vpop.xlane.xlu0 %3526
        %3528 = vadd.xlane.f32.xlu0 %v3401
        %v3529 = vpop.xlane.xlu0 %3528
        %3530 = vadd.xlane.f32.xlu0 %v3403
        %v3531 = vpop.xlane.xlu0 %3530
        %3532 = vadd.xlane.f32.xlu0 %v3405
        %v3533 = vpop.xlane.xlu0 %3532
        %3534 = vadd.xlane.f32.xlu0 %v3407
        %v3535 = vpop.xlane.xlu0 %3534
        %3536 = vadd.xlane.f32.xlu0 %v3409
        %v3537 = vpop.xlane.xlu0 %3536
        %3538 = vadd.xlane.f32.xlu0 %v3411
        %v3539 = vpop.xlane.xlu0 %3538
        %3540 = vadd.xlane.f32.xlu0 %v3413
        %v3541 = vpop.xlane.xlu0 %3540
        %3542 = vadd.xlane.f32.xlu0 %v3415
        %v3543 = vpop.xlane.xlu0 %3542
        %3544 = vadd.xlane.f32.xlu0 %v3417
        %v3545 = vpop.xlane.xlu0 %3544
        %3546 = vadd.xlane.f32.xlu0 %v3419
        %v3547 = vpop.xlane.xlu0 %3546
        %3548 = vadd.xlane.f32.xlu0 %v3421
        %v3549 = vpop.xlane.xlu0 %3548
        %3550 = vadd.xlane.f32.xlu0 %v3423
        %v3551 = vpop.xlane.xlu0 %3550
        %3552 = vadd.xlane.f32.xlu0 %v3425
        %v3553 = vpop.xlane.xlu0 %3552
        %3554 = vadd.xlane.f32.xlu0 %v3427
        %v3555 = vpop.xlane.xlu0 %3554
        %3556 = vadd.xlane.f32.xlu0 %v3429
        %v3557 = vpop.xlane.xlu0 %3556
        %v3558 = vlog2.pop %v3431
        %v3559 = vmul.f32 %v3558, 0.6931472
        %v3560 = vlog2.pop %v3433
        %v3561 = vmul.f32 %v3560, 0.6931472
        %v3562 = vlog2.pop %v3435
        %v3563 = vmul.f32 %v3562, 0.6931472
        %v3564 = vlog2.pop %v3437
        %v3565 = vmul.f32 %v3564, 0.6931472
        %v3566 = vlog2.pop %v3439
        %v3567 = vmul.f32 %v3566, 0.6931472
        %v3568 = vlog2.pop %v3441
        %v3569 = vmul.f32 %v3568, 0.6931472
        %v3570 = vlog2.pop %v3443
        %v3571 = vmul.f32 %v3570, 0.6931472
        %v3572 = vlog2.pop %v3445
        %v3573 = vmul.f32 %v3572, 0.6931472
        %v3574 = vlog2.pop %v3447
        %v3575 = vmul.f32 %v3574, 0.6931472
        %v3576 = vlog2.pop %v3449
        %v3577 = vmul.f32 %v3576, 0.6931472
        %v3578 = vlog2.pop %v3451
        %v3579 = vmul.f32 %v3578, 0.6931472
        %v3580 = vlog2.pop %v3453
        %v3581 = vmul.f32 %v3580, 0.6931472
        %v3582 = vlog2.pop %v3455
        %v3583 = vmul.f32 %v3582, 0.6931472
        %v3584 = vlog2.pop %v3457
        %v3585 = vmul.f32 %v3584, 0.6931472
        %v3586 = vlog2.pop %v3459
        %v3587 = vmul.f32 %v3586, 0.6931472
        %v3588 = vlog2.pop %v3461
        %v3589 = vmul.f32 %v3588, 0.6931472
        %v3590 = vlog2.pop %v3463
        %v3591 = vmul.f32 %v3590, 0.6931472
        %v3592 = vlog2.pop %v3465
        %v3593 = vmul.f32 %v3592, 0.6931472
        %v3594 = vlog2.pop %v3467
        %v3595 = vmul.f32 %v3594, 0.6931472
        %v3596 = vlog2.pop %v3469
        %v3597 = vmul.f32 %v3596, 0.6931472
        %v3598 = vlog2.pop %v3471
        %v3599 = vmul.f32 %v3598, 0.6931472
        %v3600 = vlog2.pop %v3473
        %v3601 = vmul.f32 %v3600, 0.6931472
        %v3602 = vlog2.pop %v3475
        %v3603 = vmul.f32 %v3602, 0.6931472
        %v3604 = vlog2.pop %v3477
        %v3605 = vmul.f32 %v3604, 0.6931472
        %v3606 = vlog2.pop %v3479
        %v3607 = vmul.f32 %v3606, 0.6931472
        %v3608 = vlog2.pop %v3481
        %v3609 = vmul.f32 %v3608, 0.6931472
        %v3610 = vlog2.pop %v3483
        %v3611 = vmul.f32 %v3610, 0.6931472
        %v3612 = vlog2.pop %v3485
        %v3613 = vmul.f32 %v3612, 0.6931472
        %v3614 = vlog2.pop %v3487
        %v3615 = vmul.f32 %v3614, 0.6931472
        %v3616 = vlog2.pop %v3489
        %v3617 = vmul.f32 %v3616, 0.6931472
        %v3618 = vlog2.pop %v3491
        %v3619 = vmul.f32 %v3618, 0.6931472
        %v3620 = vlog2.pop %v3493
        %v3621 = vmul.f32 %v3620, 0.6931472
        %v3622 = vlog2.pop %v3495
        %v3623 = vmul.f32 %v3622, 0.6931472
        %v3624 = vlog2.pop %v3497
        %v3625 = vmul.f32 %v3624, 0.6931472
        %v3626 = vlog2.pop %v3499
        %v3627 = vmul.f32 %v3626, 0.6931472
        %v3628 = vlog2.pop %v3501
        %v3629 = vmul.f32 %v3628, 0.6931472
        %v3630 = vlog2.pop %v3503
        %v3631 = vmul.f32 %v3630, 0.6931472
        %v3632 = vlog2.pop %v3505
        %v3633 = vmul.f32 %v3632, 0.6931472
        %v3634 = vlog2.pop %v3507
        %v3635 = vmul.f32 %v3634, 0.6931472
        %v3636 = vlog2.pop %v3509
        %v3637 = vmul.f32 %v3636, 0.6931472
        %v3638 = vlog2.pop %v3511
        %v3639 = vmul.f32 %v3638, 0.6931472
        %v3640 = vlog2.pop %v3513
        %v3641 = vmul.f32 %v3640, 0.6931472
        %v3642 = vlog2.pop %v3515
        %v3643 = vmul.f32 %v3642, 0.6931472
        %v3644 = vlog2.pop %v3517
        %v3645 = vmul.f32 %v3644, 0.6931472
        %v3646 = vlog2.pop %v3519
        %v3647 = vmul.f32 %v3646, 0.6931472
        %v3648 = vlog2.pop %v3521
        %v3649 = vmul.f32 %v3648, 0.6931472
        %v3650 = vlog2.pop %v3523
        %v3651 = vmul.f32 %v3650, 0.6931472
        %v3652 = vlog2.pop %v3525
        %v3653 = vmul.f32 %v3652, 0.6931472
        %v3654 = vlog2.pop %v3527
        %v3655 = vmul.f32 %v3654, 0.6931472
        %v3656 = vlog2.pop %v3529
        %v3657 = vmul.f32 %v3656, 0.6931472
        %v3658 = vlog2.pop %v3531
        %v3659 = vmul.f32 %v3658, 0.6931472
        %v3660 = vlog2.pop %v3533
        %v3661 = vmul.f32 %v3660, 0.6931472
        %v3662 = vlog2.pop %v3535
        %v3663 = vmul.f32 %v3662, 0.6931472
        %v3664 = vlog2.pop %v3537
        %v3665 = vmul.f32 %v3664, 0.6931472
        %v3666 = vlog2.pop %v3539
        %v3667 = vmul.f32 %v3666, 0.6931472
        %v3668 = vlog2.pop %v3541
        %v3669 = vmul.f32 %v3668, 0.6931472
        %v3670 = vlog2.pop %v3543
        %v3671 = vmul.f32 %v3670, 0.6931472
        %v3672 = vlog2.pop %v3545
        %v3673 = vmul.f32 %v3672, 0.6931472
        %v3674 = vlog2.pop %v3547
        %v3675 = vmul.f32 %v3674, 0.6931472
        %v3676 = vlog2.pop %v3549
        %v3677 = vmul.f32 %v3676, 0.6931472
        %v3678 = vlog2.pop %v3551
        %v3679 = vmul.f32 %v3678, 0.6931472
        %v3680 = vlog2.pop %v3553
        %v3681 = vmul.f32 %v3680, 0.6931472
        %v3682 = vlog2.pop %v3555
        %v3683 = vmul.f32 %v3682, 0.6931472
        %v3684 = vlog2.pop %v3557
        %v3685 = vmul.f32 %v3684, 0.6931472
        %v3686 = vsub.f32 %v3238, %v3559
        %v3687 = vsub.f32 %v3239, %v3561
        %v3688 = vsub.f32 %v3240, %v3563
        %v3689 = vsub.f32 %v3241, %v3565
        %v3690 = vsub.f32 %v3242, %v3567
        %v3691 = vsub.f32 %v3243, %v3569
        %v3692 = vsub.f32 %v3244, %v3571
        %v3693 = vsub.f32 %v3245, %v3573
        %v3694 = vsub.f32 %v3246, %v3575
        %v3695 = vsub.f32 %v3247, %v3577
        %v3696 = vsub.f32 %v3248, %v3579
        %v3697 = vsub.f32 %v3249, %v3581
        %v3698 = vsub.f32 %v3250, %v3583
        %v3699 = vsub.f32 %v3251, %v3585
        %v3700 = vsub.f32 %v3252, %v3587
        %v3701 = vsub.f32 %v3253, %v3589
        %v3702 = vsub.f32 %v3254, %v3591
        %v3703 = vsub.f32 %v3255, %v3593
        %v3704 = vsub.f32 %v3256, %v3595
        %v3705 = vsub.f32 %v3257, %v3597
        %v3706 = vsub.f32 %v3258, %v3599
        %v3707 = vsub.f32 %v3259, %v3601
        %v3708 = vsub.f32 %v3260, %v3603
        %v3709 = vsub.f32 %v3261, %v3605
        %v3710 = vsub.f32 %v3262, %v3607
        %v3711 = vsub.f32 %v3263, %v3609
        %v3712 = vsub.f32 %v3264, %v3611
        %v3713 = vsub.f32 %v3265, %v3613
        %v3714 = vsub.f32 %v3266, %v3615
        %v3715 = vsub.f32 %v3267, %v3617
        %v3716 = vsub.f32 %v3268, %v3619
        %v3717 = vsub.f32 %v3269, %v3621
        %v3718 = vsub.f32 %v3270, %v3623
        %v3719 = vsub.f32 %v3271, %v3625
        %v3720 = vsub.f32 %v3272, %v3627
        %v3721 = vsub.f32 %v3273, %v3629
        %v3722 = vsub.f32 %v3274, %v3631
        %v3723 = vsub.f32 %v3275, %v3633
        %v3724 = vsub.f32 %v3276, %v3635
        %v3725 = vsub.f32 %v3277, %v3637
        %v3726 = vsub.f32 %v3278, %v3639
        %v3727 = vsub.f32 %v3279, %v3641
        %v3728 = vsub.f32 %v3280, %v3643
        %v3729 = vsub.f32 %v3281, %v3645
        %v3730 = vsub.f32 %v3282, %v3647
        %v3731 = vsub.f32 %v3283, %v3649
        %v3732 = vsub.f32 %v3284, %v3651
        %v3733 = vsub.f32 %v3285, %v3653
        %v3734 = vsub.f32 %v3286, %v3655
        %v3735 = vsub.f32 %v3287, %v3657
        %v3736 = vsub.f32 %v3288, %v3659
        %v3737 = vsub.f32 %v3289, %v3661
        %v3738 = vsub.f32 %v3290, %v3663
        %v3739 = vsub.f32 %v3291, %v3665
        %v3740 = vsub.f32 %v3292, %v3667
        %v3741 = vsub.f32 %v3293, %v3669
        %v3742 = vsub.f32 %v3294, %v3671
        %v3743 = vsub.f32 %v3295, %v3673
        %v3744 = vsub.f32 %v3296, %v3675
        %v3745 = vsub.f32 %v3297, %v3677
        %v3746 = vsub.f32 %v3298, %v3679
        %v3747 = vsub.f32 %v3299, %v3681
        %v3748 = vsub.f32 %v3300, %v3683
        %v3749 = vsub.f32 %v3301, %v3685
        %3750 = vst [vmem:[%s191] sm:$0xff] %v3686
        %3751 = vst [vmem:[%s191 + $0x8] sm:$0xff] %v3687
        %3752 = vst [vmem:[%s191 + $0x10] sm:$0xff] %v3688
        %3753 = vst [vmem:[%s191 + $0x18] sm:$0xff] %v3689
        %3754 = vst [vmem:[%s191 + $0x20] sm:$0xff] %v3690
        %3755 = vst [vmem:[%s191 + $0x28] sm:$0xff] %v3691
        %3756 = vst [vmem:[%s191 + $0x30] sm:$0xff] %v3692
        %3757 = vst [vmem:[%s191 + $0x38] sm:$0xff] %v3693
        %3758 = vst [vmem:[%s191 + $0x40] sm:$0xff] %v3694
        %3759 = vst [vmem:[%s191 + $0x48] sm:$0xff] %v3695
        %3760 = vst [vmem:[%s191 + $0x50] sm:$0xff] %v3696
        %3761 = vst [vmem:[%s191 + $0x58] sm:$0xff] %v3697
        %3762 = vst [vmem:[%s191 + $0x60] sm:$0xff] %v3698
        %3763 = vst [vmem:[%s191 + $0x68] sm:$0xff] %v3699
        %3764 = vst [vmem:[%s191 + $0x70] sm:$0xff] %v3700
        %3765 = vst [vmem:[%s191 + $0x78] sm:$0xff] %v3701
        %3766 = vst [vmem:[%s191 + $0x80] sm:$0xff] %v3702
        %3767 = vst [vmem:[%s191 + $0x88] sm:$0xff] %v3703
        %3768 = vst [vmem:[%s191 + $0x90] sm:$0xff] %v3704
        %3769 = vst [vmem:[%s191 + $0x98] sm:$0xff] %v3705
        %3770 = vst [vmem:[%s191 + $0xa0] sm:$0xff] %v3706
        %3771 = vst [vmem:[%s191 + $0xa8] sm:$0xff] %v3707
        %3772 = vst [vmem:[%s191 + $0xb0] sm:$0xff] %v3708
        %3773 = vst [vmem:[%s191 + $0xb8] sm:$0xff] %v3709
        %3774 = vst [vmem:[%s191 + $0xc0] sm:$0xff] %v3710
        %3775 = vst [vmem:[%s191 + $0xc8] sm:$0xff] %v3711
        %3776 = vst [vmem:[%s191 + $0xd0] sm:$0xff] %v3712
        %3777 = vst [vmem:[%s191 + $0xd8] sm:$0xff] %v3713
        %3778 = vst [vmem:[%s191 + $0xe0] sm:$0xff] %v3714
        %3779 = vst [vmem:[%s191 + $0xe8] sm:$0xff] %v3715
        %3780 = vst [vmem:[%s191 + $0xf0] sm:$0xff] %v3716
        %3781 = vst [vmem:[%s191 + $0xf8] sm:$0xff] %v3717
        %3782 = vst [vmem:[%s191 + $0x100] sm:$0xff] %v3718
        %3783 = vst [vmem:[%s191 + $0x108] sm:$0xff] %v3719
        %3784 = vst [vmem:[%s191 + $0x110] sm:$0xff] %v3720
        %3785 = vst [vmem:[%s191 + $0x118] sm:$0xff] %v3721
        %3786 = vst [vmem:[%s191 + $0x120] sm:$0xff] %v3722
        %3787 = vst [vmem:[%s191 + $0x128] sm:$0xff] %v3723
        %3788 = vst [vmem:[%s191 + $0x130] sm:$0xff] %v3724
        %3789 = vst [vmem:[%s191 + $0x138] sm:$0xff] %v3725
        %3790 = vst [vmem:[%s191 + $0x140] sm:$0xff] %v3726
        %3791 = vst [vmem:[%s191 + $0x148] sm:$0xff] %v3727
        %3792 = vst [vmem:[%s191 + $0x150] sm:$0xff] %v3728
        %3793 = vst [vmem:[%s191 + $0x158] sm:$0xff] %v3729
        %3794 = vst [vmem:[%s191 + $0x160] sm:$0xff] %v3730
        %3795 = vst [vmem:[%s191 + $0x168] sm:$0xff] %v3731
        %3796 = vst [vmem:[%s191 + $0x170] sm:$0xff] %v3732
        %3797 = vst [vmem:[%s191 + $0x178] sm:$0xff] %v3733
        %3798 = vst [vmem:[%s191 + $0x180] sm:$0xff] %v3734
        %3799 = vst [vmem:[%s191 + $0x188] sm:$0xff] %v3735
        %3800 = vst [vmem:[%s191 + $0x190] sm:$0xff] %v3736
        %3801 = vst [vmem:[%s191 + $0x198] sm:$0xff] %v3737
        %3802 = vst [vmem:[%s191 + $0x1a0] sm:$0xff] %v3738
        %3803 = vst [vmem:[%s191 + $0x1a8] sm:$0xff] %v3739
        %3804 = vst [vmem:[%s191 + $0x1b0] sm:$0xff] %v3740
        %3805 = vst [vmem:[%s191 + $0x1b8] sm:$0xff] %v3741
        %3806 = vst [vmem:[%s191 + $0x1c0] sm:$0xff] %v3742
        %3807 = vst [vmem:[%s191 + $0x1c8] sm:$0xff] %v3743
        %3808 = vst [vmem:[%s191 + $0x1d0] sm:$0xff] %v3744
        %3809 = vst [vmem:[%s191 + $0x1d8] sm:$0xff] %v3745
        %3810 = vst [vmem:[%s191 + $0x1e0] sm:$0xff] %v3746
        %3811 = vst [vmem:[%s191 + $0x1e8] sm:$0xff] %v3747
        %3812 = vst [vmem:[%s191 + $0x1f0] sm:$0xff] %v3748
        %3813 = vst [vmem:[%s191 + $0x1f8] sm:$0xff] %v3749
        %s3814 = sand.u32 %s115, 1
        %s3815 = scalar_lea.sflag [#allocation3], %s3814
        %s3816 = sand.u32 %s115, 1
        %s3817 = smul.addr %s3816, 512
        %s3818 = scalar_lea.vmem [#allocation2], %s3817
        // Predicated region
        $region37: #{tpu_custom_call.1} parent=35 // pred_check
          %p3819 = pneg %p125
        $region38: #{tpu_custom_call.1} parent=35 // pred_check_branch
          %3821 = sbr.rel (%p3819) target = $region40
        $region39: #{tpu_custom_call.1} parent=35 // pred_region
          %s3822 = smul.u32 64, %s18
          %s3824 = ssub.s32 8192, 8192
          %3825 = vsyncadd %s3815, %s3824
          %s3826 = smul.addr %s3822, 128
          %s3827 = scalar_lea.hbm %s4, %s3826
          %s3828 = sshll.u32 %s3818, 4
          %s3829 = int_to_ptr.vmem [resolvable:$true] %s3828
          %3834 = dma.vmem_to_hbm [thread:$0]  %s3829, 8192, %s3827, %s3815, 128, 128, 8
        $region40: #{tpu_custom_call.1} parent=35 // pred_fallthru
          _
      $region36: #{tpu_custom_call.1} parent=5 // pred_fallthru
        _
      %p3835 = scmp.le.s32.totalorder 2, %s13
      // Predicated region
      $region41: #{tpu_custom_call.1} parent=5 // pred_check
        %p3836 = pneg %p3835
      $region42: #{tpu_custom_call.1} parent=5 // pred_check_branch
        %3838 = sbr.rel (%p3836) target = $region44
      $region43: #{tpu_custom_call.1} parent=5 // pred_region
        %s3839 = ssub.s32 %s13, 2
        // Predicated region
        $region45: #{tpu_custom_call.1} parent=43 // pred_check
          %p3840 = pneg %p131
        $region46: #{tpu_custom_call.1} parent=43 // pred_check_branch
          %3842 = sbr.rel (%p3840) target = $region48
        $region47: #{tpu_custom_call.1} parent=43 // pred_region
          %s3843 = sand.u32 %s116, 1
          %s3844 = scalar_lea.sflag [#allocation3], %s3843
          %s3845 = sand.u32 %s116, 1
          %s3846 = smul.addr %s3845, 512
          %s3847 = scalar_lea.vmem [#allocation2], %s3846
          %3848 = dma.done %s3844, 8192
        $region48: #{tpu_custom_call.1} parent=43 // pred_fallthru
          _
      $region44: #{tpu_custom_call.1} parent=5 // pred_fallthru
        _
    $region6: #{tpu_custom_call.1} parent=1 // loop_footer
      %s17 = sadd.s32 1, %s13
    $region7: #{tpu_custom_call.1} parent=1 // loop_footer_branch
      %12 = sbr.rel target = $region3
    $region8: #{tpu_custom_call.1} parent=1 // loop_exit
      _
    %3849 = vsyncpa [#allocation3], 1
    %s3850 = scalar_lea.sflag [#allocation3], 1
    %3851 = vsyncpa %s3850, 1

</llo_original>
